<compile_context>
chip_gen: v7x
topology: tpu7x:2x2x1
jax: 0.10.0
libtpu: 0.0.40
codegen_flags: <defaults>
</compile_context>

<pallas_src>
import functools

import numpy as np

import jax
import jax.numpy as jnp
from jax.experimental import pallas as pl
from jax.experimental.pallas import tpu as pltpu


_LANES = 128


def _round_up(x, m):
    return (x + m - 1) // m * m


def _arm_kernel(x_ref, w3_ref, w1_ref, mask_ref, o_ref, slab_ref, *, W):
    """One batch element per grid step.

    x_ref   : (1, H*W, Cin_p)   f32   flattened NHWC image (lane-dense channels)
    w3_ref  : (9*Cin_p, Cout_p) bf16  unrolled 3x3 weight, row = (dy*3+dx)*Cin_p + ci
    w1_ref  : (Cout_p, Cout_p)  f32   1x1 attention weight laid out (ci, co)
    mask_ref: (9, H*W, 1)       f32   per-tap border-validity mask
    o_ref   : (1, H*W, Cout_p)  f32
    slab_ref: (H*W, 9*Cin_p)    bf16  VMEM im2col scratch
    """
    HW = x_ref.shape[1]
    Cin_p = x_ref.shape[2]

    x = x_ref[0]  # (HW, Cin_p) f32

    # Build the im2col slab: each 3x3 tap is the flat image rotated by the
    # tap's flat offset (XLU sublane roll, no slice/reshape relayouts) with
    # out-of-image pixels zeroed by a precomputed mask.
    for dy in range(3):
        for dx in range(3):
            t = dy * 3 + dx
            off = (dy - 1) * W + (dx - 1)
            tap = x if off == 0 else pltpu.roll(x, shift=(-off) % HW, axis=0)
            if off != 0:
                tap = tap * mask_ref[t]          # (HW, 1) broadcast over lanes
            slab_ref[:, t * Cin_p:(t + 1) * Cin_p] = tap.astype(jnp.bfloat16)

    # 3x3 conv as ONE bf16 MXU matmul with K = 9*Cin_p, f32 accumulation.
    feat = jnp.dot(slab_ref[...], w3_ref[...],
                   preferred_element_type=jnp.float32)       # (HW, Cout_p) f32
    feat = jnp.maximum(feat, 0.0)                             # ReLU

    # Global average pool + 1x1 conv + sigmoid (all f32).
    mean = jnp.sum(feat, axis=0, keepdims=True) * (1.0 / HW)  # (1, Cout_p)
    atten = jnp.dot(mean, w1_ref[...], preferred_element_type=jnp.float32)
    atten = jax.nn.sigmoid(atten)                             # (1, Cout_p)

    o_ref[0] = (feat * atten).astype(o_ref.dtype)


def attention_refinement_module_nhwc(x_nhwc, w3_torch, w1_torch):
    """x_nhwc: (N, H, W, Cin) f32; w3_torch: (Cout, Cin, 3, 3); w1_torch: (Cout, Cout, 1, 1)."""
    N, H, W, Cin = x_nhwc.shape
    Cout = w3_torch.shape[0]
    HW = H * W
    Cin_p = _round_up(Cin, _LANES)
    Cout_p = _round_up(Cout, _LANES)

    # Lane-dense channel padding (no-op when channels are already 128-multiples).
    if Cin_p != Cin:
        x_nhwc = jnp.pad(x_nhwc, ((0, 0), (0, 0), (0, 0), (0, Cin_p - Cin)))
    x_flat = x_nhwc.reshape(N, HW, Cin_p)        # metadata-only reshape

    # 3x3 weight -> (9*Cin_p, Cout_p) bf16, row index = (dy*3+dx)*Cin_p + ci.
    w3 = jnp.transpose(w3_torch, (2, 3, 1, 0))   # (3, 3, Cin, Cout)
    w3 = jnp.pad(w3, ((0, 0), (0, 0), (0, Cin_p - Cin), (0, Cout_p - Cout)))
    w3 = w3.reshape(9 * Cin_p, Cout_p).astype(jnp.bfloat16)

    # 1x1 weight -> (Cout_p, Cout_p) f32 laid out (ci, co).
    w1 = jnp.transpose(w1_torch[:, :, 0, 0], (1, 0))
    w1 = jnp.pad(w1, ((0, Cout_p - Cout), (0, Cout_p - Cout))).astype(jnp.float32)

    # Per-tap border-validity masks (constant, built host-side, 9*HW floats).
    hh, ww = np.meshgrid(np.arange(H), np.arange(W), indexing="ij")
    masks = []
    for dy in (-1, 0, 1):
        for dx in (-1, 0, 1):
            valid = ((hh + dy >= 0) & (hh + dy < H) &
                     (ww + dx >= 0) & (ww + dx < W))
            masks.append(valid.reshape(HW, 1))
    mask = jnp.asarray(np.stack(masks, axis=0), jnp.float32)   # (9, HW, 1)

    out_flat = pl.pallas_call(
        functools.partial(_arm_kernel, W=W),
        out_shape=jax.ShapeDtypeStruct((N, HW, Cout_p), jnp.float32),
        grid_spec=pltpu.PrefetchScalarGridSpec(
            num_scalar_prefetch=0,
            grid=(N,),
            in_specs=[
                pl.BlockSpec((1, HW, Cin_p), lambda n: (n, 0, 0)),
                pl.BlockSpec((9 * Cin_p, Cout_p), lambda n: (0, 0)),
                pl.BlockSpec((Cout_p, Cout_p), lambda n: (0, 0)),
                pl.BlockSpec((9, HW, 1), lambda n: (0, 0, 0)),
            ],
            out_specs=pl.BlockSpec((1, HW, Cout_p), lambda n: (n, 0, 0)),
            scratch_shapes=[pltpu.VMEM((HW, 9 * Cin_p), jnp.bfloat16)],
        ),
        compiler_params=pltpu.CompilerParams(
            dimension_semantics=("parallel",),
        ),
    )(x_flat, w3, w1, mask)

    out = out_flat.reshape(N, H, W, Cout_p)      # metadata-only reshape
    if Cout_p != Cout:
        out = out[..., :Cout]                    # drop lane padding
    return out


def attention_refinement_module(x_nchw, w3_torch, w1_torch):
    """PyTorch-layout wrapper: (N, Cin, H, W) -> (N, Cout, H, W)."""
    x_nhwc = jnp.transpose(x_nchw, (0, 2, 3, 1))
    out_nhwc = attention_refinement_module_nhwc(x_nhwc, w3_torch, w1_torch)
    return jnp.transpose(out_nhwc, (0, 3, 1, 2))


def _reference(x_nchw, w3_torch, w1_torch):
    """Pure-JAX f32 reference matching PyTorch semantics (for verification)."""
    feat = jax.lax.conv_general_dilated(
        x_nchw, w3_torch, window_strides=(1, 1), padding=((1, 1), (1, 1)),
        dimension_numbers=("NCHW", "OIHW", "NCHW"))
    feat = jnp.maximum(feat, 0.0)
    atten = jnp.mean(feat, axis=(2, 3), keepdims=True)
    atten = jax.lax.conv_general_dilated(
        atten, w1_torch, window_strides=(1, 1), padding=((0, 0), (0, 0)),
        dimension_numbers=("NCHW", "OIHW", "NCHW"))
    atten = jax.nn.sigmoid(atten)
    return feat * atten


if __name__ == "__main__":
    N, Cin, Cout, H, W = 2, 4, 8, 16, 16

    key = jax.random.PRNGKey(0)
    kx, k3, k1 = jax.random.split(key, 3)

    x = jax.random.normal(kx, (N, Cin, H, W), jnp.float32)

    # kaiming_normal_(a=1): gain = sqrt(2/(1+1)) = 1, std = 1/sqrt(fan_in).
    w3 = jax.random.normal(k3, (Cout, Cin, 3, 3), jnp.float32) * ((Cin * 9) ** -0.5)
    w1 = jax.random.normal(k1, (Cout, Cout, 1, 1), jnp.float32) * (Cout ** -0.5)

    out = jax.block_until_ready(attention_refinement_module(x, w3, w1))
    ref = jax.block_until_ready(_reference(x, w3, w1))

    assert out.shape == (N, Cout, H, W)
    # bf16 MXU operands in the 3x3 conv -> relaxed tolerance vs f32 reference.
    err = float(jnp.max(jnp.abs(out - ref)))
    assert jnp.allclose(out, ref, atol=5e-2, rtol=5e-2), f"mismatch vs reference (max err {err})"

    print("KERNEL_OK")
</pallas_src>

<mosaic_0001>
module attributes {stable_mosaic.version = 11 : i64} {
  func.func @_arm_kernel(%arg0: i32, %arg1: memref<1x256x128xf32, #tpu.memory_space<vmem>>, %arg2: memref<1152x128xbf16, #tpu.memory_space<vmem>>, %arg3: memref<128x128xf32, #tpu.memory_space<vmem>>, %arg4: memref<9x256x1xf32, #tpu.memory_space<vmem>>, %arg5: memref<1x256x128xf32, #tpu.memory_space<vmem>>, %arg6: memref<256x1152xbf16, #tpu.memory_space<vmem>>) attributes {dimension_semantics = [#tpu.dimension_semantics<parallel>], iteration_bounds = array<i64: 2>, scalar_prefetch = 0 : i64, scratch_operands = 1 : i64, tpu.core_type = #tpu.core_type<tc>, window_params = [{transform_indices = @transform_0, window_bounds = array<i64: 1, 256, 128>}, {pipeline_mode = #tpu.pipeline_mode<synchronous>, transform_indices = @transform_1, window_bounds = array<i64: 1152, 128>}, {pipeline_mode = #tpu.pipeline_mode<synchronous>, transform_indices = @transform_2, window_bounds = array<i64: 128, 128>}, {pipeline_mode = #tpu.pipeline_mode<synchronous>, transform_indices = @transform_3, window_bounds = array<i64: 9, 256, 1>}, {transform_indices = @transform_4, window_bounds = array<i64: 1, 256, 128>}]} {
    %c0 = arith.constant 0 : index
    %c0_0 = arith.constant 0 : index
    %c0_1 = arith.constant 0 : index
    %0 = vector.load %arg1[%c0, %c0_0, %c0_1] : memref<1x256x128xf32, #tpu.memory_space<vmem>>, vector<1x256x128xf32>
    %1 = vector.shape_cast %0 : vector<1x256x128xf32> to vector<256x128xf32>
    %c17_i32 = arith.constant 17 : i32
    %2 = tpu.dynamic_rotate %1 by %c17_i32 dim 0 : vector<256x128xf32>, i32 -> vector<256x128xf32>
    %c0_2 = arith.constant 0 : index
    %c0_3 = arith.constant 0 : index
    %c0_4 = arith.constant 0 : index
    %3 = vector.load %arg4[%c0_2, %c0_3, %c0_4] : memref<9x256x1xf32, #tpu.memory_space<vmem>>, vector<1x256x1xf32>
    %4 = vector.shape_cast %3 : vector<1x256x1xf32> to vector<256x1xf32>
    %5 = vector.broadcast %4 : vector<256x1xf32> to vector<256x128xf32>
    %6 = arith.mulf %2, %5 : vector<256x128xf32>
    %7 = arith.truncf %6 : vector<256x128xf32> to vector<256x128xbf16>
    %c0_5 = arith.constant 0 : index
    %c0_6 = arith.constant 0 : index
    %8 = vector.load %arg6[%c0_5, %c0_6] : memref<256x1152xbf16, #tpu.memory_space<vmem>>, vector<256x128xbf16>
    tpu.vector_store %arg6[%c0_5, %c0_6], %7 {strides = array<i32>} : memref<256x1152xbf16, #tpu.memory_space<vmem>>, vector<256x128xbf16>,
    %c16_i32 = arith.constant 16 : i32
    %9 = tpu.dynamic_rotate %1 by %c16_i32 dim 0 : vector<256x128xf32>, i32 -> vector<256x128xf32>
    %c1 = arith.constant 1 : index
    %c0_7 = arith.constant 0 : index
    %c0_8 = arith.constant 0 : index
    %10 = vector.load %arg4[%c1, %c0_7, %c0_8] : memref<9x256x1xf32, #tpu.memory_space<vmem>>, vector<1x256x1xf32>
    %11 = vector.shape_cast %10 : vector<1x256x1xf32> to vector<256x1xf32>
    %12 = vector.broadcast %11 : vector<256x1xf32> to vector<256x128xf32>
    %13 = arith.mulf %9, %12 : vector<256x128xf32>
    %14 = arith.truncf %13 : vector<256x128xf32> to vector<256x128xbf16>
    %c0_9 = arith.constant 0 : index
    %c128 = arith.constant 128 : index
    %15 = vector.load %arg6[%c0_9, %c128] : memref<256x1152xbf16, #tpu.memory_space<vmem>>, vector<256x128xbf16>
    tpu.vector_store %arg6[%c0_9, %c128], %14 {strides = array<i32>} : memref<256x1152xbf16, #tpu.memory_space<vmem>>, vector<256x128xbf16>,
    %c15_i32 = arith.constant 15 : i32
    %16 = tpu.dynamic_rotate %1 by %c15_i32 dim 0 : vector<256x128xf32>, i32 -> vector<256x128xf32>
    %c2 = arith.constant 2 : index
    %c0_10 = arith.constant 0 : index
    %c0_11 = arith.constant 0 : index
    %17 = vector.load %arg4[%c2, %c0_10, %c0_11] : memref<9x256x1xf32, #tpu.memory_space<vmem>>, vector<1x256x1xf32>
    %18 = vector.shape_cast %17 : vector<1x256x1xf32> to vector<256x1xf32>
    %19 = vector.broadcast %18 : vector<256x1xf32> to vector<256x128xf32>
    %20 = arith.mulf %16, %19 : vector<256x128xf32>
    %21 = arith.truncf %20 : vector<256x128xf32> to vector<256x128xbf16>
    %c0_12 = arith.constant 0 : index
    %c256 = arith.constant 256 : index
    %22 = vector.load %arg6[%c0_12, %c256] : memref<256x1152xbf16, #tpu.memory_space<vmem>>, vector<256x128xbf16>
    tpu.vector_store %arg6[%c0_12, %c256], %21 {strides = array<i32>} : memref<256x1152xbf16, #tpu.memory_space<vmem>>, vector<256x128xbf16>,
    %c1_i32 = arith.constant 1 : i32
    %23 = tpu.dynamic_rotate %1 by %c1_i32 dim 0 : vector<256x128xf32>, i32 -> vector<256x128xf32>
    %c3 = arith.constant 3 : index
    %c0_13 = arith.constant 0 : index
    %c0_14 = arith.constant 0 : index
    %24 = vector.load %arg4[%c3, %c0_13, %c0_14] : memref<9x256x1xf32, #tpu.memory_space<vmem>>, vector<1x256x1xf32>
    %25 = vector.shape_cast %24 : vector<1x256x1xf32> to vector<256x1xf32>
    %26 = vector.broadcast %25 : vector<256x1xf32> to vector<256x128xf32>
    %27 = arith.mulf %23, %26 : vector<256x128xf32>
    %28 = arith.truncf %27 : vector<256x128xf32> to vector<256x128xbf16>
    %c0_15 = arith.constant 0 : index
    %c384 = arith.constant 384 : index
    %29 = vector.load %arg6[%c0_15, %c384] : memref<256x1152xbf16, #tpu.memory_space<vmem>>, vector<256x128xbf16>
    tpu.vector_store %arg6[%c0_15, %c384], %28 {strides = array<i32>} : memref<256x1152xbf16, #tpu.memory_space<vmem>>, vector<256x128xbf16>,
    %30 = arith.truncf %1 : vector<256x128xf32> to vector<256x128xbf16>
    %c0_16 = arith.constant 0 : index
    %c512 = arith.constant 512 : index
    %31 = vector.load %arg6[%c0_16, %c512] : memref<256x1152xbf16, #tpu.memory_space<vmem>>, vector<256x128xbf16>
    tpu.vector_store %arg6[%c0_16, %c512], %30 {strides = array<i32>} : memref<256x1152xbf16, #tpu.memory_space<vmem>>, vector<256x128xbf16>,
    %c255_i32 = arith.constant 255 : i32
    %32 = tpu.dynamic_rotate %1 by %c255_i32 dim 0 : vector<256x128xf32>, i32 -> vector<256x128xf32>
    %c5 = arith.constant 5 : index
    %c0_17 = arith.constant 0 : index
    %c0_18 = arith.constant 0 : index
    %33 = vector.load %arg4[%c5, %c0_17, %c0_18] : memref<9x256x1xf32, #tpu.memory_space<vmem>>, vector<1x256x1xf32>
    %34 = vector.shape_cast %33 : vector<1x256x1xf32> to vector<256x1xf32>
    %35 = vector.broadcast %34 : vector<256x1xf32> to vector<256x128xf32>
    %36 = arith.mulf %32, %35 : vector<256x128xf32>
    %37 = arith.truncf %36 : vector<256x128xf32> to vector<256x128xbf16>
    %c0_19 = arith.constant 0 : index
    %c640 = arith.constant 640 : index
    %38 = vector.load %arg6[%c0_19, %c640] : memref<256x1152xbf16, #tpu.memory_space<vmem>>, vector<256x128xbf16>
    tpu.vector_store %arg6[%c0_19, %c640], %37 {strides = array<i32>} : memref<256x1152xbf16, #tpu.memory_space<vmem>>, vector<256x128xbf16>,
    %c241_i32 = arith.constant 241 : i32
    %39 = tpu.dynamic_rotate %1 by %c241_i32 dim 0 : vector<256x128xf32>, i32 -> vector<256x128xf32>
    %c6 = arith.constant 6 : index
    %c0_20 = arith.constant 0 : index
    %c0_21 = arith.constant 0 : index
    %40 = vector.load %arg4[%c6, %c0_20, %c0_21] : memref<9x256x1xf32, #tpu.memory_space<vmem>>, vector<1x256x1xf32>
    %41 = vector.shape_cast %40 : vector<1x256x1xf32> to vector<256x1xf32>
    %42 = vector.broadcast %41 : vector<256x1xf32> to vector<256x128xf32>
    %43 = arith.mulf %39, %42 : vector<256x128xf32>
    %44 = arith.truncf %43 : vector<256x128xf32> to vector<256x128xbf16>
    %c0_22 = arith.constant 0 : index
    %c768 = arith.constant 768 : index
    %45 = vector.load %arg6[%c0_22, %c768] : memref<256x1152xbf16, #tpu.memory_space<vmem>>, vector<256x128xbf16>
    tpu.vector_store %arg6[%c0_22, %c768], %44 {strides = array<i32>} : memref<256x1152xbf16, #tpu.memory_space<vmem>>, vector<256x128xbf16>,
    %c240_i32 = arith.constant 240 : i32
    %46 = tpu.dynamic_rotate %1 by %c240_i32 dim 0 : vector<256x128xf32>, i32 -> vector<256x128xf32>
    %c7 = arith.constant 7 : index
    %c0_23 = arith.constant 0 : index
    %c0_24 = arith.constant 0 : index
    %47 = vector.load %arg4[%c7, %c0_23, %c0_24] : memref<9x256x1xf32, #tpu.memory_space<vmem>>, vector<1x256x1xf32>
    %48 = vector.shape_cast %47 : vector<1x256x1xf32> to vector<256x1xf32>
    %49 = vector.broadcast %48 : vector<256x1xf32> to vector<256x128xf32>
    %50 = arith.mulf %46, %49 : vector<256x128xf32>
    %51 = arith.truncf %50 : vector<256x128xf32> to vector<256x128xbf16>
    %c0_25 = arith.constant 0 : index
    %c896 = arith.constant 896 : index
    %52 = vector.load %arg6[%c0_25, %c896] : memref<256x1152xbf16, #tpu.memory_space<vmem>>, vector<256x128xbf16>
    tpu.vector_store %arg6[%c0_25, %c896], %51 {strides = array<i32>} : memref<256x1152xbf16, #tpu.memory_space<vmem>>, vector<256x128xbf16>,
    %c239_i32 = arith.constant 239 : i32
    %53 = tpu.dynamic_rotate %1 by %c239_i32 dim 0 : vector<256x128xf32>, i32 -> vector<256x128xf32>
    %c8 = arith.constant 8 : index
    %c0_26 = arith.constant 0 : index
    %c0_27 = arith.constant 0 : index
    %54 = vector.load %arg4[%c8, %c0_26, %c0_27] : memref<9x256x1xf32, #tpu.memory_space<vmem>>, vector<1x256x1xf32>
    %55 = vector.shape_cast %54 : vector<1x256x1xf32> to vector<256x1xf32>
    %56 = vector.broadcast %55 : vector<256x1xf32> to vector<256x128xf32>
    %57 = arith.mulf %53, %56 : vector<256x128xf32>
    %58 = arith.truncf %57 : vector<256x128xf32> to vector<256x128xbf16>
    %c0_28 = arith.constant 0 : index
    %c1024 = arith.constant 1024 : index
    %59 = vector.load %arg6[%c0_28, %c1024] : memref<256x1152xbf16, #tpu.memory_space<vmem>>, vector<256x128xbf16>
    tpu.vector_store %arg6[%c0_28, %c1024], %58 {strides = array<i32>} : memref<256x1152xbf16, #tpu.memory_space<vmem>>, vector<256x128xbf16>,
    %c0_29 = arith.constant 0 : index
    %c0_30 = arith.constant 0 : index
    %60 = vector.load %arg6[%c0_29, %c0_30] : memref<256x1152xbf16, #tpu.memory_space<vmem>>, vector<256x1152xbf16>
    %c0_31 = arith.constant 0 : index
    %c0_32 = arith.constant 0 : index
    %61 = vector.load %arg2[%c0_31, %c0_32] : memref<1152x128xbf16, #tpu.memory_space<vmem>>, vector<1152x128xbf16>
    %cst = arith.constant dense<0.000000e+00> : vector<256x128xf32>
    %62 = tpu.matmul %60, %61, %cst {dimension_numbers = #tpu.dot_dimension_numbers<[1], [0], [0], [1], [0, 0, 1, 1], [], []>} : vector<256x1152xbf16>, vector<1152x128xbf16>, vector<256x128xf32> -> vector<256x128xf32>
    %cst_33 = arith.constant 0.000000e+00 : f32
    %63 = vector.broadcast %cst_33 : f32 to vector<256x128xf32>
    %64 = arith.maximumf %62, %63 : vector<256x128xf32>
    %cst_34 = arith.constant dense<0.000000e+00> : vector<128xf32>
    %65 = vector.multi_reduction <add>, %64, %cst_34 [0] : vector<256x128xf32> to vector<128xf32>
    %66 = vector.shape_cast %65 : vector<128xf32> to vector<1x128xf32>
    %cst_35 = arith.constant 3.906250e-03 : f32
    %67 = vector.broadcast %cst_35 : f32 to vector<1x128xf32>
    %68 = arith.mulf %66, %67 : vector<1x128xf32>
    %c0_36 = arith.constant 0 : index
    %c0_37 = arith.constant 0 : index
    %69 = vector.load %arg3[%c0_36, %c0_37] : memref<128x128xf32, #tpu.memory_space<vmem>>, vector<128x128xf32>
    %cst_38 = arith.constant dense<0.000000e+00> : vector<1x128xf32>
    %70 = tpu.matmul %68, %69, %cst_38 {dimension_numbers = #tpu.dot_dimension_numbers<[1], [0], [0], [1], [0, 0, 1, 1], [], []>} : vector<1x128xf32>, vector<128x128xf32>, vector<1x128xf32> -> vector<1x128xf32>
    %71 = arith.negf %70 : vector<1x128xf32>
    %72 = math.exp %71 : vector<1x128xf32>
    %cst_39 = arith.constant 1.000000e+00 : f32
    %73 = vector.broadcast %cst_39 : f32 to vector<1x128xf32>
    %74 = arith.addf %73, %72 : vector<1x128xf32>
    %75 = arith.divf %73, %74 : vector<1x128xf32>
    %76 = vector.broadcast %75 : vector<1x128xf32> to vector<256x128xf32>
    %77 = arith.mulf %64, %76 : vector<256x128xf32>
    %c0_40 = arith.constant 0 : index
    %c0_41 = arith.constant 0 : index
    %c0_42 = arith.constant 0 : index
    %78 = vector.load %arg5[%c0_40, %c0_41, %c0_42] : memref<1x256x128xf32, #tpu.memory_space<vmem>>, vector<1x256x128xf32>
    %79 = vector.shape_cast %78 : vector<1x256x128xf32> to vector<256x128xf32>
    %80 = vector.shape_cast %77 : vector<256x128xf32> to vector<1x256x128xf32>
    tpu.vector_store %arg5[%c0_40, %c0_41, %c0_42], %80 {strides = array<i32>} : memref<1x256x128xf32, #tpu.memory_space<vmem>>, vector<1x256x128xf32>,
    return
  }
  func.func @transform_0(%arg0: i32) -> (i32, i32, i32) {
    %c0_i32 = arith.constant 0 : i32
    %c0_i32_0 = arith.constant 0 : i32
    %c0_i32_1 = arith.constant 0 : i32
    return %arg0, %c0_i32, %c0_i32_0 : i32, i32, i32
  }
  func.func @transform_1(%arg0: i32) -> (i32, i32) {
    %c0_i32 = arith.constant 0 : i32
    %c0_i32_0 = arith.constant 0 : i32
    %c0_i32_1 = arith.constant 0 : i32
    return %c0_i32, %c0_i32_0 : i32, i32
  }
  func.func @transform_2(%arg0: i32) -> (i32, i32) {
    %c0_i32 = arith.constant 0 : i32
    %c0_i32_0 = arith.constant 0 : i32
    %c0_i32_1 = arith.constant 0 : i32
    return %c0_i32, %c0_i32_0 : i32, i32
  }
  func.func @transform_3(%arg0: i32) -> (i32, i32, i32) {
    %c0_i32 = arith.constant 0 : i32
    %c0_i32_0 = arith.constant 0 : i32
    %c0_i32_1 = arith.constant 0 : i32
    %c0_i32_2 = arith.constant 0 : i32
    return %c0_i32, %c0_i32_0, %c0_i32_1 : i32, i32, i32
  }
  func.func @transform_4(%arg0: i32) -> (i32, i32, i32) {
    %c0_i32 = arith.constant 0 : i32
    %c0_i32_0 = arith.constant 0 : i32
    %c0_i32_1 = arith.constant 0 : i32
    return %arg0, %c0_i32, %c0_i32_0 : i32, i32, i32
  }
}

</mosaic_0001>

<llo_original>
// kernel: tpu_custom_call.1
$region0: #{tpu_custom_call.1}
  #allocation0 [shape = 'u32[]', space=smem, size = 0x4, offset = 0x4, fixed_abs, tag = 'smem constant byte address 0x4 - core index']
  #allocation1 [shape = 'u32[144,128]{1,0:T(1,128)}', space=vmem, size = 0x12000, scoped, tag = 'internal scratch']
  #allocation2 [shape = 'bf16[256,1152]{1,0:T(16,128)(2,1)}', space=vmem, size = 0x90000, scoped, tag = 'scratch operand']
  %s0 = inlined_call_operand.vmem [shape: f32[2,256,128], index: 0, kind: input, shape index: {}]
  %s1 = inlined_call_operand.vmem [shape: bf16[1152,128], index: 1, kind: input, shape index: {}]
  %s2 = inlined_call_operand.vmem [shape: f32[128,128], index: 2, kind: input, shape index: {}]
  %s3 = inlined_call_operand.vmem [shape: f32[9,256,1], index: 3, kind: input, shape index: {}]
  %s4 = inlined_call_operand.hbm [shape: f32[2,256,128], index: 4, kind: output, shape index: {}]
  %s5 = sld [smem:[#allocation0]]
  $region49: #{tpu_custom_call.1} parent=0
    _
  %s7 = ssub.s32 1, %s5
  %s8 = scalar_select 0, %s7, %s5
  $region1: #{tpu_custom_call.1} parent=0
    #allocation3 [shape = 'u8[262144]{0}', space=vmem, size = 0x40000, scoped, tag = 'output window, operand 0']
    #allocation4 [shape = 's32[2]{0}', space=sflag, size = 0x8, scoped, tag = 'scoped memory for tpu_custom_call.1']
    %9 = vsyncpa [#allocation4], 0
    %s10 = scalar_lea.sflag [#allocation4], 1
    %11 = vsyncpa %s10, 0
    loop: start=0, step=1, limit=4
    $region2: #{tpu_custom_call.1} parent=1 // loop_pre_header
      _
    $region3: #{tpu_custom_call.1} parent=1 // loop_header
      %s13 = sphi 0, %s17
      %p14 = scmp.ge.s32.totalorder %s13, 4
      %s23 = sphi 0, %s25
      %s26 = sphi 0, %s23
      %s27 = sphi 0, %s26
      %s43 = sphi 0, %s27
      %s47 = sphi 0, %s47
      %s49 = sphi 0, %s47
      %s50 = sphi 0, %s49
      %s64 = sphi 0, %s50
      %s68 = sphi 0, %s68
      %s70 = sphi 0, %s68
      %s71 = sphi 0, %s70
      %s85 = sphi 0, %s71
      %s89 = sphi 0, %s89
      %s91 = sphi 0, %s89
      %s92 = sphi 0, %s91
      %s106 = sphi 0, %s92
      %s112 = sphi 0, %s114
      %s115 = sphi 0, %s112
      %s116 = sphi 0, %s115
      %s132 = sphi 0, %s116
    $region4: #{tpu_custom_call.1} parent=1 // loop_header_branch
      %16 = sbr.rel (%p14) target = $region8
    $region5: #{tpu_custom_call.1} parent=1 // loop_body
      %s18 = ssub.s32 %s13, 1
      %s19 = ssub.s32 %s13, 2
      %s20 = sadd.s32 %s13, 1
      %s21 = ssub.s32 %s13, %s20
      %p22 = scmp.eq.s32.totalorder %s21, 0
      %s24 = sadd.s32 %s23, 1
      %s25 = scalar_select %p22, %s23, %s24
      %p28 = pneg %p22
      %p29 = scmp.eq.s32.totalorder %s13, 1
      %p30 = por %p28, %p29
      %p31 = scmp.ne.s32.totalorder %s23, %s26
      %p32 = scmp.eq.s32.totalorder %s13, 0
      %p33 = por %p31, %p32
      %p34 = scmp.ne.s32.totalorder %s23, %s26
      %p35 = scmp.eq.s32.totalorder %s18, 1
      %p36 = por %p34, %p35
      %p37 = scmp.ne.s32.totalorder %s26, %s27
      %p38 = scmp.eq.s32.totalorder %s18, 0
      %p39 = por %p37, %p38
      %p40 = scmp.ne.s32.totalorder %s26, %s27
      %p41 = scmp.eq.s32.totalorder %s19, 1
      %p42 = por %p40, %p41
      %p44 = scmp.ne.s32.totalorder %s27, %s43
      %p45 = scmp.eq.s32.totalorder %s19, 0
      %p46 = por %p44, %p45
      %s48 = sadd.s32 %s47, 1
      %p51 = scmp.eq.s32.totalorder %s13, 1
      %p52 = scmp.ne.s32.totalorder %s47, %s49
      %p53 = scmp.eq.s32.totalorder %s13, 0
      %p54 = por %p52, %p53
      %p55 = scmp.ne.s32.totalorder %s47, %s49
      %p56 = scmp.eq.s32.totalorder %s18, 1
      %p57 = por %p55, %p56
      %p58 = scmp.ne.s32.totalorder %s49, %s50
      %p59 = scmp.eq.s32.totalorder %s18, 0
      %p60 = por %p58, %p59
      %p61 = scmp.ne.s32.totalorder %s49, %s50
      %p62 = scmp.eq.s32.totalorder %s19, 1
      %p63 = por %p61, %p62
      %p65 = scmp.ne.s32.totalorder %s50, %s64
      %p66 = scmp.eq.s32.totalorder %s19, 0
      %p67 = por %p65, %p66
      %s69 = sadd.s32 %s68, 1
      %p72 = scmp.eq.s32.totalorder %s13, 1
      %p73 = scmp.ne.s32.totalorder %s68, %s70
      %p74 = scmp.eq.s32.totalorder %s13, 0
      %p75 = por %p73, %p74
      %p76 = scmp.ne.s32.totalorder %s68, %s70
      %p77 = scmp.eq.s32.totalorder %s18, 1
      %p78 = por %p76, %p77
      %p79 = scmp.ne.s32.totalorder %s70, %s71
      %p80 = scmp.eq.s32.totalorder %s18, 0
      %p81 = por %p79, %p80
      %p82 = scmp.ne.s32.totalorder %s70, %s71
      %p83 = scmp.eq.s32.totalorder %s19, 1
      %p84 = por %p82, %p83
      %p86 = scmp.ne.s32.totalorder %s71, %s85
      %p87 = scmp.eq.s32.totalorder %s19, 0
      %p88 = por %p86, %p87
      %s90 = sadd.s32 %s89, 1
      %p93 = scmp.eq.s32.totalorder %s13, 1
      %p94 = scmp.ne.s32.totalorder %s89, %s91
      %p95 = scmp.eq.s32.totalorder %s13, 0
      %p96 = por %p94, %p95
      %p97 = scmp.ne.s32.totalorder %s89, %s91
      %p98 = scmp.eq.s32.totalorder %s18, 1
      %p99 = por %p97, %p98
      %p100 = scmp.ne.s32.totalorder %s91, %s92
      %p101 = scmp.eq.s32.totalorder %s18, 0
      %p102 = por %p100, %p101
      %p103 = scmp.ne.s32.totalorder %s91, %s92
      %p104 = scmp.eq.s32.totalorder %s19, 1
      %p105 = por %p103, %p104
      %p107 = scmp.ne.s32.totalorder %s92, %s106
      %p108 = scmp.eq.s32.totalorder %s19, 0
      %p109 = por %p107, %p108
      %s110 = ssub.s32 %s13, %s20
      %p111 = scmp.eq.s32.totalorder %s110, 0
      %s113 = sadd.s32 %s112, 1
      %s114 = scalar_select %p111, %s112, %s113
      %p117 = pneg %p111
      %p118 = scmp.eq.s32.totalorder %s13, 1
      %p119 = por %p117, %p118
      %p120 = scmp.ne.s32.totalorder %s112, %s115
      %p121 = scmp.eq.s32.totalorder %s13, 0
      %p122 = por %p120, %p121
      %p123 = scmp.ne.s32.totalorder %s112, %s115
      %p124 = scmp.eq.s32.totalorder %s18, 1
      %p125 = por %p123, %p124
      %p126 = scmp.ne.s32.totalorder %s115, %s116
      %p127 = scmp.eq.s32.totalorder %s18, 0
      %p128 = por %p126, %p127
      %p129 = scmp.ne.s32.totalorder %s115, %s116
      %p130 = scmp.eq.s32.totalorder %s19, 1
      %p131 = por %p129, %p130
      %p133 = scmp.ne.s32.totalorder %s116, %s132
      %p134 = scmp.eq.s32.totalorder %s19, 0
      %p135 = por %p133, %p134
      %p136 = scmp.le.s32.totalorder 1, %s13
      %p137 = scmp.lt.s32.totalorder %s13, 3
      %p138 = pnand %p136, %p137
      %p139 = pneg %p138
      // Predicated region
      $region9: #{tpu_custom_call.1} parent=5 // pred_check
        _
      $region10: #{tpu_custom_call.1} parent=5 // pred_check_branch
        %141 = sbr.rel (%p138) target = $region12
      $region11: #{tpu_custom_call.1} parent=5 // pred_region
        %s142 = ssub.s32 %s13, 1
        // Predicated region
        $region13: #{tpu_custom_call.1} parent=11 // pred_check
          %p143 = pneg %p60
        $region14: #{tpu_custom_call.1} parent=11 // pred_check_branch
          %145 = sbr.rel (%p143) target = $region16
        $region15: #{tpu_custom_call.1} parent=11 // pred_region
          _
        $region16: #{tpu_custom_call.1} parent=11 // pred_fallthru
          _
        // Predicated region
        $region17: #{tpu_custom_call.1} parent=11 // pred_check
          %p146 = pneg %p81
        $region18: #{tpu_custom_call.1} parent=11 // pred_check_branch
          %148 = sbr.rel (%p146) target = $region20
        $region19: #{tpu_custom_call.1} parent=11 // pred_region
          _
        $region20: #{tpu_custom_call.1} parent=11 // pred_fallthru
          _
        // Predicated region
        $region21: #{tpu_custom_call.1} parent=11 // pred_check
          %p149 = pneg %p102
        $region22: #{tpu_custom_call.1} parent=11 // pred_check_branch
          %151 = sbr.rel (%p149) target = $region24
        $region23: #{tpu_custom_call.1} parent=11 // pred_region
          _
        $region24: #{tpu_custom_call.1} parent=11 // pred_fallthru
          _
      $region12: #{tpu_custom_call.1} parent=5 // pred_fallthru
        _
      %p152 = scmp.lt.s32.totalorder %s13, 2
      // Predicated region
      $region25: #{tpu_custom_call.1} parent=5 // pred_check
        %p153 = pneg %p152
      $region26: #{tpu_custom_call.1} parent=5 // pred_check_branch
        %155 = sbr.rel (%p153) target = $region28
      $region27: #{tpu_custom_call.1} parent=5 // pred_region
        // Predicated region
        $region29: #{tpu_custom_call.1} parent=27 // pred_check
          %p156 = pneg %p33
        $region30: #{tpu_custom_call.1} parent=27 // pred_check_branch
          %158 = sbr.rel (%p156) target = $region32
        $region31: #{tpu_custom_call.1} parent=27 // pred_region
          %p159 = scmp.lt.s32.totalorder %s13, 1
          %s160 = scalar_select %p159, %s13, 1
          %s161 = smul.addr %s160, 32
          %s162 = smul.addr %s161, 8
          %s163 = scalar_lea.vmem %s0, %s162
        $region32: #{tpu_custom_call.1} parent=27 // pred_fallthru
          _
      $region28: #{tpu_custom_call.1} parent=5 // pred_fallthru
        _
      %p164 = scmp.le.s32.totalorder 1, %s13
      %p165 = scmp.lt.s32.totalorder %s13, 3
      %p166 = pnand %p164, %p165
      %p167 = pneg %p166
      // Predicated region
      $region33: #{tpu_custom_call.1} parent=5 // pred_check
        _
      $region34: #{tpu_custom_call.1} parent=5 // pred_check_branch
        %169 = sbr.rel (%p166) target = $region36
      $region35: #{tpu_custom_call.1} parent=5 // pred_region
        %s170 = ssub.s32 %s13, 1
        %p171 = scmp.lt.s32.totalorder %s18, 1
        %s172 = scalar_select %p171, %s18, 1
        %s173 = smul.addr %s172, 32
        %s174 = smul.addr %s173, 8
        %s175 = scalar_lea.vmem %s0, %s174
        %p176 = pneg %p39
        %p177 = pneg %p36
        %p178 = pneg %p60
        %p179 = pneg %p57
        %p180 = pneg %p81
        %p181 = pneg %p78
        %p182 = pneg %p102
        %p183 = pneg %p99
        %p184 = pneg %p128
        %p185 = pneg %p125
        %s186 = sand.u32 %s115, 1
        %s187 = scalar_lea.sflag [#allocation4], %s186
        %s188 = sand.u32 %s115, 1
        %s189 = smul.addr %s188, 256
        %s190 = scalar_lea.vmem [#allocation3], %s189
        %p191 = scmp.lt.s32.totalorder %s18, 1
        %s192 = scalar_select %p191, %s18, 1
        %s193 = smul.addr %s192, 32
        %s194 = smul.addr %s193, 8
        %s195 = scalar_lea.vmem %s0, %s194
        %v197 = vld [vmem:[%s195] sm:$0xff]
        %v198 = vld [vmem:[%s195 + $0x8] sm:$0xff]
        %v199 = vld [vmem:[%s195 + $0x10] sm:$0xff]
        %v200 = vld [vmem:[%s195 + $0x18] sm:$0xff]
        %v201 = vld [vmem:[%s195 + $0x20] sm:$0xff]
        %v202 = vld [vmem:[%s195 + $0x28] sm:$0xff]
        %v203 = vld [vmem:[%s195 + $0x30] sm:$0xff]
        %v204 = vld [vmem:[%s195 + $0x38] sm:$0xff]
        %v205 = vld [vmem:[%s195 + $0x40] sm:$0xff]
        %v206 = vld [vmem:[%s195 + $0x48] sm:$0xff]
        %v207 = vld [vmem:[%s195 + $0x50] sm:$0xff]
        %v208 = vld [vmem:[%s195 + $0x58] sm:$0xff]
        %v209 = vld [vmem:[%s195 + $0x60] sm:$0xff]
        %v210 = vld [vmem:[%s195 + $0x68] sm:$0xff]
        %v211 = vld [vmem:[%s195 + $0x70] sm:$0xff]
        %v212 = vld [vmem:[%s195 + $0x78] sm:$0xff]
        %v213 = vld [vmem:[%s195 + $0x80] sm:$0xff]
        %v214 = vld [vmem:[%s195 + $0x88] sm:$0xff]
        %v215 = vld [vmem:[%s195 + $0x90] sm:$0xff]
        %v216 = vld [vmem:[%s195 + $0x98] sm:$0xff]
        %v217 = vld [vmem:[%s195 + $0xa0] sm:$0xff]
        %v218 = vld [vmem:[%s195 + $0xa8] sm:$0xff]
        %v219 = vld [vmem:[%s195 + $0xb0] sm:$0xff]
        %v220 = vld [vmem:[%s195 + $0xb8] sm:$0xff]
        %v221 = vld [vmem:[%s195 + $0xc0] sm:$0xff]
        %v222 = vld [vmem:[%s195 + $0xc8] sm:$0xff]
        %v223 = vld [vmem:[%s195 + $0xd0] sm:$0xff]
        %v224 = vld [vmem:[%s195 + $0xd8] sm:$0xff]
        %v225 = vld [vmem:[%s195 + $0xe0] sm:$0xff]
        %v226 = vld [vmem:[%s195 + $0xe8] sm:$0xff]
        %v227 = vld [vmem:[%s195 + $0xf0] sm:$0xff]
        %v228 = vld [vmem:[%s195 + $0xf8] sm:$0xff]
        %v229 = vrot.slane %v197, 7
        %v230 = vrot.slane %v198, 7
        %v231 = vrot.slane %v199, 7
        %v232 = vrot.slane %v200, 7
        %v233 = vrot.slane %v201, 7
        %v234 = vrot.slane %v202, 7
        %v235 = vrot.slane %v203, 7
        %v236 = vrot.slane %v204, 7
        %v237 = vrot.slane %v205, 7
        %v238 = vrot.slane %v206, 7
        %v239 = vrot.slane %v207, 7
        %v240 = vrot.slane %v208, 7
        %v241 = vrot.slane %v209, 7
        %v242 = vrot.slane %v210, 7
        %v243 = vrot.slane %v211, 7
        %v244 = vrot.slane %v212, 7
        %v245 = vrot.slane %v213, 7
        %v246 = vrot.slane %v214, 7
        %v247 = vrot.slane %v215, 7
        %v248 = vrot.slane %v216, 7
        %v249 = vrot.slane %v217, 7
        %v250 = vrot.slane %v218, 7
        %v251 = vrot.slane %v219, 7
        %v252 = vrot.slane %v220, 7
        %v253 = vrot.slane %v221, 7
        %v254 = vrot.slane %v222, 7
        %v255 = vrot.slane %v223, 7
        %v256 = vrot.slane %v224, 7
        %v257 = vrot.slane %v225, 7
        %v258 = vrot.slane %v226, 7
        %v259 = vrot.slane %v227, 7
        %v260 = vrot.slane %v228, 7
        %v261 = vlaneseq
        %v262 = vshrl.u32 %v261, 7
        %vm263 = vcmp.lt.s32.totalorder %v262, 1
        %v264 = vsel %vm263, %v259, %v260
        %v265 = vsel %vm263, %v258, %v259
        %v266 = vsel %vm263, %v257, %v258
        %v267 = vsel %vm263, %v256, %v257
        %v268 = vsel %vm263, %v255, %v256
        %v269 = vsel %vm263, %v254, %v255
        %v270 = vsel %vm263, %v253, %v254
        %v271 = vsel %vm263, %v252, %v253
        %v272 = vsel %vm263, %v251, %v252
        %v273 = vsel %vm263, %v250, %v251
        %v274 = vsel %vm263, %v249, %v250
        %v275 = vsel %vm263, %v248, %v249
        %v276 = vsel %vm263, %v247, %v248
        %v277 = vsel %vm263, %v246, %v247
        %v278 = vsel %vm263, %v245, %v246
        %v279 = vsel %vm263, %v244, %v245
        %v280 = vsel %vm263, %v243, %v244
        %v281 = vsel %vm263, %v242, %v243
        %v282 = vsel %vm263, %v241, %v242
        %v283 = vsel %vm263, %v240, %v241
        %v284 = vsel %vm263, %v239, %v240
        %v285 = vsel %vm263, %v238, %v239
        %v286 = vsel %vm263, %v237, %v238
        %v287 = vsel %vm263, %v236, %v237
        %v288 = vsel %vm263, %v235, %v236
        %v289 = vsel %vm263, %v234, %v235
        %v290 = vsel %vm263, %v233, %v234
        %v291 = vsel %vm263, %v232, %v233
        %v292 = vsel %vm263, %v231, %v232
        %v293 = vsel %vm263, %v230, %v231
        %v294 = vsel %vm263, %v229, %v230
        %v295 = vsel %vm263, %v260, %v229
        %v296 = vld [vmem:[%s3] sm:$0xff]
        %v297 = vld [vmem:[%s3 + $0x8] sm:$0xff]
        %v298 = vld [vmem:[%s3 + $0x10] sm:$0xff]
        %v299 = vld [vmem:[%s3 + $0x18] sm:$0xff]
        %v300 = vld [vmem:[%s3 + $0x20] sm:$0xff]
        %v301 = vld [vmem:[%s3 + $0x28] sm:$0xff]
        %v302 = vld [vmem:[%s3 + $0x30] sm:$0xff]
        %v303 = vld [vmem:[%s3 + $0x38] sm:$0xff]
        %v304 = vld [vmem:[%s3 + $0x40] sm:$0xff]
        %v305 = vld [vmem:[%s3 + $0x48] sm:$0xff]
        %v306 = vld [vmem:[%s3 + $0x50] sm:$0xff]
        %v307 = vld [vmem:[%s3 + $0x58] sm:$0xff]
        %v308 = vld [vmem:[%s3 + $0x60] sm:$0xff]
        %v309 = vld [vmem:[%s3 + $0x68] sm:$0xff]
        %v310 = vld [vmem:[%s3 + $0x70] sm:$0xff]
        %v311 = vld [vmem:[%s3 + $0x78] sm:$0xff]
        %v312 = vld [vmem:[%s3 + $0x80] sm:$0xff]
        %v313 = vld [vmem:[%s3 + $0x88] sm:$0xff]
        %v314 = vld [vmem:[%s3 + $0x90] sm:$0xff]
        %v315 = vld [vmem:[%s3 + $0x98] sm:$0xff]
        %v316 = vld [vmem:[%s3 + $0xa0] sm:$0xff]
        %v317 = vld [vmem:[%s3 + $0xa8] sm:$0xff]
        %v318 = vld [vmem:[%s3 + $0xb0] sm:$0xff]
        %v319 = vld [vmem:[%s3 + $0xb8] sm:$0xff]
        %v320 = vld [vmem:[%s3 + $0xc0] sm:$0xff]
        %v321 = vld [vmem:[%s3 + $0xc8] sm:$0xff]
        %v322 = vld [vmem:[%s3 + $0xd0] sm:$0xff]
        %v323 = vld [vmem:[%s3 + $0xd8] sm:$0xff]
        %v324 = vld [vmem:[%s3 + $0xe0] sm:$0xff]
        %v325 = vld [vmem:[%s3 + $0xe8] sm:$0xff]
        %v326 = vld [vmem:[%s3 + $0xf0] sm:$0xff]
        %v327 = vld [vmem:[%s3 + $0xf8] sm:$0xff]
        %329 = vset.pattern.permute.xlu0 0
        %330 = vperm.xlu0 %329, %v296
        %v331 = vpop.permute.xlu0 %330
        %334 = vset.pattern.permute.xlu0 0
        %335 = vperm.xlu0 %334, %v297
        %v336 = vpop.permute.xlu0 %335
        %339 = vset.pattern.permute.xlu0 0
        %340 = vperm.xlu0 %339, %v298
        %v341 = vpop.permute.xlu0 %340
        %344 = vset.pattern.permute.xlu0 0
        %345 = vperm.xlu0 %344, %v299
        %v346 = vpop.permute.xlu0 %345
        %349 = vset.pattern.permute.xlu0 0
        %350 = vperm.xlu0 %349, %v300
        %v351 = vpop.permute.xlu0 %350
        %354 = vset.pattern.permute.xlu0 0
        %355 = vperm.xlu0 %354, %v301
        %v356 = vpop.permute.xlu0 %355
        %359 = vset.pattern.permute.xlu0 0
        %360 = vperm.xlu0 %359, %v302
        %v361 = vpop.permute.xlu0 %360
        %364 = vset.pattern.permute.xlu0 0
        %365 = vperm.xlu0 %364, %v303
        %v366 = vpop.permute.xlu0 %365
        %369 = vset.pattern.permute.xlu0 0
        %370 = vperm.xlu0 %369, %v304
        %v371 = vpop.permute.xlu0 %370
        %374 = vset.pattern.permute.xlu0 0
        %375 = vperm.xlu0 %374, %v305
        %v376 = vpop.permute.xlu0 %375
        %379 = vset.pattern.permute.xlu0 0
        %380 = vperm.xlu0 %379, %v306
        %v381 = vpop.permute.xlu0 %380
        %384 = vset.pattern.permute.xlu0 0
        %385 = vperm.xlu0 %384, %v307
        %v386 = vpop.permute.xlu0 %385
        %389 = vset.pattern.permute.xlu0 0
        %390 = vperm.xlu0 %389, %v308
        %v391 = vpop.permute.xlu0 %390
        %394 = vset.pattern.permute.xlu0 0
        %395 = vperm.xlu0 %394, %v309
        %v396 = vpop.permute.xlu0 %395
        %399 = vset.pattern.permute.xlu0 0
        %400 = vperm.xlu0 %399, %v310
        %v401 = vpop.permute.xlu0 %400
        %404 = vset.pattern.permute.xlu0 0
        %405 = vperm.xlu0 %404, %v311
        %v406 = vpop.permute.xlu0 %405
        %409 = vset.pattern.permute.xlu0 0
        %410 = vperm.xlu0 %409, %v312
        %v411 = vpop.permute.xlu0 %410
        %414 = vset.pattern.permute.xlu0 0
        %415 = vperm.xlu0 %414, %v313
        %v416 = vpop.permute.xlu0 %415
        %419 = vset.pattern.permute.xlu0 0
        %420 = vperm.xlu0 %419, %v314
        %v421 = vpop.permute.xlu0 %420
        %424 = vset.pattern.permute.xlu0 0
        %425 = vperm.xlu0 %424, %v315
        %v426 = vpop.permute.xlu0 %425
        %429 = vset.pattern.permute.xlu0 0
        %430 = vperm.xlu0 %429, %v316
        %v431 = vpop.permute.xlu0 %430
        %434 = vset.pattern.permute.xlu0 0
        %435 = vperm.xlu0 %434, %v317
        %v436 = vpop.permute.xlu0 %435
        %439 = vset.pattern.permute.xlu0 0
        %440 = vperm.xlu0 %439, %v318
        %v441 = vpop.permute.xlu0 %440
        %444 = vset.pattern.permute.xlu0 0
        %445 = vperm.xlu0 %444, %v319
        %v446 = vpop.permute.xlu0 %445
        %449 = vset.pattern.permute.xlu0 0
        %450 = vperm.xlu0 %449, %v320
        %v451 = vpop.permute.xlu0 %450
        %454 = vset.pattern.permute.xlu0 0
        %455 = vperm.xlu0 %454, %v321
        %v456 = vpop.permute.xlu0 %455
        %459 = vset.pattern.permute.xlu0 0
        %460 = vperm.xlu0 %459, %v322
        %v461 = vpop.permute.xlu0 %460
        %464 = vset.pattern.permute.xlu0 0
        %465 = vperm.xlu0 %464, %v323
        %v466 = vpop.permute.xlu0 %465
        %469 = vset.pattern.permute.xlu0 0
        %470 = vperm.xlu0 %469, %v324
        %v471 = vpop.permute.xlu0 %470
        %474 = vset.pattern.permute.xlu0 0
        %475 = vperm.xlu0 %474, %v325
        %v476 = vpop.permute.xlu0 %475
        %479 = vset.pattern.permute.xlu0 0
        %480 = vperm.xlu0 %479, %v326
        %v481 = vpop.permute.xlu0 %480
        %484 = vset.pattern.permute.xlu0 0
        %485 = vperm.xlu0 %484, %v327
        %v486 = vpop.permute.xlu0 %485
        %v488 = vmul.f32 %v265, %v331
        %v489 = vmul.f32 %v264, %v336
        %v490 = vmul.f32 %v295, %v341
        %v491 = vmul.f32 %v294, %v346
        %v492 = vmul.f32 %v293, %v351
        %v493 = vmul.f32 %v292, %v356
        %v494 = vmul.f32 %v291, %v361
        %v495 = vmul.f32 %v290, %v366
        %v496 = vmul.f32 %v289, %v371
        %v497 = vmul.f32 %v288, %v376
        %v498 = vmul.f32 %v287, %v381
        %v499 = vmul.f32 %v286, %v386
        %v500 = vmul.f32 %v285, %v391
        %v501 = vmul.f32 %v284, %v396
        %v502 = vmul.f32 %v283, %v401
        %v503 = vmul.f32 %v282, %v406
        %v504 = vmul.f32 %v281, %v411
        %v505 = vmul.f32 %v280, %v416
        %v506 = vmul.f32 %v279, %v421
        %v507 = vmul.f32 %v278, %v426
        %v508 = vmul.f32 %v277, %v431
        %v509 = vmul.f32 %v276, %v436
        %v510 = vmul.f32 %v275, %v441
        %v511 = vmul.f32 %v274, %v446
        %v512 = vmul.f32 %v273, %v451
        %v513 = vmul.f32 %v272, %v456
        %v514 = vmul.f32 %v271, %v461
        %v515 = vmul.f32 %v270, %v466
        %v516 = vmul.f32 %v269, %v471
        %v517 = vmul.f32 %v268, %v476
        %v518 = vmul.f32 %v267, %v481
        %v519 = vmul.f32 %v266, %v486
        %v520 = vpack.c.bf16 %v489, %v488
        %v521 = vpack.c.bf16 %v491, %v490
        %v522 = vpack.c.bf16 %v493, %v492
        %v523 = vpack.c.bf16 %v495, %v494
        %v524 = vpack.c.bf16 %v497, %v496
        %v525 = vpack.c.bf16 %v499, %v498
        %v526 = vpack.c.bf16 %v501, %v500
        %v527 = vpack.c.bf16 %v503, %v502
        %v528 = vpack.c.bf16 %v505, %v504
        %v529 = vpack.c.bf16 %v507, %v506
        %v530 = vpack.c.bf16 %v509, %v508
        %v531 = vpack.c.bf16 %v511, %v510
        %v532 = vpack.c.bf16 %v513, %v512
        %v533 = vpack.c.bf16 %v515, %v514
        %v534 = vpack.c.bf16 %v517, %v516
        %v535 = vpack.c.bf16 %v519, %v518
        %536 = vst [vmem:[#allocation2] sm:$0xff] %v520
        %537 = vst [vmem:[#allocation2 + $0x48] sm:$0xff] %v521
        %538 = vst [vmem:[#allocation2 + $0x90] sm:$0xff] %v522
        %539 = vst [vmem:[#allocation2 + $0xd8] sm:$0xff] %v523
        %540 = vst [vmem:[#allocation2 + $0x120] sm:$0xff] %v524
        %541 = vst [vmem:[#allocation2 + $0x168] sm:$0xff] %v525
        %542 = vst [vmem:[#allocation2 + $0x1b0] sm:$0xff] %v526
        %543 = vst [vmem:[#allocation2 + $0x1f8] sm:$0xff] %v527
        %544 = vst [vmem:[#allocation2 + $0x240] sm:$0xff] %v528
        %545 = vst [vmem:[#allocation2 + $0x288] sm:$0xff] %v529
        %546 = vst [vmem:[#allocation2 + $0x2d0] sm:$0xff] %v530
        %547 = vst [vmem:[#allocation2 + $0x318] sm:$0xff] %v531
        %548 = vst [vmem:[#allocation2 + $0x360] sm:$0xff] %v532
        %549 = vst [vmem:[#allocation2 + $0x3a8] sm:$0xff] %v533
        %550 = vst [vmem:[#allocation2 + $0x3f0] sm:$0xff] %v534
        %551 = vst [vmem:[#allocation2 + $0x438] sm:$0xff] %v535
        %s552 = scalar_lea.vmem %s3, 256
        %v553 = vld [vmem:[%s552] sm:$0xff]
        %v554 = vld [vmem:[%s552 + $0x8] sm:$0xff]
        %v555 = vld [vmem:[%s552 + $0x10] sm:$0xff]
        %v556 = vld [vmem:[%s552 + $0x18] sm:$0xff]
        %v557 = vld [vmem:[%s552 + $0x20] sm:$0xff]
        %v558 = vld [vmem:[%s552 + $0x28] sm:$0xff]
        %v559 = vld [vmem:[%s552 + $0x30] sm:$0xff]
        %v560 = vld [vmem:[%s552 + $0x38] sm:$0xff]
        %v561 = vld [vmem:[%s552 + $0x40] sm:$0xff]
        %v562 = vld [vmem:[%s552 + $0x48] sm:$0xff]
        %v563 = vld [vmem:[%s552 + $0x50] sm:$0xff]
        %v564 = vld [vmem:[%s552 + $0x58] sm:$0xff]
        %v565 = vld [vmem:[%s552 + $0x60] sm:$0xff]
        %v566 = vld [vmem:[%s552 + $0x68] sm:$0xff]
        %v567 = vld [vmem:[%s552 + $0x70] sm:$0xff]
        %v568 = vld [vmem:[%s552 + $0x78] sm:$0xff]
        %v569 = vld [vmem:[%s552 + $0x80] sm:$0xff]
        %v570 = vld [vmem:[%s552 + $0x88] sm:$0xff]
        %v571 = vld [vmem:[%s552 + $0x90] sm:$0xff]
        %v572 = vld [vmem:[%s552 + $0x98] sm:$0xff]
        %v573 = vld [vmem:[%s552 + $0xa0] sm:$0xff]
        %v574 = vld [vmem:[%s552 + $0xa8] sm:$0xff]
        %v575 = vld [vmem:[%s552 + $0xb0] sm:$0xff]
        %v576 = vld [vmem:[%s552 + $0xb8] sm:$0xff]
        %v577 = vld [vmem:[%s552 + $0xc0] sm:$0xff]
        %v578 = vld [vmem:[%s552 + $0xc8] sm:$0xff]
        %v579 = vld [vmem:[%s552 + $0xd0] sm:$0xff]
        %v580 = vld [vmem:[%s552 + $0xd8] sm:$0xff]
        %v581 = vld [vmem:[%s552 + $0xe0] sm:$0xff]
        %v582 = vld [vmem:[%s552 + $0xe8] sm:$0xff]
        %v583 = vld [vmem:[%s552 + $0xf0] sm:$0xff]
        %v584 = vld [vmem:[%s552 + $0xf8] sm:$0xff]
        %586 = vset.pattern.permute.xlu0 0
        %587 = vperm.xlu0 %586, %v553
        %v588 = vpop.permute.xlu0 %587
        %591 = vset.pattern.permute.xlu0 0
        %592 = vperm.xlu0 %591, %v554
        %v593 = vpop.permute.xlu0 %592
        %596 = vset.pattern.permute.xlu0 0
        %597 = vperm.xlu0 %596, %v555
        %v598 = vpop.permute.xlu0 %597
        %601 = vset.pattern.permute.xlu0 0
        %602 = vperm.xlu0 %601, %v556
        %v603 = vpop.permute.xlu0 %602
        %606 = vset.pattern.permute.xlu0 0
        %607 = vperm.xlu0 %606, %v557
        %v608 = vpop.permute.xlu0 %607
        %611 = vset.pattern.permute.xlu0 0
        %612 = vperm.xlu0 %611, %v558
        %v613 = vpop.permute.xlu0 %612
        %616 = vset.pattern.permute.xlu0 0
        %617 = vperm.xlu0 %616, %v559
        %v618 = vpop.permute.xlu0 %617
        %621 = vset.pattern.permute.xlu0 0
        %622 = vperm.xlu0 %621, %v560
        %v623 = vpop.permute.xlu0 %622
        %626 = vset.pattern.permute.xlu0 0
        %627 = vperm.xlu0 %626, %v561
        %v628 = vpop.permute.xlu0 %627
        %631 = vset.pattern.permute.xlu0 0
        %632 = vperm.xlu0 %631, %v562
        %v633 = vpop.permute.xlu0 %632
        %636 = vset.pattern.permute.xlu0 0
        %637 = vperm.xlu0 %636, %v563
        %v638 = vpop.permute.xlu0 %637
        %641 = vset.pattern.permute.xlu0 0
        %642 = vperm.xlu0 %641, %v564
        %v643 = vpop.permute.xlu0 %642
        %646 = vset.pattern.permute.xlu0 0
        %647 = vperm.xlu0 %646, %v565
        %v648 = vpop.permute.xlu0 %647
        %651 = vset.pattern.permute.xlu0 0
        %652 = vperm.xlu0 %651, %v566
        %v653 = vpop.permute.xlu0 %652
        %656 = vset.pattern.permute.xlu0 0
        %657 = vperm.xlu0 %656, %v567
        %v658 = vpop.permute.xlu0 %657
        %661 = vset.pattern.permute.xlu0 0
        %662 = vperm.xlu0 %661, %v568
        %v663 = vpop.permute.xlu0 %662
        %666 = vset.pattern.permute.xlu0 0
        %667 = vperm.xlu0 %666, %v569
        %v668 = vpop.permute.xlu0 %667
        %671 = vset.pattern.permute.xlu0 0
        %672 = vperm.xlu0 %671, %v570
        %v673 = vpop.permute.xlu0 %672
        %676 = vset.pattern.permute.xlu0 0
        %677 = vperm.xlu0 %676, %v571
        %v678 = vpop.permute.xlu0 %677
        %681 = vset.pattern.permute.xlu0 0
        %682 = vperm.xlu0 %681, %v572
        %v683 = vpop.permute.xlu0 %682
        %686 = vset.pattern.permute.xlu0 0
        %687 = vperm.xlu0 %686, %v573
        %v688 = vpop.permute.xlu0 %687
        %691 = vset.pattern.permute.xlu0 0
        %692 = vperm.xlu0 %691, %v574
        %v693 = vpop.permute.xlu0 %692
        %696 = vset.pattern.permute.xlu0 0
        %697 = vperm.xlu0 %696, %v575
        %v698 = vpop.permute.xlu0 %697
        %701 = vset.pattern.permute.xlu0 0
        %702 = vperm.xlu0 %701, %v576
        %v703 = vpop.permute.xlu0 %702
        %706 = vset.pattern.permute.xlu0 0
        %707 = vperm.xlu0 %706, %v577
        %v708 = vpop.permute.xlu0 %707
        %711 = vset.pattern.permute.xlu0 0
        %712 = vperm.xlu0 %711, %v578
        %v713 = vpop.permute.xlu0 %712
        %716 = vset.pattern.permute.xlu0 0
        %717 = vperm.xlu0 %716, %v579
        %v718 = vpop.permute.xlu0 %717
        %721 = vset.pattern.permute.xlu0 0
        %722 = vperm.xlu0 %721, %v580
        %v723 = vpop.permute.xlu0 %722
        %726 = vset.pattern.permute.xlu0 0
        %727 = vperm.xlu0 %726, %v581
        %v728 = vpop.permute.xlu0 %727
        %731 = vset.pattern.permute.xlu0 0
        %732 = vperm.xlu0 %731, %v582
        %v733 = vpop.permute.xlu0 %732
        %736 = vset.pattern.permute.xlu0 0
        %737 = vperm.xlu0 %736, %v583
        %v738 = vpop.permute.xlu0 %737
        %741 = vset.pattern.permute.xlu0 0
        %742 = vperm.xlu0 %741, %v584
        %v743 = vpop.permute.xlu0 %742
        %v745 = vmul.f32 %v227, %v588
        %v746 = vmul.f32 %v228, %v593
        %v747 = vmul.f32 %v197, %v598
        %v748 = vmul.f32 %v198, %v603
        %v749 = vmul.f32 %v199, %v608
        %v750 = vmul.f32 %v200, %v613
        %v751 = vmul.f32 %v201, %v618
        %v752 = vmul.f32 %v202, %v623
        %v753 = vmul.f32 %v203, %v628
        %v754 = vmul.f32 %v204, %v633
        %v755 = vmul.f32 %v205, %v638
        %v756 = vmul.f32 %v206, %v643
        %v757 = vmul.f32 %v207, %v648
        %v758 = vmul.f32 %v208, %v653
        %v759 = vmul.f32 %v209, %v658
        %v760 = vmul.f32 %v210, %v663
        %v761 = vmul.f32 %v211, %v668
        %v762 = vmul.f32 %v212, %v673
        %v763 = vmul.f32 %v213, %v678
        %v764 = vmul.f32 %v214, %v683
        %v765 = vmul.f32 %v215, %v688
        %v766 = vmul.f32 %v216, %v693
        %v767 = vmul.f32 %v217, %v698
        %v768 = vmul.f32 %v218, %v703
        %v769 = vmul.f32 %v219, %v708
        %v770 = vmul.f32 %v220, %v713
        %v771 = vmul.f32 %v221, %v718
        %v772 = vmul.f32 %v222, %v723
        %v773 = vmul.f32 %v223, %v728
        %v774 = vmul.f32 %v224, %v733
        %v775 = vmul.f32 %v225, %v738
        %v776 = vmul.f32 %v226, %v743
        %v777 = vpack.c.bf16 %v746, %v745
        %v778 = vpack.c.bf16 %v748, %v747
        %v779 = vpack.c.bf16 %v750, %v749
        %v780 = vpack.c.bf16 %v752, %v751
        %v781 = vpack.c.bf16 %v754, %v753
        %v782 = vpack.c.bf16 %v756, %v755
        %v783 = vpack.c.bf16 %v758, %v757
        %v784 = vpack.c.bf16 %v760, %v759
        %v785 = vpack.c.bf16 %v762, %v761
        %v786 = vpack.c.bf16 %v764, %v763
        %v787 = vpack.c.bf16 %v766, %v765
        %v788 = vpack.c.bf16 %v768, %v767
        %v789 = vpack.c.bf16 %v770, %v769
        %v790 = vpack.c.bf16 %v772, %v771
        %v791 = vpack.c.bf16 %v774, %v773
        %v792 = vpack.c.bf16 %v776, %v775
        %793 = vst [vmem:[#allocation2 + $0x8] sm:$0xff] %v777
        %794 = vst [vmem:[#allocation2 + $0x50] sm:$0xff] %v778
        %795 = vst [vmem:[#allocation2 + $0x98] sm:$0xff] %v779
        %796 = vst [vmem:[#allocation2 + $0xe0] sm:$0xff] %v780
        %797 = vst [vmem:[#allocation2 + $0x128] sm:$0xff] %v781
        %798 = vst [vmem:[#allocation2 + $0x170] sm:$0xff] %v782
        %799 = vst [vmem:[#allocation2 + $0x1b8] sm:$0xff] %v783
        %800 = vst [vmem:[#allocation2 + $0x200] sm:$0xff] %v784
        %801 = vst [vmem:[#allocation2 + $0x248] sm:$0xff] %v785
        %802 = vst [vmem:[#allocation2 + $0x290] sm:$0xff] %v786
        %803 = vst [vmem:[#allocation2 + $0x2d8] sm:$0xff] %v787
        %804 = vst [vmem:[#allocation2 + $0x320] sm:$0xff] %v788
        %805 = vst [vmem:[#allocation2 + $0x368] sm:$0xff] %v789
        %806 = vst [vmem:[#allocation2 + $0x3b0] sm:$0xff] %v790
        %807 = vst [vmem:[#allocation2 + $0x3f8] sm:$0xff] %v791
        %808 = vst [vmem:[#allocation2 + $0x440] sm:$0xff] %v792
        %v809 = vrot.slane %v197, 1
        %v810 = vrot.slane %v198, 1
        %v811 = vrot.slane %v199, 1
        %v812 = vrot.slane %v200, 1
        %v813 = vrot.slane %v201, 1
        %v814 = vrot.slane %v202, 1
        %v815 = vrot.slane %v203, 1
        %v816 = vrot.slane %v204, 1
        %v817 = vrot.slane %v205, 1
        %v818 = vrot.slane %v206, 1
        %v819 = vrot.slane %v207, 1
        %v820 = vrot.slane %v208, 1
        %v821 = vrot.slane %v209, 1
        %v822 = vrot.slane %v210, 1
        %v823 = vrot.slane %v211, 1
        %v824 = vrot.slane %v212, 1
        %v825 = vrot.slane %v213, 1
        %v826 = vrot.slane %v214, 1
        %v827 = vrot.slane %v215, 1
        %v828 = vrot.slane %v216, 1
        %v829 = vrot.slane %v217, 1
        %v830 = vrot.slane %v218, 1
        %v831 = vrot.slane %v219, 1
        %v832 = vrot.slane %v220, 1
        %v833 = vrot.slane %v221, 1
        %v834 = vrot.slane %v222, 1
        %v835 = vrot.slane %v223, 1
        %v836 = vrot.slane %v224, 1
        %v837 = vrot.slane %v225, 1
        %v838 = vrot.slane %v226, 1
        %v839 = vrot.slane %v227, 1
        %v840 = vrot.slane %v228, 1
        %vm841 = vcmp.lt.s32.totalorder %v262, 7
        %v842 = vsel %vm841, %v839, %v840
        %v843 = vsel %vm841, %v838, %v839
        %v844 = vsel %vm841, %v837, %v838
        %v845 = vsel %vm841, %v836, %v837
        %v846 = vsel %vm841, %v835, %v836
        %v847 = vsel %vm841, %v834, %v835
        %v848 = vsel %vm841, %v833, %v834
        %v849 = vsel %vm841, %v832, %v833
        %v850 = vsel %vm841, %v831, %v832
        %v851 = vsel %vm841, %v830, %v831
        %v852 = vsel %vm841, %v829, %v830
        %v853 = vsel %vm841, %v828, %v829
        %v854 = vsel %vm841, %v827, %v828
        %v855 = vsel %vm841, %v826, %v827
        %v856 = vsel %vm841, %v825, %v826
        %v857 = vsel %vm841, %v824, %v825
        %v858 = vsel %vm841, %v823, %v824
        %v859 = vsel %vm841, %v822, %v823
        %v860 = vsel %vm841, %v821, %v822
        %v861 = vsel %vm841, %v820, %v821
        %v862 = vsel %vm841, %v819, %v820
        %v863 = vsel %vm841, %v818, %v819
        %v864 = vsel %vm841, %v817, %v818
        %v865 = vsel %vm841, %v816, %v817
        %v866 = vsel %vm841, %v815, %v816
        %v867 = vsel %vm841, %v814, %v815
        %v868 = vsel %vm841, %v813, %v814
        %v869 = vsel %vm841, %v812, %v813
        %v870 = vsel %vm841, %v811, %v812
        %v871 = vsel %vm841, %v810, %v811
        %v872 = vsel %vm841, %v809, %v810
        %v873 = vsel %vm841, %v840, %v809
        %s874 = scalar_lea.vmem %s3, 512
        %v875 = vld [vmem:[%s874] sm:$0xff]
        %v876 = vld [vmem:[%s874 + $0x8] sm:$0xff]
        %v877 = vld [vmem:[%s874 + $0x10] sm:$0xff]
        %v878 = vld [vmem:[%s874 + $0x18] sm:$0xff]
        %v879 = vld [vmem:[%s874 + $0x20] sm:$0xff]
        %v880 = vld [vmem:[%s874 + $0x28] sm:$0xff]
        %v881 = vld [vmem:[%s874 + $0x30] sm:$0xff]
        %v882 = vld [vmem:[%s874 + $0x38] sm:$0xff]
        %v883 = vld [vmem:[%s874 + $0x40] sm:$0xff]
        %v884 = vld [vmem:[%s874 + $0x48] sm:$0xff]
        %v885 = vld [vmem:[%s874 + $0x50] sm:$0xff]
        %v886 = vld [vmem:[%s874 + $0x58] sm:$0xff]
        %v887 = vld [vmem:[%s874 + $0x60] sm:$0xff]
        %v888 = vld [vmem:[%s874 + $0x68] sm:$0xff]
        %v889 = vld [vmem:[%s874 + $0x70] sm:$0xff]
        %v890 = vld [vmem:[%s874 + $0x78] sm:$0xff]
        %v891 = vld [vmem:[%s874 + $0x80] sm:$0xff]
        %v892 = vld [vmem:[%s874 + $0x88] sm:$0xff]
        %v893 = vld [vmem:[%s874 + $0x90] sm:$0xff]
        %v894 = vld [vmem:[%s874 + $0x98] sm:$0xff]
        %v895 = vld [vmem:[%s874 + $0xa0] sm:$0xff]
        %v896 = vld [vmem:[%s874 + $0xa8] sm:$0xff]
        %v897 = vld [vmem:[%s874 + $0xb0] sm:$0xff]
        %v898 = vld [vmem:[%s874 + $0xb8] sm:$0xff]
        %v899 = vld [vmem:[%s874 + $0xc0] sm:$0xff]
        %v900 = vld [vmem:[%s874 + $0xc8] sm:$0xff]
        %v901 = vld [vmem:[%s874 + $0xd0] sm:$0xff]
        %v902 = vld [vmem:[%s874 + $0xd8] sm:$0xff]
        %v903 = vld [vmem:[%s874 + $0xe0] sm:$0xff]
        %v904 = vld [vmem:[%s874 + $0xe8] sm:$0xff]
        %v905 = vld [vmem:[%s874 + $0xf0] sm:$0xff]
        %v906 = vld [vmem:[%s874 + $0xf8] sm:$0xff]
        %908 = vset.pattern.permute.xlu0 0
        %909 = vperm.xlu0 %908, %v875
        %v910 = vpop.permute.xlu0 %909
        %913 = vset.pattern.permute.xlu0 0
        %914 = vperm.xlu0 %913, %v876
        %v915 = vpop.permute.xlu0 %914
        %918 = vset.pattern.permute.xlu0 0
        %919 = vperm.xlu0 %918, %v877
        %v920 = vpop.permute.xlu0 %919
        %923 = vset.pattern.permute.xlu0 0
        %924 = vperm.xlu0 %923, %v878
        %v925 = vpop.permute.xlu0 %924
        %928 = vset.pattern.permute.xlu0 0
        %929 = vperm.xlu0 %928, %v879
        %v930 = vpop.permute.xlu0 %929
        %933 = vset.pattern.permute.xlu0 0
        %934 = vperm.xlu0 %933, %v880
        %v935 = vpop.permute.xlu0 %934
        %938 = vset.pattern.permute.xlu0 0
        %939 = vperm.xlu0 %938, %v881
        %v940 = vpop.permute.xlu0 %939
        %943 = vset.pattern.permute.xlu0 0
        %944 = vperm.xlu0 %943, %v882
        %v945 = vpop.permute.xlu0 %944
        %948 = vset.pattern.permute.xlu0 0
        %949 = vperm.xlu0 %948, %v883
        %v950 = vpop.permute.xlu0 %949
        %953 = vset.pattern.permute.xlu0 0
        %954 = vperm.xlu0 %953, %v884
        %v955 = vpop.permute.xlu0 %954
        %958 = vset.pattern.permute.xlu0 0
        %959 = vperm.xlu0 %958, %v885
        %v960 = vpop.permute.xlu0 %959
        %963 = vset.pattern.permute.xlu0 0
        %964 = vperm.xlu0 %963, %v886
        %v965 = vpop.permute.xlu0 %964
        %968 = vset.pattern.permute.xlu0 0
        %969 = vperm.xlu0 %968, %v887
        %v970 = vpop.permute.xlu0 %969
        %973 = vset.pattern.permute.xlu0 0
        %974 = vperm.xlu0 %973, %v888
        %v975 = vpop.permute.xlu0 %974
        %978 = vset.pattern.permute.xlu0 0
        %979 = vperm.xlu0 %978, %v889
        %v980 = vpop.permute.xlu0 %979
        %983 = vset.pattern.permute.xlu0 0
        %984 = vperm.xlu0 %983, %v890
        %v985 = vpop.permute.xlu0 %984
        %988 = vset.pattern.permute.xlu0 0
        %989 = vperm.xlu0 %988, %v891
        %v990 = vpop.permute.xlu0 %989
        %993 = vset.pattern.permute.xlu0 0
        %994 = vperm.xlu0 %993, %v892
        %v995 = vpop.permute.xlu0 %994
        %998 = vset.pattern.permute.xlu0 0
        %999 = vperm.xlu0 %998, %v893
        %v1000 = vpop.permute.xlu0 %999
        %1003 = vset.pattern.permute.xlu0 0
        %1004 = vperm.xlu0 %1003, %v894
        %v1005 = vpop.permute.xlu0 %1004
        %1008 = vset.pattern.permute.xlu0 0
        %1009 = vperm.xlu0 %1008, %v895
        %v1010 = vpop.permute.xlu0 %1009
        %1013 = vset.pattern.permute.xlu0 0
        %1014 = vperm.xlu0 %1013, %v896
        %v1015 = vpop.permute.xlu0 %1014
        %1018 = vset.pattern.permute.xlu0 0
        %1019 = vperm.xlu0 %1018, %v897
        %v1020 = vpop.permute.xlu0 %1019
        %1023 = vset.pattern.permute.xlu0 0
        %1024 = vperm.xlu0 %1023, %v898
        %v1025 = vpop.permute.xlu0 %1024
        %1028 = vset.pattern.permute.xlu0 0
        %1029 = vperm.xlu0 %1028, %v899
        %v1030 = vpop.permute.xlu0 %1029
        %1033 = vset.pattern.permute.xlu0 0
        %1034 = vperm.xlu0 %1033, %v900
        %v1035 = vpop.permute.xlu0 %1034
        %1038 = vset.pattern.permute.xlu0 0
        %1039 = vperm.xlu0 %1038, %v901
        %v1040 = vpop.permute.xlu0 %1039
        %1043 = vset.pattern.permute.xlu0 0
        %1044 = vperm.xlu0 %1043, %v902
        %v1045 = vpop.permute.xlu0 %1044
        %1048 = vset.pattern.permute.xlu0 0
        %1049 = vperm.xlu0 %1048, %v903
        %v1050 = vpop.permute.xlu0 %1049
        %1053 = vset.pattern.permute.xlu0 0
        %1054 = vperm.xlu0 %1053, %v904
        %v1055 = vpop.permute.xlu0 %1054
        %1058 = vset.pattern.permute.xlu0 0
        %1059 = vperm.xlu0 %1058, %v905
        %v1060 = vpop.permute.xlu0 %1059
        %1063 = vset.pattern.permute.xlu0 0
        %1064 = vperm.xlu0 %1063, %v906
        %v1065 = vpop.permute.xlu0 %1064
        %v1067 = vmul.f32 %v842, %v910
        %v1068 = vmul.f32 %v873, %v915
        %v1069 = vmul.f32 %v872, %v920
        %v1070 = vmul.f32 %v871, %v925
        %v1071 = vmul.f32 %v870, %v930
        %v1072 = vmul.f32 %v869, %v935
        %v1073 = vmul.f32 %v868, %v940
        %v1074 = vmul.f32 %v867, %v945
        %v1075 = vmul.f32 %v866, %v950
        %v1076 = vmul.f32 %v865, %v955
        %v1077 = vmul.f32 %v864, %v960
        %v1078 = vmul.f32 %v863, %v965
        %v1079 = vmul.f32 %v862, %v970
        %v1080 = vmul.f32 %v861, %v975
        %v1081 = vmul.f32 %v860, %v980
        %v1082 = vmul.f32 %v859, %v985
        %v1083 = vmul.f32 %v858, %v990
        %v1084 = vmul.f32 %v857, %v995
        %v1085 = vmul.f32 %v856, %v1000
        %v1086 = vmul.f32 %v855, %v1005
        %v1087 = vmul.f32 %v854, %v1010
        %v1088 = vmul.f32 %v853, %v1015
        %v1089 = vmul.f32 %v852, %v1020
        %v1090 = vmul.f32 %v851, %v1025
        %v1091 = vmul.f32 %v850, %v1030
        %v1092 = vmul.f32 %v849, %v1035
        %v1093 = vmul.f32 %v848, %v1040
        %v1094 = vmul.f32 %v847, %v1045
        %v1095 = vmul.f32 %v846, %v1050
        %v1096 = vmul.f32 %v845, %v1055
        %v1097 = vmul.f32 %v844, %v1060
        %v1098 = vmul.f32 %v843, %v1065
        %v1099 = vpack.c.bf16 %v1068, %v1067
        %v1100 = vpack.c.bf16 %v1070, %v1069
        %v1101 = vpack.c.bf16 %v1072, %v1071
        %v1102 = vpack.c.bf16 %v1074, %v1073
        %v1103 = vpack.c.bf16 %v1076, %v1075
        %v1104 = vpack.c.bf16 %v1078, %v1077
        %v1105 = vpack.c.bf16 %v1080, %v1079
        %v1106 = vpack.c.bf16 %v1082, %v1081
        %v1107 = vpack.c.bf16 %v1084, %v1083
        %v1108 = vpack.c.bf16 %v1086, %v1085
        %v1109 = vpack.c.bf16 %v1088, %v1087
        %v1110 = vpack.c.bf16 %v1090, %v1089
        %v1111 = vpack.c.bf16 %v1092, %v1091
        %v1112 = vpack.c.bf16 %v1094, %v1093
        %v1113 = vpack.c.bf16 %v1096, %v1095
        %v1114 = vpack.c.bf16 %v1098, %v1097
        %1115 = vst [vmem:[#allocation2 + $0x10] sm:$0xff] %v1099
        %1116 = vst [vmem:[#allocation2 + $0x58] sm:$0xff] %v1100
        %1117 = vst [vmem:[#allocation2 + $0xa0] sm:$0xff] %v1101
        %1118 = vst [vmem:[#allocation2 + $0xe8] sm:$0xff] %v1102
        %1119 = vst [vmem:[#allocation2 + $0x130] sm:$0xff] %v1103
        %1120 = vst [vmem:[#allocation2 + $0x178] sm:$0xff] %v1104
        %1121 = vst [vmem:[#allocation2 + $0x1c0] sm:$0xff] %v1105
        %1122 = vst [vmem:[#allocation2 + $0x208] sm:$0xff] %v1106
        %1123 = vst [vmem:[#allocation2 + $0x250] sm:$0xff] %v1107
        %1124 = vst [vmem:[#allocation2 + $0x298] sm:$0xff] %v1108
        %1125 = vst [vmem:[#allocation2 + $0x2e0] sm:$0xff] %v1109
        %1126 = vst [vmem:[#allocation2 + $0x328] sm:$0xff] %v1110
        %1127 = vst [vmem:[#allocation2 + $0x370] sm:$0xff] %v1111
        %1128 = vst [vmem:[#allocation2 + $0x3b8] sm:$0xff] %v1112
        %1129 = vst [vmem:[#allocation2 + $0x400] sm:$0xff] %v1113
        %1130 = vst [vmem:[#allocation2 + $0x448] sm:$0xff] %v1114
        %s1131 = scalar_lea.vmem %s3, 768
        %v1132 = vld [vmem:[%s1131] sm:$0xff]
        %v1133 = vld [vmem:[%s1131 + $0x8] sm:$0xff]
        %v1134 = vld [vmem:[%s1131 + $0x10] sm:$0xff]
        %v1135 = vld [vmem:[%s1131 + $0x18] sm:$0xff]
        %v1136 = vld [vmem:[%s1131 + $0x20] sm:$0xff]
        %v1137 = vld [vmem:[%s1131 + $0x28] sm:$0xff]
        %v1138 = vld [vmem:[%s1131 + $0x30] sm:$0xff]
        %v1139 = vld [vmem:[%s1131 + $0x38] sm:$0xff]
        %v1140 = vld [vmem:[%s1131 + $0x40] sm:$0xff]
        %v1141 = vld [vmem:[%s1131 + $0x48] sm:$0xff]
        %v1142 = vld [vmem:[%s1131 + $0x50] sm:$0xff]
        %v1143 = vld [vmem:[%s1131 + $0x58] sm:$0xff]
        %v1144 = vld [vmem:[%s1131 + $0x60] sm:$0xff]
        %v1145 = vld [vmem:[%s1131 + $0x68] sm:$0xff]
        %v1146 = vld [vmem:[%s1131 + $0x70] sm:$0xff]
        %v1147 = vld [vmem:[%s1131 + $0x78] sm:$0xff]
        %v1148 = vld [vmem:[%s1131 + $0x80] sm:$0xff]
        %v1149 = vld [vmem:[%s1131 + $0x88] sm:$0xff]
        %v1150 = vld [vmem:[%s1131 + $0x90] sm:$0xff]
        %v1151 = vld [vmem:[%s1131 + $0x98] sm:$0xff]
        %v1152 = vld [vmem:[%s1131 + $0xa0] sm:$0xff]
        %v1153 = vld [vmem:[%s1131 + $0xa8] sm:$0xff]
        %v1154 = vld [vmem:[%s1131 + $0xb0] sm:$0xff]
        %v1155 = vld [vmem:[%s1131 + $0xb8] sm:$0xff]
        %v1156 = vld [vmem:[%s1131 + $0xc0] sm:$0xff]
        %v1157 = vld [vmem:[%s1131 + $0xc8] sm:$0xff]
        %v1158 = vld [vmem:[%s1131 + $0xd0] sm:$0xff]
        %v1159 = vld [vmem:[%s1131 + $0xd8] sm:$0xff]
        %v1160 = vld [vmem:[%s1131 + $0xe0] sm:$0xff]
        %v1161 = vld [vmem:[%s1131 + $0xe8] sm:$0xff]
        %v1162 = vld [vmem:[%s1131 + $0xf0] sm:$0xff]
        %v1163 = vld [vmem:[%s1131 + $0xf8] sm:$0xff]
        %1165 = vset.pattern.permute.xlu0 0
        %1166 = vperm.xlu0 %1165, %v1132
        %v1167 = vpop.permute.xlu0 %1166
        %1170 = vset.pattern.permute.xlu0 0
        %1171 = vperm.xlu0 %1170, %v1133
        %v1172 = vpop.permute.xlu0 %1171
        %1175 = vset.pattern.permute.xlu0 0
        %1176 = vperm.xlu0 %1175, %v1134
        %v1177 = vpop.permute.xlu0 %1176
        %1180 = vset.pattern.permute.xlu0 0
        %1181 = vperm.xlu0 %1180, %v1135
        %v1182 = vpop.permute.xlu0 %1181
        %1185 = vset.pattern.permute.xlu0 0
        %1186 = vperm.xlu0 %1185, %v1136
        %v1187 = vpop.permute.xlu0 %1186
        %1190 = vset.pattern.permute.xlu0 0
        %1191 = vperm.xlu0 %1190, %v1137
        %v1192 = vpop.permute.xlu0 %1191
        %1195 = vset.pattern.permute.xlu0 0
        %1196 = vperm.xlu0 %1195, %v1138
        %v1197 = vpop.permute.xlu0 %1196
        %1200 = vset.pattern.permute.xlu0 0
        %1201 = vperm.xlu0 %1200, %v1139
        %v1202 = vpop.permute.xlu0 %1201
        %1205 = vset.pattern.permute.xlu0 0
        %1206 = vperm.xlu0 %1205, %v1140
        %v1207 = vpop.permute.xlu0 %1206
        %1210 = vset.pattern.permute.xlu0 0
        %1211 = vperm.xlu0 %1210, %v1141
        %v1212 = vpop.permute.xlu0 %1211
        %1215 = vset.pattern.permute.xlu0 0
        %1216 = vperm.xlu0 %1215, %v1142
        %v1217 = vpop.permute.xlu0 %1216
        %1220 = vset.pattern.permute.xlu0 0
        %1221 = vperm.xlu0 %1220, %v1143
        %v1222 = vpop.permute.xlu0 %1221
        %1225 = vset.pattern.permute.xlu0 0
        %1226 = vperm.xlu0 %1225, %v1144
        %v1227 = vpop.permute.xlu0 %1226
        %1230 = vset.pattern.permute.xlu0 0
        %1231 = vperm.xlu0 %1230, %v1145
        %v1232 = vpop.permute.xlu0 %1231
        %1235 = vset.pattern.permute.xlu0 0
        %1236 = vperm.xlu0 %1235, %v1146
        %v1237 = vpop.permute.xlu0 %1236
        %1240 = vset.pattern.permute.xlu0 0
        %1241 = vperm.xlu0 %1240, %v1147
        %v1242 = vpop.permute.xlu0 %1241
        %1245 = vset.pattern.permute.xlu0 0
        %1246 = vperm.xlu0 %1245, %v1148
        %v1247 = vpop.permute.xlu0 %1246
        %1250 = vset.pattern.permute.xlu0 0
        %1251 = vperm.xlu0 %1250, %v1149
        %v1252 = vpop.permute.xlu0 %1251
        %1255 = vset.pattern.permute.xlu0 0
        %1256 = vperm.xlu0 %1255, %v1150
        %v1257 = vpop.permute.xlu0 %1256
        %1260 = vset.pattern.permute.xlu0 0
        %1261 = vperm.xlu0 %1260, %v1151
        %v1262 = vpop.permute.xlu0 %1261
        %1265 = vset.pattern.permute.xlu0 0
        %1266 = vperm.xlu0 %1265, %v1152
        %v1267 = vpop.permute.xlu0 %1266
        %1270 = vset.pattern.permute.xlu0 0
        %1271 = vperm.xlu0 %1270, %v1153
        %v1272 = vpop.permute.xlu0 %1271
        %1275 = vset.pattern.permute.xlu0 0
        %1276 = vperm.xlu0 %1275, %v1154
        %v1277 = vpop.permute.xlu0 %1276
        %1280 = vset.pattern.permute.xlu0 0
        %1281 = vperm.xlu0 %1280, %v1155
        %v1282 = vpop.permute.xlu0 %1281
        %1285 = vset.pattern.permute.xlu0 0
        %1286 = vperm.xlu0 %1285, %v1156
        %v1287 = vpop.permute.xlu0 %1286
        %1290 = vset.pattern.permute.xlu0 0
        %1291 = vperm.xlu0 %1290, %v1157
        %v1292 = vpop.permute.xlu0 %1291
        %1295 = vset.pattern.permute.xlu0 0
        %1296 = vperm.xlu0 %1295, %v1158
        %v1297 = vpop.permute.xlu0 %1296
        %1300 = vset.pattern.permute.xlu0 0
        %1301 = vperm.xlu0 %1300, %v1159
        %v1302 = vpop.permute.xlu0 %1301
        %1305 = vset.pattern.permute.xlu0 0
        %1306 = vperm.xlu0 %1305, %v1160
        %v1307 = vpop.permute.xlu0 %1306
        %1310 = vset.pattern.permute.xlu0 0
        %1311 = vperm.xlu0 %1310, %v1161
        %v1312 = vpop.permute.xlu0 %1311
        %1315 = vset.pattern.permute.xlu0 0
        %1316 = vperm.xlu0 %1315, %v1162
        %v1317 = vpop.permute.xlu0 %1316
        %1320 = vset.pattern.permute.xlu0 0
        %1321 = vperm.xlu0 %1320, %v1163
        %v1322 = vpop.permute.xlu0 %1321
        %v1324 = vmul.f32 %v295, %v1167
        %v1325 = vmul.f32 %v294, %v1172
        %v1326 = vmul.f32 %v293, %v1177
        %v1327 = vmul.f32 %v292, %v1182
        %v1328 = vmul.f32 %v291, %v1187
        %v1329 = vmul.f32 %v290, %v1192
        %v1330 = vmul.f32 %v289, %v1197
        %v1331 = vmul.f32 %v288, %v1202
        %v1332 = vmul.f32 %v287, %v1207
        %v1333 = vmul.f32 %v286, %v1212
        %v1334 = vmul.f32 %v285, %v1217
        %v1335 = vmul.f32 %v284, %v1222
        %v1336 = vmul.f32 %v283, %v1227
        %v1337 = vmul.f32 %v282, %v1232
        %v1338 = vmul.f32 %v281, %v1237
        %v1339 = vmul.f32 %v280, %v1242
        %v1340 = vmul.f32 %v279, %v1247
        %v1341 = vmul.f32 %v278, %v1252
        %v1342 = vmul.f32 %v277, %v1257
        %v1343 = vmul.f32 %v276, %v1262
        %v1344 = vmul.f32 %v275, %v1267
        %v1345 = vmul.f32 %v274, %v1272
        %v1346 = vmul.f32 %v273, %v1277
        %v1347 = vmul.f32 %v272, %v1282
        %v1348 = vmul.f32 %v271, %v1287
        %v1349 = vmul.f32 %v270, %v1292
        %v1350 = vmul.f32 %v269, %v1297
        %v1351 = vmul.f32 %v268, %v1302
        %v1352 = vmul.f32 %v267, %v1307
        %v1353 = vmul.f32 %v266, %v1312
        %v1354 = vmul.f32 %v265, %v1317
        %v1355 = vmul.f32 %v264, %v1322
        %v1356 = vpack.c.bf16 %v1325, %v1324
        %v1357 = vpack.c.bf16 %v1327, %v1326
        %v1358 = vpack.c.bf16 %v1329, %v1328
        %v1359 = vpack.c.bf16 %v1331, %v1330
        %v1360 = vpack.c.bf16 %v1333, %v1332
        %v1361 = vpack.c.bf16 %v1335, %v1334
        %v1362 = vpack.c.bf16 %v1337, %v1336
        %v1363 = vpack.c.bf16 %v1339, %v1338
        %v1364 = vpack.c.bf16 %v1341, %v1340
        %v1365 = vpack.c.bf16 %v1343, %v1342
        %v1366 = vpack.c.bf16 %v1345, %v1344
        %v1367 = vpack.c.bf16 %v1347, %v1346
        %v1368 = vpack.c.bf16 %v1349, %v1348
        %v1369 = vpack.c.bf16 %v1351, %v1350
        %v1370 = vpack.c.bf16 %v1353, %v1352
        %v1371 = vpack.c.bf16 %v1355, %v1354
        %1372 = vst [vmem:[#allocation2 + $0x18] sm:$0xff] %v1356
        %1373 = vst [vmem:[#allocation2 + $0x60] sm:$0xff] %v1357
        %1374 = vst [vmem:[#allocation2 + $0xa8] sm:$0xff] %v1358
        %1375 = vst [vmem:[#allocation2 + $0xf0] sm:$0xff] %v1359
        %1376 = vst [vmem:[#allocation2 + $0x138] sm:$0xff] %v1360
        %1377 = vst [vmem:[#allocation2 + $0x180] sm:$0xff] %v1361
        %1378 = vst [vmem:[#allocation2 + $0x1c8] sm:$0xff] %v1362
        %1379 = vst [vmem:[#allocation2 + $0x210] sm:$0xff] %v1363
        %1380 = vst [vmem:[#allocation2 + $0x258] sm:$0xff] %v1364
        %1381 = vst [vmem:[#allocation2 + $0x2a0] sm:$0xff] %v1365
        %1382 = vst [vmem:[#allocation2 + $0x2e8] sm:$0xff] %v1366
        %1383 = vst [vmem:[#allocation2 + $0x330] sm:$0xff] %v1367
        %1384 = vst [vmem:[#allocation2 + $0x378] sm:$0xff] %v1368
        %1385 = vst [vmem:[#allocation2 + $0x3c0] sm:$0xff] %v1369
        %1386 = vst [vmem:[#allocation2 + $0x408] sm:$0xff] %v1370
        %1387 = vst [vmem:[#allocation2 + $0x450] sm:$0xff] %v1371
        %v1388 = vpack.c.bf16 %v198, %v197
        %v1389 = vpack.c.bf16 %v200, %v199
        %v1390 = vpack.c.bf16 %v202, %v201
        %v1391 = vpack.c.bf16 %v204, %v203
        %v1392 = vpack.c.bf16 %v206, %v205
        %v1393 = vpack.c.bf16 %v208, %v207
        %v1394 = vpack.c.bf16 %v210, %v209
        %v1395 = vpack.c.bf16 %v212, %v211
        %v1396 = vpack.c.bf16 %v214, %v213
        %v1397 = vpack.c.bf16 %v216, %v215
        %v1398 = vpack.c.bf16 %v218, %v217
        %v1399 = vpack.c.bf16 %v220, %v219
        %v1400 = vpack.c.bf16 %v222, %v221
        %v1401 = vpack.c.bf16 %v224, %v223
        %v1402 = vpack.c.bf16 %v226, %v225
        %v1403 = vpack.c.bf16 %v228, %v227
        %1404 = vst [vmem:[#allocation2 + $0x20] sm:$0xff] %v1388
        %1405 = vst [vmem:[#allocation2 + $0x68] sm:$0xff] %v1389
        %1406 = vst [vmem:[#allocation2 + $0xb0] sm:$0xff] %v1390
        %1407 = vst [vmem:[#allocation2 + $0xf8] sm:$0xff] %v1391
        %1408 = vst [vmem:[#allocation2 + $0x140] sm:$0xff] %v1392
        %1409 = vst [vmem:[#allocation2 + $0x188] sm:$0xff] %v1393
        %1410 = vst [vmem:[#allocation2 + $0x1d0] sm:$0xff] %v1394
        %1411 = vst [vmem:[#allocation2 + $0x218] sm:$0xff] %v1395
        %1412 = vst [vmem:[#allocation2 + $0x260] sm:$0xff] %v1396
        %1413 = vst [vmem:[#allocation2 + $0x2a8] sm:$0xff] %v1397
        %1414 = vst [vmem:[#allocation2 + $0x2f0] sm:$0xff] %v1398
        %1415 = vst [vmem:[#allocation2 + $0x338] sm:$0xff] %v1399
        %1416 = vst [vmem:[#allocation2 + $0x380] sm:$0xff] %v1400
        %1417 = vst [vmem:[#allocation2 + $0x3c8] sm:$0xff] %v1401
        %1418 = vst [vmem:[#allocation2 + $0x410] sm:$0xff] %v1402
        %1419 = vst [vmem:[#allocation2 + $0x458] sm:$0xff] %v1403
        %s1420 = scalar_lea.vmem %s3, 1280
        %v1421 = vld [vmem:[%s1420] sm:$0xff]
        %v1422 = vld [vmem:[%s1420 + $0x8] sm:$0xff]
        %v1423 = vld [vmem:[%s1420 + $0x10] sm:$0xff]
        %v1424 = vld [vmem:[%s1420 + $0x18] sm:$0xff]
        %v1425 = vld [vmem:[%s1420 + $0x20] sm:$0xff]
        %v1426 = vld [vmem:[%s1420 + $0x28] sm:$0xff]
        %v1427 = vld [vmem:[%s1420 + $0x30] sm:$0xff]
        %v1428 = vld [vmem:[%s1420 + $0x38] sm:$0xff]
        %v1429 = vld [vmem:[%s1420 + $0x40] sm:$0xff]
        %v1430 = vld [vmem:[%s1420 + $0x48] sm:$0xff]
        %v1431 = vld [vmem:[%s1420 + $0x50] sm:$0xff]
        %v1432 = vld [vmem:[%s1420 + $0x58] sm:$0xff]
        %v1433 = vld [vmem:[%s1420 + $0x60] sm:$0xff]
        %v1434 = vld [vmem:[%s1420 + $0x68] sm:$0xff]
        %v1435 = vld [vmem:[%s1420 + $0x70] sm:$0xff]
        %v1436 = vld [vmem:[%s1420 + $0x78] sm:$0xff]
        %v1437 = vld [vmem:[%s1420 + $0x80] sm:$0xff]
        %v1438 = vld [vmem:[%s1420 + $0x88] sm:$0xff]
        %v1439 = vld [vmem:[%s1420 + $0x90] sm:$0xff]
        %v1440 = vld [vmem:[%s1420 + $0x98] sm:$0xff]
        %v1441 = vld [vmem:[%s1420 + $0xa0] sm:$0xff]
        %v1442 = vld [vmem:[%s1420 + $0xa8] sm:$0xff]
        %v1443 = vld [vmem:[%s1420 + $0xb0] sm:$0xff]
        %v1444 = vld [vmem:[%s1420 + $0xb8] sm:$0xff]
        %v1445 = vld [vmem:[%s1420 + $0xc0] sm:$0xff]
        %v1446 = vld [vmem:[%s1420 + $0xc8] sm:$0xff]
        %v1447 = vld [vmem:[%s1420 + $0xd0] sm:$0xff]
        %v1448 = vld [vmem:[%s1420 + $0xd8] sm:$0xff]
        %v1449 = vld [vmem:[%s1420 + $0xe0] sm:$0xff]
        %v1450 = vld [vmem:[%s1420 + $0xe8] sm:$0xff]
        %v1451 = vld [vmem:[%s1420 + $0xf0] sm:$0xff]
        %v1452 = vld [vmem:[%s1420 + $0xf8] sm:$0xff]
        %1454 = vset.pattern.permute.xlu0 0
        %1455 = vperm.xlu0 %1454, %v1421
        %v1456 = vpop.permute.xlu0 %1455
        %1459 = vset.pattern.permute.xlu0 0
        %1460 = vperm.xlu0 %1459, %v1422
        %v1461 = vpop.permute.xlu0 %1460
        %1464 = vset.pattern.permute.xlu0 0
        %1465 = vperm.xlu0 %1464, %v1423
        %v1466 = vpop.permute.xlu0 %1465
        %1469 = vset.pattern.permute.xlu0 0
        %1470 = vperm.xlu0 %1469, %v1424
        %v1471 = vpop.permute.xlu0 %1470
        %1474 = vset.pattern.permute.xlu0 0
        %1475 = vperm.xlu0 %1474, %v1425
        %v1476 = vpop.permute.xlu0 %1475
        %1479 = vset.pattern.permute.xlu0 0
        %1480 = vperm.xlu0 %1479, %v1426
        %v1481 = vpop.permute.xlu0 %1480
        %1484 = vset.pattern.permute.xlu0 0
        %1485 = vperm.xlu0 %1484, %v1427
        %v1486 = vpop.permute.xlu0 %1485
        %1489 = vset.pattern.permute.xlu0 0
        %1490 = vperm.xlu0 %1489, %v1428
        %v1491 = vpop.permute.xlu0 %1490
        %1494 = vset.pattern.permute.xlu0 0
        %1495 = vperm.xlu0 %1494, %v1429
        %v1496 = vpop.permute.xlu0 %1495
        %1499 = vset.pattern.permute.xlu0 0
        %1500 = vperm.xlu0 %1499, %v1430
        %v1501 = vpop.permute.xlu0 %1500
        %1504 = vset.pattern.permute.xlu0 0
        %1505 = vperm.xlu0 %1504, %v1431
        %v1506 = vpop.permute.xlu0 %1505
        %1509 = vset.pattern.permute.xlu0 0
        %1510 = vperm.xlu0 %1509, %v1432
        %v1511 = vpop.permute.xlu0 %1510
        %1514 = vset.pattern.permute.xlu0 0
        %1515 = vperm.xlu0 %1514, %v1433
        %v1516 = vpop.permute.xlu0 %1515
        %1519 = vset.pattern.permute.xlu0 0
        %1520 = vperm.xlu0 %1519, %v1434
        %v1521 = vpop.permute.xlu0 %1520
        %1524 = vset.pattern.permute.xlu0 0
        %1525 = vperm.xlu0 %1524, %v1435
        %v1526 = vpop.permute.xlu0 %1525
        %1529 = vset.pattern.permute.xlu0 0
        %1530 = vperm.xlu0 %1529, %v1436
        %v1531 = vpop.permute.xlu0 %1530
        %1534 = vset.pattern.permute.xlu0 0
        %1535 = vperm.xlu0 %1534, %v1437
        %v1536 = vpop.permute.xlu0 %1535
        %1539 = vset.pattern.permute.xlu0 0
        %1540 = vperm.xlu0 %1539, %v1438
        %v1541 = vpop.permute.xlu0 %1540
        %1544 = vset.pattern.permute.xlu0 0
        %1545 = vperm.xlu0 %1544, %v1439
        %v1546 = vpop.permute.xlu0 %1545
        %1549 = vset.pattern.permute.xlu0 0
        %1550 = vperm.xlu0 %1549, %v1440
        %v1551 = vpop.permute.xlu0 %1550
        %1554 = vset.pattern.permute.xlu0 0
        %1555 = vperm.xlu0 %1554, %v1441
        %v1556 = vpop.permute.xlu0 %1555
        %1559 = vset.pattern.permute.xlu0 0
        %1560 = vperm.xlu0 %1559, %v1442
        %v1561 = vpop.permute.xlu0 %1560
        %1564 = vset.pattern.permute.xlu0 0
        %1565 = vperm.xlu0 %1564, %v1443
        %v1566 = vpop.permute.xlu0 %1565
        %1569 = vset.pattern.permute.xlu0 0
        %1570 = vperm.xlu0 %1569, %v1444
        %v1571 = vpop.permute.xlu0 %1570
        %1574 = vset.pattern.permute.xlu0 0
        %1575 = vperm.xlu0 %1574, %v1445
        %v1576 = vpop.permute.xlu0 %1575
        %1579 = vset.pattern.permute.xlu0 0
        %1580 = vperm.xlu0 %1579, %v1446
        %v1581 = vpop.permute.xlu0 %1580
        %1584 = vset.pattern.permute.xlu0 0
        %1585 = vperm.xlu0 %1584, %v1447
        %v1586 = vpop.permute.xlu0 %1585
        %1589 = vset.pattern.permute.xlu0 0
        %1590 = vperm.xlu0 %1589, %v1448
        %v1591 = vpop.permute.xlu0 %1590
        %1594 = vset.pattern.permute.xlu0 0
        %1595 = vperm.xlu0 %1594, %v1449
        %v1596 = vpop.permute.xlu0 %1595
        %1599 = vset.pattern.permute.xlu0 0
        %1600 = vperm.xlu0 %1599, %v1450
        %v1601 = vpop.permute.xlu0 %1600
        %1604 = vset.pattern.permute.xlu0 0
        %1605 = vperm.xlu0 %1604, %v1451
        %v1606 = vpop.permute.xlu0 %1605
        %1609 = vset.pattern.permute.xlu0 0
        %1610 = vperm.xlu0 %1609, %v1452
        %v1611 = vpop.permute.xlu0 %1610
        %v1613 = vmul.f32 %v872, %v1456
        %v1614 = vmul.f32 %v871, %v1461
        %v1615 = vmul.f32 %v870, %v1466
        %v1616 = vmul.f32 %v869, %v1471
        %v1617 = vmul.f32 %v868, %v1476
        %v1618 = vmul.f32 %v867, %v1481
        %v1619 = vmul.f32 %v866, %v1486
        %v1620 = vmul.f32 %v865, %v1491
        %v1621 = vmul.f32 %v864, %v1496
        %v1622 = vmul.f32 %v863, %v1501
        %v1623 = vmul.f32 %v862, %v1506
        %v1624 = vmul.f32 %v861, %v1511
        %v1625 = vmul.f32 %v860, %v1516
        %v1626 = vmul.f32 %v859, %v1521
        %v1627 = vmul.f32 %v858, %v1526
        %v1628 = vmul.f32 %v857, %v1531
        %v1629 = vmul.f32 %v856, %v1536
        %v1630 = vmul.f32 %v855, %v1541
        %v1631 = vmul.f32 %v854, %v1546
        %v1632 = vmul.f32 %v853, %v1551
        %v1633 = vmul.f32 %v852, %v1556
        %v1634 = vmul.f32 %v851, %v1561
        %v1635 = vmul.f32 %v850, %v1566
        %v1636 = vmul.f32 %v849, %v1571
        %v1637 = vmul.f32 %v848, %v1576
        %v1638 = vmul.f32 %v847, %v1581
        %v1639 = vmul.f32 %v846, %v1586
        %v1640 = vmul.f32 %v845, %v1591
        %v1641 = vmul.f32 %v844, %v1596
        %v1642 = vmul.f32 %v843, %v1601
        %v1643 = vmul.f32 %v842, %v1606
        %v1644 = vmul.f32 %v873, %v1611
        %v1645 = vpack.c.bf16 %v1614, %v1613
        %v1646 = vpack.c.bf16 %v1616, %v1615
        %v1647 = vpack.c.bf16 %v1618, %v1617
        %v1648 = vpack.c.bf16 %v1620, %v1619
        %v1649 = vpack.c.bf16 %v1622, %v1621
        %v1650 = vpack.c.bf16 %v1624, %v1623
        %v1651 = vpack.c.bf16 %v1626, %v1625
        %v1652 = vpack.c.bf16 %v1628, %v1627
        %v1653 = vpack.c.bf16 %v1630, %v1629
        %v1654 = vpack.c.bf16 %v1632, %v1631
        %v1655 = vpack.c.bf16 %v1634, %v1633
        %v1656 = vpack.c.bf16 %v1636, %v1635
        %v1657 = vpack.c.bf16 %v1638, %v1637
        %v1658 = vpack.c.bf16 %v1640, %v1639
        %v1659 = vpack.c.bf16 %v1642, %v1641
        %v1660 = vpack.c.bf16 %v1644, %v1643
        %1661 = vst [vmem:[#allocation2 + $0x28] sm:$0xff] %v1645
        %1662 = vst [vmem:[#allocation2 + $0x70] sm:$0xff] %v1646
        %1663 = vst [vmem:[#allocation2 + $0xb8] sm:$0xff] %v1647
        %1664 = vst [vmem:[#allocation2 + $0x100] sm:$0xff] %v1648
        %1665 = vst [vmem:[#allocation2 + $0x148] sm:$0xff] %v1649
        %1666 = vst [vmem:[#allocation2 + $0x190] sm:$0xff] %v1650
        %1667 = vst [vmem:[#allocation2 + $0x1d8] sm:$0xff] %v1651
        %1668 = vst [vmem:[#allocation2 + $0x220] sm:$0xff] %v1652
        %1669 = vst [vmem:[#allocation2 + $0x268] sm:$0xff] %v1653
        %1670 = vst [vmem:[#allocation2 + $0x2b0] sm:$0xff] %v1654
        %1671 = vst [vmem:[#allocation2 + $0x2f8] sm:$0xff] %v1655
        %1672 = vst [vmem:[#allocation2 + $0x340] sm:$0xff] %v1656
        %1673 = vst [vmem:[#allocation2 + $0x388] sm:$0xff] %v1657
        %1674 = vst [vmem:[#allocation2 + $0x3d0] sm:$0xff] %v1658
        %1675 = vst [vmem:[#allocation2 + $0x418] sm:$0xff] %v1659
        %1676 = vst [vmem:[#allocation2 + $0x460] sm:$0xff] %v1660
        %s1677 = scalar_lea.vmem %s3, 1536
        %v1678 = vld [vmem:[%s1677] sm:$0xff]
        %v1679 = vld [vmem:[%s1677 + $0x8] sm:$0xff]
        %v1680 = vld [vmem:[%s1677 + $0x10] sm:$0xff]
        %v1681 = vld [vmem:[%s1677 + $0x18] sm:$0xff]
        %v1682 = vld [vmem:[%s1677 + $0x20] sm:$0xff]
        %v1683 = vld [vmem:[%s1677 + $0x28] sm:$0xff]
        %v1684 = vld [vmem:[%s1677 + $0x30] sm:$0xff]
        %v1685 = vld [vmem:[%s1677 + $0x38] sm:$0xff]
        %v1686 = vld [vmem:[%s1677 + $0x40] sm:$0xff]
        %v1687 = vld [vmem:[%s1677 + $0x48] sm:$0xff]
        %v1688 = vld [vmem:[%s1677 + $0x50] sm:$0xff]
        %v1689 = vld [vmem:[%s1677 + $0x58] sm:$0xff]
        %v1690 = vld [vmem:[%s1677 + $0x60] sm:$0xff]
        %v1691 = vld [vmem:[%s1677 + $0x68] sm:$0xff]
        %v1692 = vld [vmem:[%s1677 + $0x70] sm:$0xff]
        %v1693 = vld [vmem:[%s1677 + $0x78] sm:$0xff]
        %v1694 = vld [vmem:[%s1677 + $0x80] sm:$0xff]
        %v1695 = vld [vmem:[%s1677 + $0x88] sm:$0xff]
        %v1696 = vld [vmem:[%s1677 + $0x90] sm:$0xff]
        %v1697 = vld [vmem:[%s1677 + $0x98] sm:$0xff]
        %v1698 = vld [vmem:[%s1677 + $0xa0] sm:$0xff]
        %v1699 = vld [vmem:[%s1677 + $0xa8] sm:$0xff]
        %v1700 = vld [vmem:[%s1677 + $0xb0] sm:$0xff]
        %v1701 = vld [vmem:[%s1677 + $0xb8] sm:$0xff]
        %v1702 = vld [vmem:[%s1677 + $0xc0] sm:$0xff]
        %v1703 = vld [vmem:[%s1677 + $0xc8] sm:$0xff]
        %v1704 = vld [vmem:[%s1677 + $0xd0] sm:$0xff]
        %v1705 = vld [vmem:[%s1677 + $0xd8] sm:$0xff]
        %v1706 = vld [vmem:[%s1677 + $0xe0] sm:$0xff]
        %v1707 = vld [vmem:[%s1677 + $0xe8] sm:$0xff]
        %v1708 = vld [vmem:[%s1677 + $0xf0] sm:$0xff]
        %v1709 = vld [vmem:[%s1677 + $0xf8] sm:$0xff]
        %1711 = vset.pattern.permute.xlu0 0
        %1712 = vperm.xlu0 %1711, %v1678
        %v1713 = vpop.permute.xlu0 %1712
        %1716 = vset.pattern.permute.xlu0 0
        %1717 = vperm.xlu0 %1716, %v1679
        %v1718 = vpop.permute.xlu0 %1717
        %1721 = vset.pattern.permute.xlu0 0
        %1722 = vperm.xlu0 %1721, %v1680
        %v1723 = vpop.permute.xlu0 %1722
        %1726 = vset.pattern.permute.xlu0 0
        %1727 = vperm.xlu0 %1726, %v1681
        %v1728 = vpop.permute.xlu0 %1727
        %1731 = vset.pattern.permute.xlu0 0
        %1732 = vperm.xlu0 %1731, %v1682
        %v1733 = vpop.permute.xlu0 %1732
        %1736 = vset.pattern.permute.xlu0 0
        %1737 = vperm.xlu0 %1736, %v1683
        %v1738 = vpop.permute.xlu0 %1737
        %1741 = vset.pattern.permute.xlu0 0
        %1742 = vperm.xlu0 %1741, %v1684
        %v1743 = vpop.permute.xlu0 %1742
        %1746 = vset.pattern.permute.xlu0 0
        %1747 = vperm.xlu0 %1746, %v1685
        %v1748 = vpop.permute.xlu0 %1747
        %1751 = vset.pattern.permute.xlu0 0
        %1752 = vperm.xlu0 %1751, %v1686
        %v1753 = vpop.permute.xlu0 %1752
        %1756 = vset.pattern.permute.xlu0 0
        %1757 = vperm.xlu0 %1756, %v1687
        %v1758 = vpop.permute.xlu0 %1757
        %1761 = vset.pattern.permute.xlu0 0
        %1762 = vperm.xlu0 %1761, %v1688
        %v1763 = vpop.permute.xlu0 %1762
        %1766 = vset.pattern.permute.xlu0 0
        %1767 = vperm.xlu0 %1766, %v1689
        %v1768 = vpop.permute.xlu0 %1767
        %1771 = vset.pattern.permute.xlu0 0
        %1772 = vperm.xlu0 %1771, %v1690
        %v1773 = vpop.permute.xlu0 %1772
        %1776 = vset.pattern.permute.xlu0 0
        %1777 = vperm.xlu0 %1776, %v1691
        %v1778 = vpop.permute.xlu0 %1777
        %1781 = vset.pattern.permute.xlu0 0
        %1782 = vperm.xlu0 %1781, %v1692
        %v1783 = vpop.permute.xlu0 %1782
        %1786 = vset.pattern.permute.xlu0 0
        %1787 = vperm.xlu0 %1786, %v1693
        %v1788 = vpop.permute.xlu0 %1787
        %1791 = vset.pattern.permute.xlu0 0
        %1792 = vperm.xlu0 %1791, %v1694
        %v1793 = vpop.permute.xlu0 %1792
        %1796 = vset.pattern.permute.xlu0 0
        %1797 = vperm.xlu0 %1796, %v1695
        %v1798 = vpop.permute.xlu0 %1797
        %1801 = vset.pattern.permute.xlu0 0
        %1802 = vperm.xlu0 %1801, %v1696
        %v1803 = vpop.permute.xlu0 %1802
        %1806 = vset.pattern.permute.xlu0 0
        %1807 = vperm.xlu0 %1806, %v1697
        %v1808 = vpop.permute.xlu0 %1807
        %1811 = vset.pattern.permute.xlu0 0
        %1812 = vperm.xlu0 %1811, %v1698
        %v1813 = vpop.permute.xlu0 %1812
        %1816 = vset.pattern.permute.xlu0 0
        %1817 = vperm.xlu0 %1816, %v1699
        %v1818 = vpop.permute.xlu0 %1817
        %1821 = vset.pattern.permute.xlu0 0
        %1822 = vperm.xlu0 %1821, %v1700
        %v1823 = vpop.permute.xlu0 %1822
        %1826 = vset.pattern.permute.xlu0 0
        %1827 = vperm.xlu0 %1826, %v1701
        %v1828 = vpop.permute.xlu0 %1827
        %1831 = vset.pattern.permute.xlu0 0
        %1832 = vperm.xlu0 %1831, %v1702
        %v1833 = vpop.permute.xlu0 %1832
        %1836 = vset.pattern.permute.xlu0 0
        %1837 = vperm.xlu0 %1836, %v1703
        %v1838 = vpop.permute.xlu0 %1837
        %1841 = vset.pattern.permute.xlu0 0
        %1842 = vperm.xlu0 %1841, %v1704
        %v1843 = vpop.permute.xlu0 %1842
        %1846 = vset.pattern.permute.xlu0 0
        %1847 = vperm.xlu0 %1846, %v1705
        %v1848 = vpop.permute.xlu0 %1847
        %1851 = vset.pattern.permute.xlu0 0
        %1852 = vperm.xlu0 %1851, %v1706
        %v1853 = vpop.permute.xlu0 %1852
        %1856 = vset.pattern.permute.xlu0 0
        %1857 = vperm.xlu0 %1856, %v1707
        %v1858 = vpop.permute.xlu0 %1857
        %1861 = vset.pattern.permute.xlu0 0
        %1862 = vperm.xlu0 %1861, %v1708
        %v1863 = vpop.permute.xlu0 %1862
        %1866 = vset.pattern.permute.xlu0 0
        %1867 = vperm.xlu0 %1866, %v1709
        %v1868 = vpop.permute.xlu0 %1867
        %v1870 = vmul.f32 %v293, %v1713
        %v1871 = vmul.f32 %v292, %v1718
        %v1872 = vmul.f32 %v291, %v1723
        %v1873 = vmul.f32 %v290, %v1728
        %v1874 = vmul.f32 %v289, %v1733
        %v1875 = vmul.f32 %v288, %v1738
        %v1876 = vmul.f32 %v287, %v1743
        %v1877 = vmul.f32 %v286, %v1748
        %v1878 = vmul.f32 %v285, %v1753
        %v1879 = vmul.f32 %v284, %v1758
        %v1880 = vmul.f32 %v283, %v1763
        %v1881 = vmul.f32 %v282, %v1768
        %v1882 = vmul.f32 %v281, %v1773
        %v1883 = vmul.f32 %v280, %v1778
        %v1884 = vmul.f32 %v279, %v1783
        %v1885 = vmul.f32 %v278, %v1788
        %v1886 = vmul.f32 %v277, %v1793
        %v1887 = vmul.f32 %v276, %v1798
        %v1888 = vmul.f32 %v275, %v1803
        %v1889 = vmul.f32 %v274, %v1808
        %v1890 = vmul.f32 %v273, %v1813
        %v1891 = vmul.f32 %v272, %v1818
        %v1892 = vmul.f32 %v271, %v1823
        %v1893 = vmul.f32 %v270, %v1828
        %v1894 = vmul.f32 %v269, %v1833
        %v1895 = vmul.f32 %v268, %v1838
        %v1896 = vmul.f32 %v267, %v1843
        %v1897 = vmul.f32 %v266, %v1848
        %v1898 = vmul.f32 %v265, %v1853
        %v1899 = vmul.f32 %v264, %v1858
        %v1900 = vmul.f32 %v295, %v1863
        %v1901 = vmul.f32 %v294, %v1868
        %v1902 = vpack.c.bf16 %v1871, %v1870
        %v1903 = vpack.c.bf16 %v1873, %v1872
        %v1904 = vpack.c.bf16 %v1875, %v1874
        %v1905 = vpack.c.bf16 %v1877, %v1876
        %v1906 = vpack.c.bf16 %v1879, %v1878
        %v1907 = vpack.c.bf16 %v1881, %v1880
        %v1908 = vpack.c.bf16 %v1883, %v1882
        %v1909 = vpack.c.bf16 %v1885, %v1884
        %v1910 = vpack.c.bf16 %v1887, %v1886
        %v1911 = vpack.c.bf16 %v1889, %v1888
        %v1912 = vpack.c.bf16 %v1891, %v1890
        %v1913 = vpack.c.bf16 %v1893, %v1892
        %v1914 = vpack.c.bf16 %v1895, %v1894
        %v1915 = vpack.c.bf16 %v1897, %v1896
        %v1916 = vpack.c.bf16 %v1899, %v1898
        %v1917 = vpack.c.bf16 %v1901, %v1900
        %1918 = vst [vmem:[#allocation2 + $0x30] sm:$0xff] %v1902
        %1919 = vst [vmem:[#allocation2 + $0x78] sm:$0xff] %v1903
        %1920 = vst [vmem:[#allocation2 + $0xc0] sm:$0xff] %v1904
        %1921 = vst [vmem:[#allocation2 + $0x108] sm:$0xff] %v1905
        %1922 = vst [vmem:[#allocation2 + $0x150] sm:$0xff] %v1906
        %1923 = vst [vmem:[#allocation2 + $0x198] sm:$0xff] %v1907
        %1924 = vst [vmem:[#allocation2 + $0x1e0] sm:$0xff] %v1908
        %1925 = vst [vmem:[#allocation2 + $0x228] sm:$0xff] %v1909
        %1926 = vst [vmem:[#allocation2 + $0x270] sm:$0xff] %v1910
        %1927 = vst [vmem:[#allocation2 + $0x2b8] sm:$0xff] %v1911
        %1928 = vst [vmem:[#allocation2 + $0x300] sm:$0xff] %v1912
        %1929 = vst [vmem:[#allocation2 + $0x348] sm:$0xff] %v1913
        %1930 = vst [vmem:[#allocation2 + $0x390] sm:$0xff] %v1914
        %1931 = vst [vmem:[#allocation2 + $0x3d8] sm:$0xff] %v1915
        %1932 = vst [vmem:[#allocation2 + $0x420] sm:$0xff] %v1916
        %1933 = vst [vmem:[#allocation2 + $0x468] sm:$0xff] %v1917
        %s1934 = scalar_lea.vmem %s3, 1792
        %v1935 = vld [vmem:[%s1934] sm:$0xff]
        %v1936 = vld [vmem:[%s1934 + $0x8] sm:$0xff]
        %v1937 = vld [vmem:[%s1934 + $0x10] sm:$0xff]
        %v1938 = vld [vmem:[%s1934 + $0x18] sm:$0xff]
        %v1939 = vld [vmem:[%s1934 + $0x20] sm:$0xff]
        %v1940 = vld [vmem:[%s1934 + $0x28] sm:$0xff]
        %v1941 = vld [vmem:[%s1934 + $0x30] sm:$0xff]
        %v1942 = vld [vmem:[%s1934 + $0x38] sm:$0xff]
        %v1943 = vld [vmem:[%s1934 + $0x40] sm:$0xff]
        %v1944 = vld [vmem:[%s1934 + $0x48] sm:$0xff]
        %v1945 = vld [vmem:[%s1934 + $0x50] sm:$0xff]
        %v1946 = vld [vmem:[%s1934 + $0x58] sm:$0xff]
        %v1947 = vld [vmem:[%s1934 + $0x60] sm:$0xff]
        %v1948 = vld [vmem:[%s1934 + $0x68] sm:$0xff]
        %v1949 = vld [vmem:[%s1934 + $0x70] sm:$0xff]
        %v1950 = vld [vmem:[%s1934 + $0x78] sm:$0xff]
        %v1951 = vld [vmem:[%s1934 + $0x80] sm:$0xff]
        %v1952 = vld [vmem:[%s1934 + $0x88] sm:$0xff]
        %v1953 = vld [vmem:[%s1934 + $0x90] sm:$0xff]
        %v1954 = vld [vmem:[%s1934 + $0x98] sm:$0xff]
        %v1955 = vld [vmem:[%s1934 + $0xa0] sm:$0xff]
        %v1956 = vld [vmem:[%s1934 + $0xa8] sm:$0xff]
        %v1957 = vld [vmem:[%s1934 + $0xb0] sm:$0xff]
        %v1958 = vld [vmem:[%s1934 + $0xb8] sm:$0xff]
        %v1959 = vld [vmem:[%s1934 + $0xc0] sm:$0xff]
        %v1960 = vld [vmem:[%s1934 + $0xc8] sm:$0xff]
        %v1961 = vld [vmem:[%s1934 + $0xd0] sm:$0xff]
        %v1962 = vld [vmem:[%s1934 + $0xd8] sm:$0xff]
        %v1963 = vld [vmem:[%s1934 + $0xe0] sm:$0xff]
        %v1964 = vld [vmem:[%s1934 + $0xe8] sm:$0xff]
        %v1965 = vld [vmem:[%s1934 + $0xf0] sm:$0xff]
        %v1966 = vld [vmem:[%s1934 + $0xf8] sm:$0xff]
        %1968 = vset.pattern.permute.xlu0 0
        %1969 = vperm.xlu0 %1968, %v1935
        %v1970 = vpop.permute.xlu0 %1969
        %1973 = vset.pattern.permute.xlu0 0
        %1974 = vperm.xlu0 %1973, %v1936
        %v1975 = vpop.permute.xlu0 %1974
        %1978 = vset.pattern.permute.xlu0 0
        %1979 = vperm.xlu0 %1978, %v1937
        %v1980 = vpop.permute.xlu0 %1979
        %1983 = vset.pattern.permute.xlu0 0
        %1984 = vperm.xlu0 %1983, %v1938
        %v1985 = vpop.permute.xlu0 %1984
        %1988 = vset.pattern.permute.xlu0 0
        %1989 = vperm.xlu0 %1988, %v1939
        %v1990 = vpop.permute.xlu0 %1989
        %1993 = vset.pattern.permute.xlu0 0
        %1994 = vperm.xlu0 %1993, %v1940
        %v1995 = vpop.permute.xlu0 %1994
        %1998 = vset.pattern.permute.xlu0 0
        %1999 = vperm.xlu0 %1998, %v1941
        %v2000 = vpop.permute.xlu0 %1999
        %2003 = vset.pattern.permute.xlu0 0
        %2004 = vperm.xlu0 %2003, %v1942
        %v2005 = vpop.permute.xlu0 %2004
        %2008 = vset.pattern.permute.xlu0 0
        %2009 = vperm.xlu0 %2008, %v1943
        %v2010 = vpop.permute.xlu0 %2009
        %2013 = vset.pattern.permute.xlu0 0
        %2014 = vperm.xlu0 %2013, %v1944
        %v2015 = vpop.permute.xlu0 %2014
        %2018 = vset.pattern.permute.xlu0 0
        %2019 = vperm.xlu0 %2018, %v1945
        %v2020 = vpop.permute.xlu0 %2019
        %2023 = vset.pattern.permute.xlu0 0
        %2024 = vperm.xlu0 %2023, %v1946
        %v2025 = vpop.permute.xlu0 %2024
        %2028 = vset.pattern.permute.xlu0 0
        %2029 = vperm.xlu0 %2028, %v1947
        %v2030 = vpop.permute.xlu0 %2029
        %2033 = vset.pattern.permute.xlu0 0
        %2034 = vperm.xlu0 %2033, %v1948
        %v2035 = vpop.permute.xlu0 %2034
        %2038 = vset.pattern.permute.xlu0 0
        %2039 = vperm.xlu0 %2038, %v1949
        %v2040 = vpop.permute.xlu0 %2039
        %2043 = vset.pattern.permute.xlu0 0
        %2044 = vperm.xlu0 %2043, %v1950
        %v2045 = vpop.permute.xlu0 %2044
        %2048 = vset.pattern.permute.xlu0 0
        %2049 = vperm.xlu0 %2048, %v1951
        %v2050 = vpop.permute.xlu0 %2049
        %2053 = vset.pattern.permute.xlu0 0
        %2054 = vperm.xlu0 %2053, %v1952
        %v2055 = vpop.permute.xlu0 %2054
        %2058 = vset.pattern.permute.xlu0 0
        %2059 = vperm.xlu0 %2058, %v1953
        %v2060 = vpop.permute.xlu0 %2059
        %2063 = vset.pattern.permute.xlu0 0
        %2064 = vperm.xlu0 %2063, %v1954
        %v2065 = vpop.permute.xlu0 %2064
        %2068 = vset.pattern.permute.xlu0 0
        %2069 = vperm.xlu0 %2068, %v1955
        %v2070 = vpop.permute.xlu0 %2069
        %2073 = vset.pattern.permute.xlu0 0
        %2074 = vperm.xlu0 %2073, %v1956
        %v2075 = vpop.permute.xlu0 %2074
        %2078 = vset.pattern.permute.xlu0 0
        %2079 = vperm.xlu0 %2078, %v1957
        %v2080 = vpop.permute.xlu0 %2079
        %2083 = vset.pattern.permute.xlu0 0
        %2084 = vperm.xlu0 %2083, %v1958
        %v2085 = vpop.permute.xlu0 %2084
        %2088 = vset.pattern.permute.xlu0 0
        %2089 = vperm.xlu0 %2088, %v1959
        %v2090 = vpop.permute.xlu0 %2089
        %2093 = vset.pattern.permute.xlu0 0
        %2094 = vperm.xlu0 %2093, %v1960
        %v2095 = vpop.permute.xlu0 %2094
        %2098 = vset.pattern.permute.xlu0 0
        %2099 = vperm.xlu0 %2098, %v1961
        %v2100 = vpop.permute.xlu0 %2099
        %2103 = vset.pattern.permute.xlu0 0
        %2104 = vperm.xlu0 %2103, %v1962
        %v2105 = vpop.permute.xlu0 %2104
        %2108 = vset.pattern.permute.xlu0 0
        %2109 = vperm.xlu0 %2108, %v1963
        %v2110 = vpop.permute.xlu0 %2109
        %2113 = vset.pattern.permute.xlu0 0
        %2114 = vperm.xlu0 %2113, %v1964
        %v2115 = vpop.permute.xlu0 %2114
        %2118 = vset.pattern.permute.xlu0 0
        %2119 = vperm.xlu0 %2118, %v1965
        %v2120 = vpop.permute.xlu0 %2119
        %2123 = vset.pattern.permute.xlu0 0
        %2124 = vperm.xlu0 %2123, %v1966
        %v2125 = vpop.permute.xlu0 %2124
        %v2127 = vmul.f32 %v199, %v1970
        %v2128 = vmul.f32 %v200, %v1975
        %v2129 = vmul.f32 %v201, %v1980
        %v2130 = vmul.f32 %v202, %v1985
        %v2131 = vmul.f32 %v203, %v1990
        %v2132 = vmul.f32 %v204, %v1995
        %v2133 = vmul.f32 %v205, %v2000
        %v2134 = vmul.f32 %v206, %v2005
        %v2135 = vmul.f32 %v207, %v2010
        %v2136 = vmul.f32 %v208, %v2015
        %v2137 = vmul.f32 %v209, %v2020
        %v2138 = vmul.f32 %v210, %v2025
        %v2139 = vmul.f32 %v211, %v2030
        %v2140 = vmul.f32 %v212, %v2035
        %v2141 = vmul.f32 %v213, %v2040
        %v2142 = vmul.f32 %v214, %v2045
        %v2143 = vmul.f32 %v215, %v2050
        %v2144 = vmul.f32 %v216, %v2055
        %v2145 = vmul.f32 %v217, %v2060
        %v2146 = vmul.f32 %v218, %v2065
        %v2147 = vmul.f32 %v219, %v2070
        %v2148 = vmul.f32 %v220, %v2075
        %v2149 = vmul.f32 %v221, %v2080
        %v2150 = vmul.f32 %v222, %v2085
        %v2151 = vmul.f32 %v223, %v2090
        %v2152 = vmul.f32 %v224, %v2095
        %v2153 = vmul.f32 %v225, %v2100
        %v2154 = vmul.f32 %v226, %v2105
        %v2155 = vmul.f32 %v227, %v2110
        %v2156 = vmul.f32 %v228, %v2115
        %v2157 = vmul.f32 %v197, %v2120
        %v2158 = vmul.f32 %v198, %v2125
        %v2159 = vpack.c.bf16 %v2128, %v2127
        %v2160 = vpack.c.bf16 %v2130, %v2129
        %v2161 = vpack.c.bf16 %v2132, %v2131
        %v2162 = vpack.c.bf16 %v2134, %v2133
        %v2163 = vpack.c.bf16 %v2136, %v2135
        %v2164 = vpack.c.bf16 %v2138, %v2137
        %v2165 = vpack.c.bf16 %v2140, %v2139
        %v2166 = vpack.c.bf16 %v2142, %v2141
        %v2167 = vpack.c.bf16 %v2144, %v2143
        %v2168 = vpack.c.bf16 %v2146, %v2145
        %v2169 = vpack.c.bf16 %v2148, %v2147
        %v2170 = vpack.c.bf16 %v2150, %v2149
        %v2171 = vpack.c.bf16 %v2152, %v2151
        %v2172 = vpack.c.bf16 %v2154, %v2153
        %v2173 = vpack.c.bf16 %v2156, %v2155
        %v2174 = vpack.c.bf16 %v2158, %v2157
        %2175 = vst [vmem:[#allocation2 + $0x38] sm:$0xff] %v2159
        %2176 = vst [vmem:[#allocation2 + $0x80] sm:$0xff] %v2160
        %2177 = vst [vmem:[#allocation2 + $0xc8] sm:$0xff] %v2161
        %2178 = vst [vmem:[#allocation2 + $0x110] sm:$0xff] %v2162
        %2179 = vst [vmem:[#allocation2 + $0x158] sm:$0xff] %v2163
        %2180 = vst [vmem:[#allocation2 + $0x1a0] sm:$0xff] %v2164
        %2181 = vst [vmem:[#allocation2 + $0x1e8] sm:$0xff] %v2165
        %2182 = vst [vmem:[#allocation2 + $0x230] sm:$0xff] %v2166
        %2183 = vst [vmem:[#allocation2 + $0x278] sm:$0xff] %v2167
        %2184 = vst [vmem:[#allocation2 + $0x2c0] sm:$0xff] %v2168
        %2185 = vst [vmem:[#allocation2 + $0x308] sm:$0xff] %v2169
        %2186 = vst [vmem:[#allocation2 + $0x350] sm:$0xff] %v2170
        %2187 = vst [vmem:[#allocation2 + $0x398] sm:$0xff] %v2171
        %2188 = vst [vmem:[#allocation2 + $0x3e0] sm:$0xff] %v2172
        %2189 = vst [vmem:[#allocation2 + $0x428] sm:$0xff] %v2173
        %2190 = vst [vmem:[#allocation2 + $0x470] sm:$0xff] %v2174
        %s2191 = scalar_lea.vmem %s3, 2048
        %v2192 = vld [vmem:[%s2191] sm:$0xff]
        %v2193 = vld [vmem:[%s2191 + $0x8] sm:$0xff]
        %v2194 = vld [vmem:[%s2191 + $0x10] sm:$0xff]
        %v2195 = vld [vmem:[%s2191 + $0x18] sm:$0xff]
        %v2196 = vld [vmem:[%s2191 + $0x20] sm:$0xff]
        %v2197 = vld [vmem:[%s2191 + $0x28] sm:$0xff]
        %v2198 = vld [vmem:[%s2191 + $0x30] sm:$0xff]
        %v2199 = vld [vmem:[%s2191 + $0x38] sm:$0xff]
        %v2200 = vld [vmem:[%s2191 + $0x40] sm:$0xff]
        %v2201 = vld [vmem:[%s2191 + $0x48] sm:$0xff]
        %v2202 = vld [vmem:[%s2191 + $0x50] sm:$0xff]
        %v2203 = vld [vmem:[%s2191 + $0x58] sm:$0xff]
        %v2204 = vld [vmem:[%s2191 + $0x60] sm:$0xff]
        %v2205 = vld [vmem:[%s2191 + $0x68] sm:$0xff]
        %v2206 = vld [vmem:[%s2191 + $0x70] sm:$0xff]
        %v2207 = vld [vmem:[%s2191 + $0x78] sm:$0xff]
        %v2208 = vld [vmem:[%s2191 + $0x80] sm:$0xff]
        %v2209 = vld [vmem:[%s2191 + $0x88] sm:$0xff]
        %v2210 = vld [vmem:[%s2191 + $0x90] sm:$0xff]
        %v2211 = vld [vmem:[%s2191 + $0x98] sm:$0xff]
        %v2212 = vld [vmem:[%s2191 + $0xa0] sm:$0xff]
        %v2213 = vld [vmem:[%s2191 + $0xa8] sm:$0xff]
        %v2214 = vld [vmem:[%s2191 + $0xb0] sm:$0xff]
        %v2215 = vld [vmem:[%s2191 + $0xb8] sm:$0xff]
        %v2216 = vld [vmem:[%s2191 + $0xc0] sm:$0xff]
        %v2217 = vld [vmem:[%s2191 + $0xc8] sm:$0xff]
        %v2218 = vld [vmem:[%s2191 + $0xd0] sm:$0xff]
        %v2219 = vld [vmem:[%s2191 + $0xd8] sm:$0xff]
        %v2220 = vld [vmem:[%s2191 + $0xe0] sm:$0xff]
        %v2221 = vld [vmem:[%s2191 + $0xe8] sm:$0xff]
        %v2222 = vld [vmem:[%s2191 + $0xf0] sm:$0xff]
        %v2223 = vld [vmem:[%s2191 + $0xf8] sm:$0xff]
        %2225 = vset.pattern.permute.xlu0 0
        %2226 = vperm.xlu0 %2225, %v2192
        %v2227 = vpop.permute.xlu0 %2226
        %2230 = vset.pattern.permute.xlu0 0
        %2231 = vperm.xlu0 %2230, %v2193
        %v2232 = vpop.permute.xlu0 %2231
        %2235 = vset.pattern.permute.xlu0 0
        %2236 = vperm.xlu0 %2235, %v2194
        %v2237 = vpop.permute.xlu0 %2236
        %2240 = vset.pattern.permute.xlu0 0
        %2241 = vperm.xlu0 %2240, %v2195
        %v2242 = vpop.permute.xlu0 %2241
        %2245 = vset.pattern.permute.xlu0 0
        %2246 = vperm.xlu0 %2245, %v2196
        %v2247 = vpop.permute.xlu0 %2246
        %2250 = vset.pattern.permute.xlu0 0
        %2251 = vperm.xlu0 %2250, %v2197
        %v2252 = vpop.permute.xlu0 %2251
        %2255 = vset.pattern.permute.xlu0 0
        %2256 = vperm.xlu0 %2255, %v2198
        %v2257 = vpop.permute.xlu0 %2256
        %2260 = vset.pattern.permute.xlu0 0
        %2261 = vperm.xlu0 %2260, %v2199
        %v2262 = vpop.permute.xlu0 %2261
        %2265 = vset.pattern.permute.xlu0 0
        %2266 = vperm.xlu0 %2265, %v2200
        %v2267 = vpop.permute.xlu0 %2266
        %2270 = vset.pattern.permute.xlu0 0
        %2271 = vperm.xlu0 %2270, %v2201
        %v2272 = vpop.permute.xlu0 %2271
        %2275 = vset.pattern.permute.xlu0 0
        %2276 = vperm.xlu0 %2275, %v2202
        %v2277 = vpop.permute.xlu0 %2276
        %2280 = vset.pattern.permute.xlu0 0
        %2281 = vperm.xlu0 %2280, %v2203
        %v2282 = vpop.permute.xlu0 %2281
        %2285 = vset.pattern.permute.xlu0 0
        %2286 = vperm.xlu0 %2285, %v2204
        %v2287 = vpop.permute.xlu0 %2286
        %2290 = vset.pattern.permute.xlu0 0
        %2291 = vperm.xlu0 %2290, %v2205
        %v2292 = vpop.permute.xlu0 %2291
        %2295 = vset.pattern.permute.xlu0 0
        %2296 = vperm.xlu0 %2295, %v2206
        %v2297 = vpop.permute.xlu0 %2296
        %2300 = vset.pattern.permute.xlu0 0
        %2301 = vperm.xlu0 %2300, %v2207
        %v2302 = vpop.permute.xlu0 %2301
        %2305 = vset.pattern.permute.xlu0 0
        %2306 = vperm.xlu0 %2305, %v2208
        %v2307 = vpop.permute.xlu0 %2306
        %2310 = vset.pattern.permute.xlu0 0
        %2311 = vperm.xlu0 %2310, %v2209
        %v2312 = vpop.permute.xlu0 %2311
        %2315 = vset.pattern.permute.xlu0 0
        %2316 = vperm.xlu0 %2315, %v2210
        %v2317 = vpop.permute.xlu0 %2316
        %2320 = vset.pattern.permute.xlu0 0
        %2321 = vperm.xlu0 %2320, %v2211
        %v2322 = vpop.permute.xlu0 %2321
        %2325 = vset.pattern.permute.xlu0 0
        %2326 = vperm.xlu0 %2325, %v2212
        %v2327 = vpop.permute.xlu0 %2326
        %2330 = vset.pattern.permute.xlu0 0
        %2331 = vperm.xlu0 %2330, %v2213
        %v2332 = vpop.permute.xlu0 %2331
        %2335 = vset.pattern.permute.xlu0 0
        %2336 = vperm.xlu0 %2335, %v2214
        %v2337 = vpop.permute.xlu0 %2336
        %2340 = vset.pattern.permute.xlu0 0
        %2341 = vperm.xlu0 %2340, %v2215
        %v2342 = vpop.permute.xlu0 %2341
        %2345 = vset.pattern.permute.xlu0 0
        %2346 = vperm.xlu0 %2345, %v2216
        %v2347 = vpop.permute.xlu0 %2346
        %2350 = vset.pattern.permute.xlu0 0
        %2351 = vperm.xlu0 %2350, %v2217
        %v2352 = vpop.permute.xlu0 %2351
        %2355 = vset.pattern.permute.xlu0 0
        %2356 = vperm.xlu0 %2355, %v2218
        %v2357 = vpop.permute.xlu0 %2356
        %2360 = vset.pattern.permute.xlu0 0
        %2361 = vperm.xlu0 %2360, %v2219
        %v2362 = vpop.permute.xlu0 %2361
        %2365 = vset.pattern.permute.xlu0 0
        %2366 = vperm.xlu0 %2365, %v2220
        %v2367 = vpop.permute.xlu0 %2366
        %2370 = vset.pattern.permute.xlu0 0
        %2371 = vperm.xlu0 %2370, %v2221
        %v2372 = vpop.permute.xlu0 %2371
        %2375 = vset.pattern.permute.xlu0 0
        %2376 = vperm.xlu0 %2375, %v2222
        %v2377 = vpop.permute.xlu0 %2376
        %2380 = vset.pattern.permute.xlu0 0
        %2381 = vperm.xlu0 %2380, %v2223
        %v2382 = vpop.permute.xlu0 %2381
        %v2384 = vmul.f32 %v870, %v2227
        %v2385 = vmul.f32 %v869, %v2232
        %v2386 = vmul.f32 %v868, %v2237
        %v2387 = vmul.f32 %v867, %v2242
        %v2388 = vmul.f32 %v866, %v2247
        %v2389 = vmul.f32 %v865, %v2252
        %v2390 = vmul.f32 %v864, %v2257
        %v2391 = vmul.f32 %v863, %v2262
        %v2392 = vmul.f32 %v862, %v2267
        %v2393 = vmul.f32 %v861, %v2272
        %v2394 = vmul.f32 %v860, %v2277
        %v2395 = vmul.f32 %v859, %v2282
        %v2396 = vmul.f32 %v858, %v2287
        %v2397 = vmul.f32 %v857, %v2292
        %v2398 = vmul.f32 %v856, %v2297
        %v2399 = vmul.f32 %v855, %v2302
        %v2400 = vmul.f32 %v854, %v2307
        %v2401 = vmul.f32 %v853, %v2312
        %v2402 = vmul.f32 %v852, %v2317
        %v2403 = vmul.f32 %v851, %v2322
        %v2404 = vmul.f32 %v850, %v2327
        %v2405 = vmul.f32 %v849, %v2332
        %v2406 = vmul.f32 %v848, %v2337
        %v2407 = vmul.f32 %v847, %v2342
        %v2408 = vmul.f32 %v846, %v2347
        %v2409 = vmul.f32 %v845, %v2352
        %v2410 = vmul.f32 %v844, %v2357
        %v2411 = vmul.f32 %v843, %v2362
        %v2412 = vmul.f32 %v842, %v2367
        %v2413 = vmul.f32 %v873, %v2372
        %v2414 = vmul.f32 %v872, %v2377
        %v2415 = vmul.f32 %v871, %v2382
        %v2416 = vpack.c.bf16 %v2385, %v2384
        %v2417 = vpack.c.bf16 %v2387, %v2386
        %v2418 = vpack.c.bf16 %v2389, %v2388
        %v2419 = vpack.c.bf16 %v2391, %v2390
        %v2420 = vpack.c.bf16 %v2393, %v2392
        %v2421 = vpack.c.bf16 %v2395, %v2394
        %v2422 = vpack.c.bf16 %v2397, %v2396
        %v2423 = vpack.c.bf16 %v2399, %v2398
        %v2424 = vpack.c.bf16 %v2401, %v2400
        %v2425 = vpack.c.bf16 %v2403, %v2402
        %v2426 = vpack.c.bf16 %v2405, %v2404
        %v2427 = vpack.c.bf16 %v2407, %v2406
        %v2428 = vpack.c.bf16 %v2409, %v2408
        %v2429 = vpack.c.bf16 %v2411, %v2410
        %v2430 = vpack.c.bf16 %v2413, %v2412
        %v2431 = vpack.c.bf16 %v2415, %v2414
        %2432 = vst [vmem:[#allocation2 + $0x40] sm:$0xff] %v2416
        %2433 = vst [vmem:[#allocation2 + $0x88] sm:$0xff] %v2417
        %2434 = vst [vmem:[#allocation2 + $0xd0] sm:$0xff] %v2418
        %2435 = vst [vmem:[#allocation2 + $0x118] sm:$0xff] %v2419
        %2436 = vst [vmem:[#allocation2 + $0x160] sm:$0xff] %v2420
        %2437 = vst [vmem:[#allocation2 + $0x1a8] sm:$0xff] %v2421
        %2438 = vst [vmem:[#allocation2 + $0x1f0] sm:$0xff] %v2422
        %2439 = vst [vmem:[#allocation2 + $0x238] sm:$0xff] %v2423
        %2440 = vst [vmem:[#allocation2 + $0x280] sm:$0xff] %v2424
        %2441 = vst [vmem:[#allocation2 + $0x2c8] sm:$0xff] %v2425
        %2442 = vst [vmem:[#allocation2 + $0x310] sm:$0xff] %v2426
        %2443 = vst [vmem:[#allocation2 + $0x358] sm:$0xff] %v2427
        %2444 = vst [vmem:[#allocation2 + $0x3a0] sm:$0xff] %v2428
        %2445 = vst [vmem:[#allocation2 + $0x3e8] sm:$0xff] %v2429
        %2446 = vst [vmem:[#allocation2 + $0x430] sm:$0xff] %v2430
        %2447 = vst [vmem:[#allocation2 + $0x478] sm:$0xff] %v2431
        %v2448 = vld [vmem:[#allocation2] sm:$0xff]
        %v2449 = vld [vmem:[#allocation2 + $0x8] sm:$0xff]
        %v2450 = vld [vmem:[#allocation2 + $0x10] sm:$0xff]
        %v2451 = vld [vmem:[#allocation2 + $0x18] sm:$0xff]
        %v2452 = vld [vmem:[#allocation2 + $0x20] sm:$0xff]
        %v2453 = vld [vmem:[#allocation2 + $0x28] sm:$0xff]
        %v2454 = vld [vmem:[#allocation2 + $0x30] sm:$0xff]
        %v2455 = vld [vmem:[#allocation2 + $0x38] sm:$0xff]
        %v2456 = vld [vmem:[#allocation2 + $0x40] sm:$0xff]
        %v2457 = vld [vmem:[#allocation2 + $0x48] sm:$0xff]
        %v2458 = vld [vmem:[#allocation2 + $0x50] sm:$0xff]
        %v2459 = vld [vmem:[#allocation2 + $0x58] sm:$0xff]
        %v2460 = vld [vmem:[#allocation2 + $0x60] sm:$0xff]
        %v2461 = vld [vmem:[#allocation2 + $0x68] sm:$0xff]
        %v2462 = vld [vmem:[#allocation2 + $0x70] sm:$0xff]
        %v2463 = vld [vmem:[#allocation2 + $0x78] sm:$0xff]
        %v2464 = vld [vmem:[#allocation2 + $0x80] sm:$0xff]
        %v2465 = vld [vmem:[#allocation2 + $0x88] sm:$0xff]
        %v2466 = vld [vmem:[#allocation2 + $0x90] sm:$0xff]
        %v2467 = vld [vmem:[#allocation2 + $0x98] sm:$0xff]
        %v2468 = vld [vmem:[#allocation2 + $0xa0] sm:$0xff]
        %v2469 = vld [vmem:[#allocation2 + $0xa8] sm:$0xff]
        %v2470 = vld [vmem:[#allocation2 + $0xb0] sm:$0xff]
        %v2471 = vld [vmem:[#allocation2 + $0xb8] sm:$0xff]
        %v2472 = vld [vmem:[#allocation2 + $0xc0] sm:$0xff]
        %v2473 = vld [vmem:[#allocation2 + $0xc8] sm:$0xff]
        %v2474 = vld [vmem:[#allocation2 + $0xd0] sm:$0xff]
        %v2475 = vld [vmem:[#allocation2 + $0xd8] sm:$0xff]
        %v2476 = vld [vmem:[#allocation2 + $0xe0] sm:$0xff]
        %v2477 = vld [vmem:[#allocation2 + $0xe8] sm:$0xff]
        %v2478 = vld [vmem:[#allocation2 + $0xf0] sm:$0xff]
        %v2479 = vld [vmem:[#allocation2 + $0xf8] sm:$0xff]
        %v2480 = vld [vmem:[#allocation2 + $0x100] sm:$0xff]
        %v2481 = vld [vmem:[#allocation2 + $0x108] sm:$0xff]
        %v2482 = vld [vmem:[#allocation2 + $0x110] sm:$0xff]
        %v2483 = vld [vmem:[#allocation2 + $0x118] sm:$0xff]
        %v2484 = vld [vmem:[#allocation2 + $0x120] sm:$0xff]
        %v2485 = vld [vmem:[#allocation2 + $0x128] sm:$0xff]
        %v2486 = vld [vmem:[#allocation2 + $0x130] sm:$0xff]
        %v2487 = vld [vmem:[#allocation2 + $0x138] sm:$0xff]
        %v2488 = vld [vmem:[#allocation2 + $0x140] sm:$0xff]
        %v2489 = vld [vmem:[#allocation2 + $0x148] sm:$0xff]
        %v2490 = vld [vmem:[#allocation2 + $0x150] sm:$0xff]
        %v2491 = vld [vmem:[#allocation2 + $0x158] sm:$0xff]
        %v2492 = vld [vmem:[#allocation2 + $0x160] sm:$0xff]
        %v2493 = vld [vmem:[#allocation2 + $0x168] sm:$0xff]
        %v2494 = vld [vmem:[#allocation2 + $0x170] sm:$0xff]
        %v2495 = vld [vmem:[#allocation2 + $0x178] sm:$0xff]
        %v2496 = vld [vmem:[#allocation2 + $0x180] sm:$0xff]
        %v2497 = vld [vmem:[#allocation2 + $0x188] sm:$0xff]
        %v2498 = vld [vmem:[#allocation2 + $0x190] sm:$0xff]
        %v2499 = vld [vmem:[#allocation2 + $0x198] sm:$0xff]
        %v2500 = vld [vmem:[#allocation2 + $0x1a0] sm:$0xff]
        %v2501 = vld [vmem:[#allocation2 + $0x1a8] sm:$0xff]
        %v2502 = vld [vmem:[#allocation2 + $0x1b0] sm:$0xff]
        %v2503 = vld [vmem:[#allocation2 + $0x1b8] sm:$0xff]
        %v2504 = vld [vmem:[#allocation2 + $0x1c0] sm:$0xff]
        %v2505 = vld [vmem:[#allocation2 + $0x1c8] sm:$0xff]
        %v2506 = vld [vmem:[#allocation2 + $0x1d0] sm:$0xff]
        %v2507 = vld [vmem:[#allocation2 + $0x1d8] sm:$0xff]
        %v2508 = vld [vmem:[#allocation2 + $0x1e0] sm:$0xff]
        %v2509 = vld [vmem:[#allocation2 + $0x1e8] sm:$0xff]
        %v2510 = vld [vmem:[#allocation2 + $0x1f0] sm:$0xff]
        %v2511 = vld [vmem:[#allocation2 + $0x1f8] sm:$0xff]
        %v2512 = vld [vmem:[#allocation2 + $0x200] sm:$0xff]
        %v2513 = vld [vmem:[#allocation2 + $0x208] sm:$0xff]
        %v2514 = vld [vmem:[#allocation2 + $0x210] sm:$0xff]
        %v2515 = vld [vmem:[#allocation2 + $0x218] sm:$0xff]
        %v2516 = vld [vmem:[#allocation2 + $0x220] sm:$0xff]
        %v2517 = vld [vmem:[#allocation2 + $0x228] sm:$0xff]
        %v2518 = vld [vmem:[#allocation2 + $0x230] sm:$0xff]
        %v2519 = vld [vmem:[#allocation2 + $0x238] sm:$0xff]
        %v2520 = vld [vmem:[#allocation2 + $0x240] sm:$0xff]
        %v2521 = vld [vmem:[#allocation2 + $0x248] sm:$0xff]
        %v2522 = vld [vmem:[#allocation2 + $0x250] sm:$0xff]
        %v2523 = vld [vmem:[#allocation2 + $0x258] sm:$0xff]
        %v2524 = vld [vmem:[#allocation2 + $0x260] sm:$0xff]
        %v2525 = vld [vmem:[#allocation2 + $0x268] sm:$0xff]
        %v2526 = vld [vmem:[#allocation2 + $0x270] sm:$0xff]
        %v2527 = vld [vmem:[#allocation2 + $0x278] sm:$0xff]
        %v2528 = vld [vmem:[#allocation2 + $0x280] sm:$0xff]
        %v2529 = vld [vmem:[#allocation2 + $0x288] sm:$0xff]
        %v2530 = vld [vmem:[#allocation2 + $0x290] sm:$0xff]
        %v2531 = vld [vmem:[#allocation2 + $0x298] sm:$0xff]
        %v2532 = vld [vmem:[#allocation2 + $0x2a0] sm:$0xff]
        %v2533 = vld [vmem:[#allocation2 + $0x2a8] sm:$0xff]
        %v2534 = vld [vmem:[#allocation2 + $0x2b0] sm:$0xff]
        %v2535 = vld [vmem:[#allocation2 + $0x2b8] sm:$0xff]
        %v2536 = vld [vmem:[#allocation2 + $0x2c0] sm:$0xff]
        %v2537 = vld [vmem:[#allocation2 + $0x2c8] sm:$0xff]
        %v2538 = vld [vmem:[#allocation2 + $0x2d0] sm:$0xff]
        %v2539 = vld [vmem:[#allocation2 + $0x2d8] sm:$0xff]
        %v2540 = vld [vmem:[#allocation2 + $0x2e0] sm:$0xff]
        %v2541 = vld [vmem:[#allocation2 + $0x2e8] sm:$0xff]
        %v2542 = vld [vmem:[#allocation2 + $0x2f0] sm:$0xff]
        %v2543 = vld [vmem:[#allocation2 + $0x2f8] sm:$0xff]
        %v2544 = vld [vmem:[#allocation2 + $0x300] sm:$0xff]
        %v2545 = vld [vmem:[#allocation2 + $0x308] sm:$0xff]
        %v2546 = vld [vmem:[#allocation2 + $0x310] sm:$0xff]
        %v2547 = vld [vmem:[#allocation2 + $0x318] sm:$0xff]
        %v2548 = vld [vmem:[#allocation2 + $0x320] sm:$0xff]
        %v2549 = vld [vmem:[#allocation2 + $0x328] sm:$0xff]
        %v2550 = vld [vmem:[#allocation2 + $0x330] sm:$0xff]
        %v2551 = vld [vmem:[#allocation2 + $0x338] sm:$0xff]
        %v2552 = vld [vmem:[#allocation2 + $0x340] sm:$0xff]
        %v2553 = vld [vmem:[#allocation2 + $0x348] sm:$0xff]
        %v2554 = vld [vmem:[#allocation2 + $0x350] sm:$0xff]
        %v2555 = vld [vmem:[#allocation2 + $0x358] sm:$0xff]
        %v2556 = vld [vmem:[#allocation2 + $0x360] sm:$0xff]
        %v2557 = vld [vmem:[#allocation2 + $0x368] sm:$0xff]
        %v2558 = vld [vmem:[#allocation2 + $0x370] sm:$0xff]
        %v2559 = vld [vmem:[#allocation2 + $0x378] sm:$0xff]
        %v2560 = vld [vmem:[#allocation2 + $0x380] sm:$0xff]
        %v2561 = vld [vmem:[#allocation2 + $0x388] sm:$0xff]
        %v2562 = vld [vmem:[#allocation2 + $0x390] sm:$0xff]
        %v2563 = vld [vmem:[#allocation2 + $0x398] sm:$0xff]
        %v2564 = vld [vmem:[#allocation2 + $0x3a0] sm:$0xff]
        %v2565 = vld [vmem:[#allocation2 + $0x3a8] sm:$0xff]
        %v2566 = vld [vmem:[#allocation2 + $0x3b0] sm:$0xff]
        %v2567 = vld [vmem:[#allocation2 + $0x3b8] sm:$0xff]
        %v2568 = vld [vmem:[#allocation2 + $0x3c0] sm:$0xff]
        %v2569 = vld [vmem:[#allocation2 + $0x3c8] sm:$0xff]
        %v2570 = vld [vmem:[#allocation2 + $0x3d0] sm:$0xff]
        %v2571 = vld [vmem:[#allocation2 + $0x3d8] sm:$0xff]
        %v2572 = vld [vmem:[#allocation2 + $0x3e0] sm:$0xff]
        %v2573 = vld [vmem:[#allocation2 + $0x3e8] sm:$0xff]
        %v2574 = vld [vmem:[#allocation2 + $0x3f0] sm:$0xff]
        %v2575 = vld [vmem:[#allocation2 + $0x3f8] sm:$0xff]
        %v2576 = vld [vmem:[#allocation2 + $0x400] sm:$0xff]
        %v2577 = vld [vmem:[#allocation2 + $0x408] sm:$0xff]
        %v2578 = vld [vmem:[#allocation2 + $0x410] sm:$0xff]
        %v2579 = vld [vmem:[#allocation2 + $0x418] sm:$0xff]
        %v2580 = vld [vmem:[#allocation2 + $0x420] sm:$0xff]
        %v2581 = vld [vmem:[#allocation2 + $0x428] sm:$0xff]
        %v2582 = vld [vmem:[#allocation2 + $0x430] sm:$0xff]
        %v2583 = vld [vmem:[#allocation2 + $0x438] sm:$0xff]
        %v2584 = vld [vmem:[#allocation2 + $0x440] sm:$0xff]
        %v2585 = vld [vmem:[#allocation2 + $0x448] sm:$0xff]
        %v2586 = vld [vmem:[#allocation2 + $0x450] sm:$0xff]
        %v2587 = vld [vmem:[#allocation2 + $0x458] sm:$0xff]
        %v2588 = vld [vmem:[#allocation2 + $0x460] sm:$0xff]
        %v2589 = vld [vmem:[#allocation2 + $0x468] sm:$0xff]
        %v2590 = vld [vmem:[#allocation2 + $0x470] sm:$0xff]
        %v2591 = vld [vmem:[#allocation2 + $0x478] sm:$0xff]
        %v2592 = vld [vmem:[%s1] sm:$0xf]
        %v2593 = vld [vmem:[%s1 + $0x4] sm:$0xf]
        %v2594 = vld [vmem:[%s1 + $0x8] sm:$0xf]
        %v2595 = vld [vmem:[%s1 + $0xc] sm:$0xf]
        %v2596 = vld [vmem:[%s1 + $0x10] sm:$0xf]
        %v2597 = vld [vmem:[%s1 + $0x14] sm:$0xf]
        %v2598 = vld [vmem:[%s1 + $0x18] sm:$0xf]
        %v2599 = vld [vmem:[%s1 + $0x1c] sm:$0xf]
        %v2600 = vld [vmem:[%s1 + $0x20] sm:$0xf]
        %v2601 = vld [vmem:[%s1 + $0x24] sm:$0xf]
        %v2602 = vld [vmem:[%s1 + $0x28] sm:$0xf]
        %v2603 = vld [vmem:[%s1 + $0x2c] sm:$0xf]
        %v2604 = vld [vmem:[%s1 + $0x30] sm:$0xf]
        %v2605 = vld [vmem:[%s1 + $0x34] sm:$0xf]
        %v2606 = vld [vmem:[%s1 + $0x38] sm:$0xf]
        %v2607 = vld [vmem:[%s1 + $0x3c] sm:$0xf]
        %v2608 = vld [vmem:[%s1 + $0x40] sm:$0xf]
        %v2609 = vld [vmem:[%s1 + $0x44] sm:$0xf]
        %v2610 = vld [vmem:[%s1 + $0x48] sm:$0xf]
        %v2611 = vld [vmem:[%s1 + $0x4c] sm:$0xf]
        %v2612 = vld [vmem:[%s1 + $0x50] sm:$0xf]
        %v2613 = vld [vmem:[%s1 + $0x54] sm:$0xf]
        %v2614 = vld [vmem:[%s1 + $0x58] sm:$0xf]
        %v2615 = vld [vmem:[%s1 + $0x5c] sm:$0xf]
        %v2616 = vld [vmem:[%s1 + $0x60] sm:$0xf]
        %v2617 = vld [vmem:[%s1 + $0x64] sm:$0xf]
        %v2618 = vld [vmem:[%s1 + $0x68] sm:$0xf]
        %v2619 = vld [vmem:[%s1 + $0x6c] sm:$0xf]
        %v2620 = vld [vmem:[%s1 + $0x70] sm:$0xf]
        %v2621 = vld [vmem:[%s1 + $0x74] sm:$0xf]
        %v2622 = vld [vmem:[%s1 + $0x78] sm:$0xf]
        %v2623 = vld [vmem:[%s1 + $0x7c] sm:$0xf]
        %v2624 = vld [vmem:[%s1 + $0x80] sm:$0xf]
        %v2625 = vld [vmem:[%s1 + $0x84] sm:$0xf]
        %v2626 = vld [vmem:[%s1 + $0x88] sm:$0xf]
        %v2627 = vld [vmem:[%s1 + $0x8c] sm:$0xf]
        %v2628 = vld [vmem:[%s1 + $0x90] sm:$0xf]
        %v2629 = vld [vmem:[%s1 + $0x94] sm:$0xf]
        %v2630 = vld [vmem:[%s1 + $0x98] sm:$0xf]
        %v2631 = vld [vmem:[%s1 + $0x9c] sm:$0xf]
        %v2632 = vld [vmem:[%s1 + $0xa0] sm:$0xf]
        %v2633 = vld [vmem:[%s1 + $0xa4] sm:$0xf]
        %v2634 = vld [vmem:[%s1 + $0xa8] sm:$0xf]
        %v2635 = vld [vmem:[%s1 + $0xac] sm:$0xf]
        %v2636 = vld [vmem:[%s1 + $0xb0] sm:$0xf]
        %v2637 = vld [vmem:[%s1 + $0xb4] sm:$0xf]
        %v2638 = vld [vmem:[%s1 + $0xb8] sm:$0xf]
        %v2639 = vld [vmem:[%s1 + $0xbc] sm:$0xf]
        %v2640 = vld [vmem:[%s1 + $0xc0] sm:$0xf]
        %v2641 = vld [vmem:[%s1 + $0xc4] sm:$0xf]
        %v2642 = vld [vmem:[%s1 + $0xc8] sm:$0xf]
        %v2643 = vld [vmem:[%s1 + $0xcc] sm:$0xf]
        %v2644 = vld [vmem:[%s1 + $0xd0] sm:$0xf]
        %v2645 = vld [vmem:[%s1 + $0xd4] sm:$0xf]
        %v2646 = vld [vmem:[%s1 + $0xd8] sm:$0xf]
        %v2647 = vld [vmem:[%s1 + $0xdc] sm:$0xf]
        %v2648 = vld [vmem:[%s1 + $0xe0] sm:$0xf]
        %v2649 = vld [vmem:[%s1 + $0xe4] sm:$0xf]
        %v2650 = vld [vmem:[%s1 + $0xe8] sm:$0xf]
        %v2651 = vld [vmem:[%s1 + $0xec] sm:$0xf]
        %v2652 = vld [vmem:[%s1 + $0xf0] sm:$0xf]
        %v2653 = vld [vmem:[%s1 + $0xf4] sm:$0xf]
        %v2654 = vld [vmem:[%s1 + $0xf8] sm:$0xf]
        %v2655 = vld [vmem:[%s1 + $0xfc] sm:$0xf]
        %v2656 = vld [vmem:[%s1 + $0x100] sm:$0xf]
        %v2657 = vld [vmem:[%s1 + $0x104] sm:$0xf]
        %v2658 = vld [vmem:[%s1 + $0x108] sm:$0xf]
        %v2659 = vld [vmem:[%s1 + $0x10c] sm:$0xf]
        %v2660 = vld [vmem:[%s1 + $0x110] sm:$0xf]
        %v2661 = vld [vmem:[%s1 + $0x114] sm:$0xf]
        %v2662 = vld [vmem:[%s1 + $0x118] sm:$0xf]
        %v2663 = vld [vmem:[%s1 + $0x11c] sm:$0xf]
        %v2664 = vld [vmem:[%s1 + $0x120] sm:$0xf]
        %v2665 = vld [vmem:[%s1 + $0x124] sm:$0xf]
        %v2666 = vld [vmem:[%s1 + $0x128] sm:$0xf]
        %v2667 = vld [vmem:[%s1 + $0x12c] sm:$0xf]
        %v2668 = vld [vmem:[%s1 + $0x130] sm:$0xf]
        %v2669 = vld [vmem:[%s1 + $0x134] sm:$0xf]
        %v2670 = vld [vmem:[%s1 + $0x138] sm:$0xf]
        %v2671 = vld [vmem:[%s1 + $0x13c] sm:$0xf]
        %v2672 = vld [vmem:[%s1 + $0x140] sm:$0xf]
        %v2673 = vld [vmem:[%s1 + $0x144] sm:$0xf]
        %v2674 = vld [vmem:[%s1 + $0x148] sm:$0xf]
        %v2675 = vld [vmem:[%s1 + $0x14c] sm:$0xf]
        %v2676 = vld [vmem:[%s1 + $0x150] sm:$0xf]
        %v2677 = vld [vmem:[%s1 + $0x154] sm:$0xf]
        %v2678 = vld [vmem:[%s1 + $0x158] sm:$0xf]
        %v2679 = vld [vmem:[%s1 + $0x15c] sm:$0xf]
        %v2680 = vld [vmem:[%s1 + $0x160] sm:$0xf]
        %v2681 = vld [vmem:[%s1 + $0x164] sm:$0xf]
        %v2682 = vld [vmem:[%s1 + $0x168] sm:$0xf]
        %v2683 = vld [vmem:[%s1 + $0x16c] sm:$0xf]
        %v2684 = vld [vmem:[%s1 + $0x170] sm:$0xf]
        %v2685 = vld [vmem:[%s1 + $0x174] sm:$0xf]
        %v2686 = vld [vmem:[%s1 + $0x178] sm:$0xf]
        %v2687 = vld [vmem:[%s1 + $0x17c] sm:$0xf]
        %v2688 = vld [vmem:[%s1 + $0x180] sm:$0xf]
        %v2689 = vld [vmem:[%s1 + $0x184] sm:$0xf]
        %v2690 = vld [vmem:[%s1 + $0x188] sm:$0xf]
        %v2691 = vld [vmem:[%s1 + $0x18c] sm:$0xf]
        %v2692 = vld [vmem:[%s1 + $0x190] sm:$0xf]
        %v2693 = vld [vmem:[%s1 + $0x194] sm:$0xf]
        %v2694 = vld [vmem:[%s1 + $0x198] sm:$0xf]
        %v2695 = vld [vmem:[%s1 + $0x19c] sm:$0xf]
        %v2696 = vld [vmem:[%s1 + $0x1a0] sm:$0xf]
        %v2697 = vld [vmem:[%s1 + $0x1a4] sm:$0xf]
        %v2698 = vld [vmem:[%s1 + $0x1a8] sm:$0xf]
        %v2699 = vld [vmem:[%s1 + $0x1ac] sm:$0xf]
        %v2700 = vld [vmem:[%s1 + $0x1b0] sm:$0xf]
        %v2701 = vld [vmem:[%s1 + $0x1b4] sm:$0xf]
        %v2702 = vld [vmem:[%s1 + $0x1b8] sm:$0xf]
        %v2703 = vld [vmem:[%s1 + $0x1bc] sm:$0xf]
        %v2704 = vld [vmem:[%s1 + $0x1c0] sm:$0xf]
        %v2705 = vld [vmem:[%s1 + $0x1c4] sm:$0xf]
        %v2706 = vld [vmem:[%s1 + $0x1c8] sm:$0xf]
        %v2707 = vld [vmem:[%s1 + $0x1cc] sm:$0xf]
        %v2708 = vld [vmem:[%s1 + $0x1d0] sm:$0xf]
        %v2709 = vld [vmem:[%s1 + $0x1d4] sm:$0xf]
        %v2710 = vld [vmem:[%s1 + $0x1d8] sm:$0xf]
        %v2711 = vld [vmem:[%s1 + $0x1dc] sm:$0xf]
        %v2712 = vld [vmem:[%s1 + $0x1e0] sm:$0xf]
        %v2713 = vld [vmem:[%s1 + $0x1e4] sm:$0xf]
        %v2714 = vld [vmem:[%s1 + $0x1e8] sm:$0xf]
        %v2715 = vld [vmem:[%s1 + $0x1ec] sm:$0xf]
        %v2716 = vld [vmem:[%s1 + $0x1f0] sm:$0xf]
        %v2717 = vld [vmem:[%s1 + $0x1f4] sm:$0xf]
        %v2718 = vld [vmem:[%s1 + $0x1f8] sm:$0xf]
        %v2719 = vld [vmem:[%s1 + $0x1fc] sm:$0xf]
        %v2720 = vld [vmem:[%s1 + $0x200] sm:$0xf]
        %v2721 = vld [vmem:[%s1 + $0x204] sm:$0xf]
        %v2722 = vld [vmem:[%s1 + $0x208] sm:$0xf]
        %v2723 = vld [vmem:[%s1 + $0x20c] sm:$0xf]
        %v2724 = vld [vmem:[%s1 + $0x210] sm:$0xf]
        %v2725 = vld [vmem:[%s1 + $0x214] sm:$0xf]
        %v2726 = vld [vmem:[%s1 + $0x218] sm:$0xf]
        %v2727 = vld [vmem:[%s1 + $0x21c] sm:$0xf]
        %v2728 = vld [vmem:[%s1 + $0x220] sm:$0xf]
        %v2729 = vld [vmem:[%s1 + $0x224] sm:$0xf]
        %v2730 = vld [vmem:[%s1 + $0x228] sm:$0xf]
        %v2731 = vld [vmem:[%s1 + $0x22c] sm:$0xf]
        %v2732 = vld [vmem:[%s1 + $0x230] sm:$0xf]
        %v2733 = vld [vmem:[%s1 + $0x234] sm:$0xf]
        %v2734 = vld [vmem:[%s1 + $0x238] sm:$0xf]
        %v2735 = vld [vmem:[%s1 + $0x23c] sm:$0xf]
        %v2880 = vunpack.c.l.b16 %v2592
        %v2881 = vunpack.c.l.b16 %v2593
        %v2882 = vunpack.c.l.b16 %v2594
        %v2883 = vunpack.c.l.b16 %v2595
        %v2884 = vunpack.c.l.b16 %v2596
        %v2885 = vunpack.c.l.b16 %v2597
        %v2886 = vunpack.c.l.b16 %v2598
        %v2887 = vunpack.c.l.b16 %v2599
        %v2888 = vunpack.c.l.b16 %v2600
        %v2889 = vunpack.c.l.b16 %v2601
        %v2890 = vunpack.c.l.b16 %v2602
        %v2891 = vunpack.c.l.b16 %v2603
        %v2892 = vunpack.c.l.b16 %v2604
        %v2893 = vunpack.c.l.b16 %v2605
        %v2894 = vunpack.c.l.b16 %v2606
        %v2895 = vunpack.c.l.b16 %v2607
        %v2896 = vunpack.c.l.b16 %v2608
        %v2897 = vunpack.c.l.b16 %v2609
        %v2898 = vunpack.c.l.b16 %v2610
        %v2899 = vunpack.c.l.b16 %v2611
        %v2900 = vunpack.c.l.b16 %v2612
        %v2901 = vunpack.c.l.b16 %v2613
        %v2902 = vunpack.c.l.b16 %v2614
        %v2903 = vunpack.c.l.b16 %v2615
        %v2904 = vunpack.c.l.b16 %v2616
        %v2905 = vunpack.c.l.b16 %v2617
        %v2906 = vunpack.c.l.b16 %v2618
        %v2907 = vunpack.c.l.b16 %v2619
        %v2908 = vunpack.c.l.b16 %v2620
        %v2909 = vunpack.c.l.b16 %v2621
        %v2910 = vunpack.c.l.b16 %v2622
        %v2911 = vunpack.c.l.b16 %v2623
        %v2912 = vunpack.c.l.b16 %v2624
        %v2913 = vunpack.c.l.b16 %v2625
        %v2914 = vunpack.c.l.b16 %v2626
        %v2915 = vunpack.c.l.b16 %v2627
        %v2916 = vunpack.c.l.b16 %v2628
        %v2917 = vunpack.c.l.b16 %v2629
        %v2918 = vunpack.c.l.b16 %v2630
        %v2919 = vunpack.c.l.b16 %v2631
        %v2920 = vunpack.c.l.b16 %v2632
        %v2921 = vunpack.c.l.b16 %v2633
        %v2922 = vunpack.c.l.b16 %v2634
        %v2923 = vunpack.c.l.b16 %v2635
        %v2924 = vunpack.c.l.b16 %v2636
        %v2925 = vunpack.c.l.b16 %v2637
        %v2926 = vunpack.c.l.b16 %v2638
        %v2927 = vunpack.c.l.b16 %v2639
        %v2928 = vunpack.c.l.b16 %v2640
        %v2929 = vunpack.c.l.b16 %v2641
        %v2930 = vunpack.c.l.b16 %v2642
        %v2931 = vunpack.c.l.b16 %v2643
        %v2932 = vunpack.c.l.b16 %v2644
        %v2933 = vunpack.c.l.b16 %v2645
        %v2934 = vunpack.c.l.b16 %v2646
        %v2935 = vunpack.c.l.b16 %v2647
        %v2936 = vunpack.c.l.b16 %v2648
        %v2937 = vunpack.c.l.b16 %v2649
        %v2938 = vunpack.c.l.b16 %v2650
        %v2939 = vunpack.c.l.b16 %v2651
        %v2940 = vunpack.c.l.b16 %v2652
        %v2941 = vunpack.c.l.b16 %v2653
        %v2942 = vunpack.c.l.b16 %v2654
        %v2943 = vunpack.c.l.b16 %v2655
        %v2944 = vunpack.c.l.b16 %v2656
        %v2945 = vunpack.c.l.b16 %v2657
        %v2946 = vunpack.c.l.b16 %v2658
        %v2947 = vunpack.c.l.b16 %v2659
        %v2948 = vunpack.c.l.b16 %v2660
        %v2949 = vunpack.c.l.b16 %v2661
        %v2950 = vunpack.c.l.b16 %v2662
        %v2951 = vunpack.c.l.b16 %v2663
        %v2952 = vunpack.c.l.b16 %v2664
        %v2953 = vunpack.c.l.b16 %v2665
        %v2954 = vunpack.c.l.b16 %v2666
        %v2955 = vunpack.c.l.b16 %v2667
        %v2956 = vunpack.c.l.b16 %v2668
        %v2957 = vunpack.c.l.b16 %v2669
        %v2958 = vunpack.c.l.b16 %v2670
        %v2959 = vunpack.c.l.b16 %v2671
        %v2960 = vunpack.c.l.b16 %v2672
        %v2961 = vunpack.c.l.b16 %v2673
        %v2962 = vunpack.c.l.b16 %v2674
        %v2963 = vunpack.c.l.b16 %v2675
        %v2964 = vunpack.c.l.b16 %v2676
        %v2965 = vunpack.c.l.b16 %v2677
        %v2966 = vunpack.c.l.b16 %v2678
        %v2967 = vunpack.c.l.b16 %v2679
        %v2968 = vunpack.c.l.b16 %v2680
        %v2969 = vunpack.c.l.b16 %v2681
        %v2970 = vunpack.c.l.b16 %v2682
        %v2971 = vunpack.c.l.b16 %v2683
        %v2972 = vunpack.c.l.b16 %v2684
        %v2973 = vunpack.c.l.b16 %v2685
        %v2974 = vunpack.c.l.b16 %v2686
        %v2975 = vunpack.c.l.b16 %v2687
        %v2976 = vunpack.c.l.b16 %v2688
        %v2977 = vunpack.c.l.b16 %v2689
        %v2978 = vunpack.c.l.b16 %v2690
        %v2979 = vunpack.c.l.b16 %v2691
        %v2980 = vunpack.c.l.b16 %v2692
        %v2981 = vunpack.c.l.b16 %v2693
        %v2982 = vunpack.c.l.b16 %v2694
        %v2983 = vunpack.c.l.b16 %v2695
        %v2984 = vunpack.c.l.b16 %v2696
        %v2985 = vunpack.c.l.b16 %v2697
        %v2986 = vunpack.c.l.b16 %v2698
        %v2987 = vunpack.c.l.b16 %v2699
        %v2988 = vunpack.c.l.b16 %v2700
        %v2989 = vunpack.c.l.b16 %v2701
        %v2990 = vunpack.c.l.b16 %v2702
        %v2991 = vunpack.c.l.b16 %v2703
        %v2992 = vunpack.c.l.b16 %v2704
        %v2993 = vunpack.c.l.b16 %v2705
        %v2994 = vunpack.c.l.b16 %v2706
        %v2995 = vunpack.c.l.b16 %v2707
        %v2996 = vunpack.c.l.b16 %v2708
        %v2997 = vunpack.c.l.b16 %v2709
        %v2998 = vunpack.c.l.b16 %v2710
        %v2999 = vunpack.c.l.b16 %v2711
        %v3000 = vunpack.c.l.b16 %v2712
        %v3001 = vunpack.c.l.b16 %v2713
        %v3002 = vunpack.c.l.b16 %v2714
        %v3003 = vunpack.c.l.b16 %v2715
        %v3004 = vunpack.c.l.b16 %v2716
        %v3005 = vunpack.c.l.b16 %v2717
        %v3006 = vunpack.c.l.b16 %v2718
        %v3007 = vunpack.c.l.b16 %v2719
        %v3008 = vunpack.c.l.b16 %v2720
        %v3009 = vunpack.c.l.b16 %v2721
        %v3010 = vunpack.c.l.b16 %v2722
        %v3011 = vunpack.c.l.b16 %v2723
        %v3012 = vunpack.c.l.b16 %v2724
        %v3013 = vunpack.c.l.b16 %v2725
        %v3014 = vunpack.c.l.b16 %v2726
        %v3015 = vunpack.c.l.b16 %v2727
        %v3016 = vunpack.c.l.b16 %v2728
        %v3017 = vunpack.c.l.b16 %v2729
        %v3018 = vunpack.c.l.b16 %v2730
        %v3019 = vunpack.c.l.b16 %v2731
        %v3020 = vunpack.c.l.b16 %v2732
        %v3021 = vunpack.c.l.b16 %v2733
        %v3022 = vunpack.c.l.b16 %v2734
        %v3023 = vunpack.c.l.b16 %v2735
        %v3024 = vpack.c.b16 %v2881, %v2880
        %v3025 = vpack.c.b16 %v2883, %v2882
        %v3026 = vpack.c.b16 %v2885, %v2884
        %v3027 = vpack.c.b16 %v2887, %v2886
        %v3028 = vpack.c.b16 %v2889, %v2888
        %v3029 = vpack.c.b16 %v2891, %v2890
        %v3030 = vpack.c.b16 %v2893, %v2892
        %v3031 = vpack.c.b16 %v2895, %v2894
        %v3032 = vpack.c.b16 %v2897, %v2896
        %v3033 = vpack.c.b16 %v2899, %v2898
        %v3034 = vpack.c.b16 %v2901, %v2900
        %v3035 = vpack.c.b16 %v2903, %v2902
        %v3036 = vpack.c.b16 %v2905, %v2904
        %v3037 = vpack.c.b16 %v2907, %v2906
        %v3038 = vpack.c.b16 %v2909, %v2908
        %v3039 = vpack.c.b16 %v2911, %v2910
        %v3040 = vpack.c.b16 %v2913, %v2912
        %v3041 = vpack.c.b16 %v2915, %v2914
        %v3042 = vpack.c.b16 %v2917, %v2916
        %v3043 = vpack.c.b16 %v2919, %v2918
        %v3044 = vpack.c.b16 %v2921, %v2920
        %v3045 = vpack.c.b16 %v2923, %v2922
        %v3046 = vpack.c.b16 %v2925, %v2924
        %v3047 = vpack.c.b16 %v2927, %v2926
        %v3048 = vpack.c.b16 %v2929, %v2928
        %v3049 = vpack.c.b16 %v2931, %v2930
        %v3050 = vpack.c.b16 %v2933, %v2932
        %v3051 = vpack.c.b16 %v2935, %v2934
        %v3052 = vpack.c.b16 %v2937, %v2936
        %v3053 = vpack.c.b16 %v2939, %v2938
        %v3054 = vpack.c.b16 %v2941, %v2940
        %v3055 = vpack.c.b16 %v2943, %v2942
        %v3056 = vpack.c.b16 %v2945, %v2944
        %v3057 = vpack.c.b16 %v2947, %v2946
        %v3058 = vpack.c.b16 %v2949, %v2948
        %v3059 = vpack.c.b16 %v2951, %v2950
        %v3060 = vpack.c.b16 %v2953, %v2952
        %v3061 = vpack.c.b16 %v2955, %v2954
        %v3062 = vpack.c.b16 %v2957, %v2956
        %v3063 = vpack.c.b16 %v2959, %v2958
        %v3064 = vpack.c.b16 %v2961, %v2960
        %v3065 = vpack.c.b16 %v2963, %v2962
        %v3066 = vpack.c.b16 %v2965, %v2964
        %v3067 = vpack.c.b16 %v2967, %v2966
        %v3068 = vpack.c.b16 %v2969, %v2968
        %v3069 = vpack.c.b16 %v2971, %v2970
        %v3070 = vpack.c.b16 %v2973, %v2972
        %v3071 = vpack.c.b16 %v2975, %v2974
        %v3072 = vpack.c.b16 %v2977, %v2976
        %v3073 = vpack.c.b16 %v2979, %v2978
        %v3074 = vpack.c.b16 %v2981, %v2980
        %v3075 = vpack.c.b16 %v2983, %v2982
        %v3076 = vpack.c.b16 %v2985, %v2984
        %v3077 = vpack.c.b16 %v2987, %v2986
        %v3078 = vpack.c.b16 %v2989, %v2988
        %v3079 = vpack.c.b16 %v2991, %v2990
        %v3080 = vpack.c.b16 %v2993, %v2992
        %v3081 = vpack.c.b16 %v2995, %v2994
        %v3082 = vpack.c.b16 %v2997, %v2996
        %v3083 = vpack.c.b16 %v2999, %v2998
        %v3084 = vpack.c.b16 %v3001, %v3000
        %v3085 = vpack.c.b16 %v3003, %v3002
        %v3086 = vpack.c.b16 %v3005, %v3004
        %v3087 = vpack.c.b16 %v3007, %v3006
        %v3088 = vpack.c.b16 %v3009, %v3008
        %v3089 = vpack.c.b16 %v3011, %v3010
        %v3090 = vpack.c.b16 %v3013, %v3012
        %v3091 = vpack.c.b16 %v3015, %v3014
        %v3092 = vpack.c.b16 %v3017, %v3016
        %v3093 = vpack.c.b16 %v3019, %v3018
        %v3094 = vpack.c.b16 %v3021, %v3020
        %v3095 = vpack.c.b16 %v3023, %v3022
        %3168 = vmatprep.subr.bf16.mxu0 0
        %3169 = vmatpush1.bf16.msra.mxu0 %v3024
        %3170 = vmatprep.subr.bf16.mxu0 0
        %3171 = vmatpush1.bf16.msra.mxu0 %v3025
        %3172 = vmatprep.subr.bf16.mxu0 0
        %3173 = vmatpush1.bf16.msra.mxu0 %v3026
        %3174 = vmatprep.subr.bf16.mxu0 0
        %3175 = vmatpush1.bf16.msra.mxu0 %v3027
        %3176 = vmatprep.subr.bf16.mxu0 0
        %3177 = vmatpush1.bf16.msra.mxu0 %v3028
        %3178 = vmatprep.subr.bf16.mxu0 0
        %3179 = vmatpush1.bf16.msra.mxu0 %v3029
        %3180 = vmatprep.subr.bf16.mxu0 0
        %3181 = vmatpush1.bf16.msra.mxu0 %v3030
        %3182 = vmatprep.subr.bf16.mxu0 0
        %3183 = vmatpush1.bf16.msra.mxu0 %v3031
        %3184 = vmatprep.subr.bf16.mxu0 0
        %3185 = vmatpush1.bf16.msra.mxu0 %v3032
        %3186 = vmatprep.subr.bf16.mxu0 0
        %3187 = vmatpush1.bf16.msra.mxu0 %v3033
        %3188 = vmatprep.subr.bf16.mxu0 0
        %3189 = vmatpush1.bf16.msra.mxu0 %v3034
        %3190 = vmatprep.subr.bf16.mxu0 0
        %3191 = vmatpush1.bf16.msra.mxu0 %v3035
        %3192 = vmatprep.subr.bf16.mxu0 0
        %3193 = vmatpush1.bf16.msra.mxu0 %v3036
        %3194 = vmatprep.subr.bf16.mxu0 0
        %3195 = vmatpush1.bf16.msra.mxu0 %v3037
        %3196 = vmatprep.subr.bf16.mxu0 0
        %3197 = vmatpush1.bf16.msra.mxu0 %v3038
        %3198 = vmatprep.subr.bf16.mxu0 0
        %3199 = vmatpush1.bf16.msra.mxu0 %v3039
        %3200 = vmatprep.mubr.bf16.mxu0 %v2449
        %3201 = vmatmul.mubr.bf16.gmra.mrb[0].mxu0 %v2448
        %v3202 = vpop.f32.mrb[0].mxu0
        %v3203 = vadd.f32 0.0, %v3202
        %v3204 = vpop.f32.mrb[0].mxu0
        %v3205 = vpop.f32.mrb[0].mxu0
        %v3206 = vadd.f32 0.0, %v3205
        %v3207 = vpop.f32.mrb[0].mxu0
        %3208 = vmatprep.mubr.bf16.mxu0 %v2458
        %3209 = vmatmul.mubr.bf16.gmra.mrb[0].mxu0 %v2457
        %v3210 = vpop.f32.mrb[0].mxu0
        %v3211 = vadd.f32 0.0, %v3210
        %v3212 = vpop.f32.mrb[0].mxu0
        %v3213 = vpop.f32.mrb[0].mxu0
        %v3214 = vadd.f32 0.0, %v3213
        %v3215 = vpop.f32.mrb[0].mxu0
        %3216 = vmatprep.mubr.bf16.mxu0 %v2467
        %3217 = vmatmul.mubr.bf16.gmra.mrb[0].mxu0 %v2466
        %v3218 = vpop.f32.mrb[0].mxu0
        %v3219 = vadd.f32 0.0, %v3218
        %v3220 = vpop.f32.mrb[0].mxu0
        %v3221 = vpop.f32.mrb[0].mxu0
        %v3222 = vadd.f32 0.0, %v3221
        %v3223 = vpop.f32.mrb[0].mxu0
        %3224 = vmatprep.mubr.bf16.mxu0 %v2476
        %3225 = vmatmul.mubr.bf16.gmra.mrb[0].mxu0 %v2475
        %v3226 = vpop.f32.mrb[0].mxu0
        %v3227 = vadd.f32 0.0, %v3226
        %v3228 = vpop.f32.mrb[0].mxu0
        %v3229 = vpop.f32.mrb[0].mxu0
        %v3230 = vadd.f32 0.0, %v3229
        %v3231 = vpop.f32.mrb[0].mxu0
        %3232 = vmatprep.mubr.bf16.mxu0 %v2485
        %3233 = vmatmul.mubr.bf16.gmra.mrb[0].mxu0 %v2484
        %v3234 = vpop.f32.mrb[0].mxu0
        %v3235 = vadd.f32 0.0, %v3234
        %v3236 = vpop.f32.mrb[0].mxu0
        %v3237 = vpop.f32.mrb[0].mxu0
        %v3238 = vadd.f32 0.0, %v3237
        %v3239 = vpop.f32.mrb[0].mxu0
        %3240 = vmatprep.mubr.bf16.mxu0 %v2494
        %3241 = vmatmul.mubr.bf16.gmra.mrb[0].mxu0 %v2493
        %v3242 = vpop.f32.mrb[0].mxu0
        %v3243 = vadd.f32 0.0, %v3242
        %v3244 = vpop.f32.mrb[0].mxu0
        %v3245 = vpop.f32.mrb[0].mxu0
        %v3246 = vadd.f32 0.0, %v3245
        %v3247 = vpop.f32.mrb[0].mxu0
        %3248 = vmatprep.mubr.bf16.mxu0 %v2503
        %3249 = vmatmul.mubr.bf16.gmra.mrb[0].mxu0 %v2502
        %v3250 = vpop.f32.mrb[0].mxu0
        %v3251 = vadd.f32 0.0, %v3250
        %v3252 = vpop.f32.mrb[0].mxu0
        %v3253 = vpop.f32.mrb[0].mxu0
        %v3254 = vadd.f32 0.0, %v3253
        %v3255 = vpop.f32.mrb[0].mxu0
        %3256 = vmatprep.mubr.bf16.mxu0 %v2512
        %3257 = vmatmul.mubr.bf16.gmra.mrb[0].mxu0 %v2511
        %v3258 = vpop.f32.mrb[0].mxu0
        %v3259 = vadd.f32 0.0, %v3258
        %v3260 = vpop.f32.mrb[0].mxu0
        %v3261 = vpop.f32.mrb[0].mxu0
        %v3262 = vadd.f32 0.0, %v3261
        %v3263 = vpop.f32.mrb[0].mxu0
        %3264 = vmatprep.mubr.bf16.mxu0 %v2521
        %3265 = vmatmul.mubr.bf16.gmra.mrb[0].mxu0 %v2520
        %v3266 = vpop.f32.mrb[0].mxu0
        %v3267 = vadd.f32 0.0, %v3266
        %v3268 = vpop.f32.mrb[0].mxu0
        %v3269 = vpop.f32.mrb[0].mxu0
        %v3270 = vadd.f32 0.0, %v3269
        %v3271 = vpop.f32.mrb[0].mxu0
        %3272 = vmatprep.mubr.bf16.mxu0 %v2530
        %3273 = vmatmul.mubr.bf16.gmra.mrb[0].mxu0 %v2529
        %v3274 = vpop.f32.mrb[0].mxu0
        %v3275 = vadd.f32 0.0, %v3274
        %v3276 = vpop.f32.mrb[0].mxu0
        %v3277 = vpop.f32.mrb[0].mxu0
        %v3278 = vadd.f32 0.0, %v3277
        %v3279 = vpop.f32.mrb[0].mxu0
        %3280 = vmatprep.mubr.bf16.mxu0 %v2539
        %3281 = vmatmul.mubr.bf16.gmra.mrb[0].mxu0 %v2538
        %v3282 = vpop.f32.mrb[0].mxu0
        %v3283 = vadd.f32 0.0, %v3282
        %v3284 = vpop.f32.mrb[0].mxu0
        %v3285 = vpop.f32.mrb[0].mxu0
        %v3286 = vadd.f32 0.0, %v3285
        %v3287 = vpop.f32.mrb[0].mxu0
        %3288 = vmatprep.mubr.bf16.mxu0 %v2548
        %3289 = vmatmul.mubr.bf16.gmra.mrb[0].mxu0 %v2547
        %v3290 = vpop.f32.mrb[0].mxu0
        %v3291 = vadd.f32 0.0, %v3290
        %v3292 = vpop.f32.mrb[0].mxu0
        %v3293 = vpop.f32.mrb[0].mxu0
        %v3294 = vadd.f32 0.0, %v3293
        %v3295 = vpop.f32.mrb[0].mxu0
        %3296 = vmatprep.mubr.bf16.mxu0 %v2557
        %3297 = vmatmul.mubr.bf16.gmra.mrb[0].mxu0 %v2556
        %v3298 = vpop.f32.mrb[0].mxu0
        %v3299 = vadd.f32 0.0, %v3298
        %v3300 = vpop.f32.mrb[0].mxu0
        %v3301 = vpop.f32.mrb[0].mxu0
        %v3302 = vadd.f32 0.0, %v3301
        %v3303 = vpop.f32.mrb[0].mxu0
        %3304 = vmatprep.mubr.bf16.mxu0 %v2566
        %3305 = vmatmul.mubr.bf16.gmra.mrb[0].mxu0 %v2565
        %v3306 = vpop.f32.mrb[0].mxu0
        %v3307 = vadd.f32 0.0, %v3306
        %v3308 = vpop.f32.mrb[0].mxu0
        %v3309 = vpop.f32.mrb[0].mxu0
        %v3310 = vadd.f32 0.0, %v3309
        %v3311 = vpop.f32.mrb[0].mxu0
        %3312 = vmatprep.mubr.bf16.mxu0 %v2575
        %3313 = vmatmul.mubr.bf16.gmra.mrb[0].mxu0 %v2574
        %v3314 = vpop.f32.mrb[0].mxu0
        %v3315 = vadd.f32 0.0, %v3314
        %v3316 = vpop.f32.mrb[0].mxu0
        %v3317 = vpop.f32.mrb[0].mxu0
        %v3318 = vadd.f32 0.0, %v3317
        %v3319 = vpop.f32.mrb[0].mxu0
        %3320 = vmatprep.mubr.bf16.mxu0 %v2584
        %3321 = vmatmul.mubr.bf16.gmra.mrb[0].mxu0 %v2583
        %v3322 = vpop.f32.mrb[0].mxu0
        %v3323 = vadd.f32 0.0, %v3322
        %v3324 = vpop.f32.mrb[0].mxu0
        %v3325 = vpop.f32.mrb[0].mxu0
        %v3326 = vadd.f32 0.0, %v3325
        %v3327 = vpop.f32.mrb[0].mxu0
        %3328 = vdwg.mxu0
        %3329 = vmatprep.subr.bf16.mxu0 0
        %3330 = vmatpush1.bf16.msra.mxu0 %v3040
        %3331 = vmatprep.subr.bf16.mxu0 0
        %3332 = vmatpush1.bf16.msra.mxu0 %v3041
        %3333 = vmatprep.subr.bf16.mxu0 0
        %3334 = vmatpush1.bf16.msra.mxu0 %v3042
        %3335 = vmatprep.subr.bf16.mxu0 0
        %3336 = vmatpush1.bf16.msra.mxu0 %v3043
        %3337 = vmatprep.subr.bf16.mxu0 0
        %3338 = vmatpush1.bf16.msra.mxu0 %v3044
        %3339 = vmatprep.subr.bf16.mxu0 0
        %3340 = vmatpush1.bf16.msra.mxu0 %v3045
        %3341 = vmatprep.subr.bf16.mxu0 0
        %3342 = vmatpush1.bf16.msra.mxu0 %v3046
        %3343 = vmatprep.subr.bf16.mxu0 0
        %3344 = vmatpush1.bf16.msra.mxu0 %v3047
        %3345 = vmatprep.subr.bf16.mxu0 0
        %3346 = vmatpush1.bf16.msra.mxu0 %v3048
        %3347 = vmatprep.subr.bf16.mxu0 0
        %3348 = vmatpush1.bf16.msra.mxu0 %v3049
        %3349 = vmatprep.subr.bf16.mxu0 0
        %3350 = vmatpush1.bf16.msra.mxu0 %v3050
        %3351 = vmatprep.subr.bf16.mxu0 0
        %3352 = vmatpush1.bf16.msra.mxu0 %v3051
        %3353 = vmatprep.subr.bf16.mxu0 0
        %3354 = vmatpush1.bf16.msra.mxu0 %v3052
        %3355 = vmatprep.subr.bf16.mxu0 0
        %3356 = vmatpush1.bf16.msra.mxu0 %v3053
        %3357 = vmatprep.subr.bf16.mxu0 0
        %3358 = vmatpush1.bf16.msra.mxu0 %v3054
        %3359 = vmatprep.subr.bf16.mxu0 0
        %3360 = vmatpush1.bf16.msra.mxu0 %v3055
        %3361 = vmatprep.mubr.bf16.mxu0 %v2451
        %3362 = vmatmul.mubr.bf16.gmra.mrb[0].mxu0 %v2450
        %v3363 = vpop.f32.mrb[0].mxu0
        %v3364 = vadd.f32 %v3203, %v3363
        %v3365 = vpop.f32.mrb[0].mxu0
        %v3366 = vpop.f32.mrb[0].mxu0
        %v3367 = vadd.f32 %v3206, %v3366
        %v3368 = vpop.f32.mrb[0].mxu0
        %3369 = vmatprep.mubr.bf16.mxu0 %v2460
        %3370 = vmatmul.mubr.bf16.gmra.mrb[0].mxu0 %v2459
        %v3371 = vpop.f32.mrb[0].mxu0
        %v3372 = vadd.f32 %v3211, %v3371
        %v3373 = vpop.f32.mrb[0].mxu0
        %v3374 = vpop.f32.mrb[0].mxu0
        %v3375 = vadd.f32 %v3214, %v3374
        %v3376 = vpop.f32.mrb[0].mxu0
        %3377 = vmatprep.mubr.bf16.mxu0 %v2469
        %3378 = vmatmul.mubr.bf16.gmra.mrb[0].mxu0 %v2468
        %v3379 = vpop.f32.mrb[0].mxu0
        %v3380 = vadd.f32 %v3219, %v3379
        %v3381 = vpop.f32.mrb[0].mxu0
        %v3382 = vpop.f32.mrb[0].mxu0
        %v3383 = vadd.f32 %v3222, %v3382
        %v3384 = vpop.f32.mrb[0].mxu0
        %3385 = vmatprep.mubr.bf16.mxu0 %v2478
        %3386 = vmatmul.mubr.bf16.gmra.mrb[0].mxu0 %v2477
        %v3387 = vpop.f32.mrb[0].mxu0
        %v3388 = vadd.f32 %v3227, %v3387
        %v3389 = vpop.f32.mrb[0].mxu0
        %v3390 = vpop.f32.mrb[0].mxu0
        %v3391 = vadd.f32 %v3230, %v3390
        %v3392 = vpop.f32.mrb[0].mxu0
        %3393 = vmatprep.mubr.bf16.mxu0 %v2487
        %3394 = vmatmul.mubr.bf16.gmra.mrb[0].mxu0 %v2486
        %v3395 = vpop.f32.mrb[0].mxu0
        %v3396 = vadd.f32 %v3235, %v3395
        %v3397 = vpop.f32.mrb[0].mxu0
        %v3398 = vpop.f32.mrb[0].mxu0
        %v3399 = vadd.f32 %v3238, %v3398
        %v3400 = vpop.f32.mrb[0].mxu0
        %3401 = vmatprep.mubr.bf16.mxu0 %v2496
        %3402 = vmatmul.mubr.bf16.gmra.mrb[0].mxu0 %v2495
        %v3403 = vpop.f32.mrb[0].mxu0
        %v3404 = vadd.f32 %v3243, %v3403
        %v3405 = vpop.f32.mrb[0].mxu0
        %v3406 = vpop.f32.mrb[0].mxu0
        %v3407 = vadd.f32 %v3246, %v3406
        %v3408 = vpop.f32.mrb[0].mxu0
        %3409 = vmatprep.mubr.bf16.mxu0 %v2505
        %3410 = vmatmul.mubr.bf16.gmra.mrb[0].mxu0 %v2504
        %v3411 = vpop.f32.mrb[0].mxu0
        %v3412 = vadd.f32 %v3251, %v3411
        %v3413 = vpop.f32.mrb[0].mxu0
        %v3414 = vpop.f32.mrb[0].mxu0
        %v3415 = vadd.f32 %v3254, %v3414
        %v3416 = vpop.f32.mrb[0].mxu0
        %3417 = vmatprep.mubr.bf16.mxu0 %v2514
        %3418 = vmatmul.mubr.bf16.gmra.mrb[0].mxu0 %v2513
        %v3419 = vpop.f32.mrb[0].mxu0
        %v3420 = vadd.f32 %v3259, %v3419
        %v3421 = vpop.f32.mrb[0].mxu0
        %v3422 = vpop.f32.mrb[0].mxu0
        %v3423 = vadd.f32 %v3262, %v3422
        %v3424 = vpop.f32.mrb[0].mxu0
        %3425 = vmatprep.mubr.bf16.mxu0 %v2523
        %3426 = vmatmul.mubr.bf16.gmra.mrb[0].mxu0 %v2522
        %v3427 = vpop.f32.mrb[0].mxu0
        %v3428 = vadd.f32 %v3267, %v3427
        %v3429 = vpop.f32.mrb[0].mxu0
        %v3430 = vpop.f32.mrb[0].mxu0
        %v3431 = vadd.f32 %v3270, %v3430
        %v3432 = vpop.f32.mrb[0].mxu0
        %3433 = vmatprep.mubr.bf16.mxu0 %v2532
        %3434 = vmatmul.mubr.bf16.gmra.mrb[0].mxu0 %v2531
        %v3435 = vpop.f32.mrb[0].mxu0
        %v3436 = vadd.f32 %v3275, %v3435
        %v3437 = vpop.f32.mrb[0].mxu0
        %v3438 = vpop.f32.mrb[0].mxu0
        %v3439 = vadd.f32 %v3278, %v3438
        %v3440 = vpop.f32.mrb[0].mxu0
        %3441 = vmatprep.mubr.bf16.mxu0 %v2541
        %3442 = vmatmul.mubr.bf16.gmra.mrb[0].mxu0 %v2540
        %v3443 = vpop.f32.mrb[0].mxu0
        %v3444 = vadd.f32 %v3283, %v3443
        %v3445 = vpop.f32.mrb[0].mxu0
        %v3446 = vpop.f32.mrb[0].mxu0
        %v3447 = vadd.f32 %v3286, %v3446
        %v3448 = vpop.f32.mrb[0].mxu0
        %3449 = vmatprep.mubr.bf16.mxu0 %v2550
        %3450 = vmatmul.mubr.bf16.gmra.mrb[0].mxu0 %v2549
        %v3451 = vpop.f32.mrb[0].mxu0
        %v3452 = vadd.f32 %v3291, %v3451
        %v3453 = vpop.f32.mrb[0].mxu0
        %v3454 = vpop.f32.mrb[0].mxu0
        %v3455 = vadd.f32 %v3294, %v3454
        %v3456 = vpop.f32.mrb[0].mxu0
        %3457 = vmatprep.mubr.bf16.mxu0 %v2559
        %3458 = vmatmul.mubr.bf16.gmra.mrb[0].mxu0 %v2558
        %v3459 = vpop.f32.mrb[0].mxu0
        %v3460 = vadd.f32 %v3299, %v3459
        %v3461 = vpop.f32.mrb[0].mxu0
        %v3462 = vpop.f32.mrb[0].mxu0
        %v3463 = vadd.f32 %v3302, %v3462
        %v3464 = vpop.f32.mrb[0].mxu0
        %3465 = vmatprep.mubr.bf16.mxu0 %v2568
        %3466 = vmatmul.mubr.bf16.gmra.mrb[0].mxu0 %v2567
        %v3467 = vpop.f32.mrb[0].mxu0
        %v3468 = vadd.f32 %v3307, %v3467
        %v3469 = vpop.f32.mrb[0].mxu0
        %v3470 = vpop.f32.mrb[0].mxu0
        %v3471 = vadd.f32 %v3310, %v3470
        %v3472 = vpop.f32.mrb[0].mxu0
        %3473 = vmatprep.mubr.bf16.mxu0 %v2577
        %3474 = vmatmul.mubr.bf16.gmra.mrb[0].mxu0 %v2576
        %v3475 = vpop.f32.mrb[0].mxu0
        %v3476 = vadd.f32 %v3315, %v3475
        %v3477 = vpop.f32.mrb[0].mxu0
        %v3478 = vpop.f32.mrb[0].mxu0
        %v3479 = vadd.f32 %v3318, %v3478
        %v3480 = vpop.f32.mrb[0].mxu0
        %3481 = vmatprep.mubr.bf16.mxu0 %v2586
        %3482 = vmatmul.mubr.bf16.gmra.mrb[0].mxu0 %v2585
        %v3483 = vpop.f32.mrb[0].mxu0
        %v3484 = vadd.f32 %v3323, %v3483
        %v3485 = vpop.f32.mrb[0].mxu0
        %v3486 = vpop.f32.mrb[0].mxu0
        %v3487 = vadd.f32 %v3326, %v3486
        %v3488 = vpop.f32.mrb[0].mxu0
        %3489 = vdwg.mxu0
        %3490 = vmatprep.subr.bf16.mxu0 0
        %3491 = vmatpush1.bf16.msra.mxu0 %v3056
        %3492 = vmatprep.subr.bf16.mxu0 0
        %3493 = vmatpush1.bf16.msra.mxu0 %v3057
        %3494 = vmatprep.subr.bf16.mxu0 0
        %3495 = vmatpush1.bf16.msra.mxu0 %v3058
        %3496 = vmatprep.subr.bf16.mxu0 0
        %3497 = vmatpush1.bf16.msra.mxu0 %v3059
        %3498 = vmatprep.subr.bf16.mxu0 0
        %3499 = vmatpush1.bf16.msra.mxu0 %v3060
        %3500 = vmatprep.subr.bf16.mxu0 0
        %3501 = vmatpush1.bf16.msra.mxu0 %v3061
        %3502 = vmatprep.subr.bf16.mxu0 0
        %3503 = vmatpush1.bf16.msra.mxu0 %v3062
        %3504 = vmatprep.subr.bf16.mxu0 0
        %3505 = vmatpush1.bf16.msra.mxu0 %v3063
        %3506 = vmatprep.subr.bf16.mxu0 0
        %3507 = vmatpush1.bf16.msra.mxu0 %v3064
        %3508 = vmatprep.subr.bf16.mxu0 0
        %3509 = vmatpush1.bf16.msra.mxu0 %v3065
        %3510 = vmatprep.subr.bf16.mxu0 0
        %3511 = vmatpush1.bf16.msra.mxu0 %v3066
        %3512 = vmatprep.subr.bf16.mxu0 0
        %3513 = vmatpush1.bf16.msra.mxu0 %v3067
        %3514 = vmatprep.subr.bf16.mxu0 0
        %3515 = vmatpush1.bf16.msra.mxu0 %v3068
        %3516 = vmatprep.subr.bf16.mxu0 0
        %3517 = vmatpush1.bf16.msra.mxu0 %v3069
        %3518 = vmatprep.subr.bf16.mxu0 0
        %3519 = vmatpush1.bf16.msra.mxu0 %v3070
        %3520 = vmatprep.subr.bf16.mxu0 0
        %3521 = vmatpush1.bf16.msra.mxu0 %v3071
        %3522 = vmatprep.mubr.bf16.mxu0 %v2453
        %3523 = vmatmul.mubr.bf16.gmra.mrb[0].mxu0 %v2452
        %v3524 = vpop.f32.mrb[0].mxu0
        %v3525 = vadd.f32 %v3364, %v3524
        %v3526 = vpop.f32.mrb[0].mxu0
        %v3527 = vpop.f32.mrb[0].mxu0
        %v3528 = vadd.f32 %v3367, %v3527
        %v3529 = vpop.f32.mrb[0].mxu0
        %3530 = vmatprep.mubr.bf16.mxu0 %v2462
        %3531 = vmatmul.mubr.bf16.gmra.mrb[0].mxu0 %v2461
        %v3532 = vpop.f32.mrb[0].mxu0
        %v3533 = vadd.f32 %v3372, %v3532
        %v3534 = vpop.f32.mrb[0].mxu0
        %v3535 = vpop.f32.mrb[0].mxu0
        %v3536 = vadd.f32 %v3375, %v3535
        %v3537 = vpop.f32.mrb[0].mxu0
        %3538 = vmatprep.mubr.bf16.mxu0 %v2471
        %3539 = vmatmul.mubr.bf16.gmra.mrb[0].mxu0 %v2470
        %v3540 = vpop.f32.mrb[0].mxu0
        %v3541 = vadd.f32 %v3380, %v3540
        %v3542 = vpop.f32.mrb[0].mxu0
        %v3543 = vpop.f32.mrb[0].mxu0
        %v3544 = vadd.f32 %v3383, %v3543
        %v3545 = vpop.f32.mrb[0].mxu0
        %3546 = vmatprep.mubr.bf16.mxu0 %v2480
        %3547 = vmatmul.mubr.bf16.gmra.mrb[0].mxu0 %v2479
        %v3548 = vpop.f32.mrb[0].mxu0
        %v3549 = vadd.f32 %v3388, %v3548
        %v3550 = vpop.f32.mrb[0].mxu0
        %v3551 = vpop.f32.mrb[0].mxu0
        %v3552 = vadd.f32 %v3391, %v3551
        %v3553 = vpop.f32.mrb[0].mxu0
        %3554 = vmatprep.mubr.bf16.mxu0 %v2489
        %3555 = vmatmul.mubr.bf16.gmra.mrb[0].mxu0 %v2488
        %v3556 = vpop.f32.mrb[0].mxu0
        %v3557 = vadd.f32 %v3396, %v3556
        %v3558 = vpop.f32.mrb[0].mxu0
        %v3559 = vpop.f32.mrb[0].mxu0
        %v3560 = vadd.f32 %v3399, %v3559
        %v3561 = vpop.f32.mrb[0].mxu0
        %3562 = vmatprep.mubr.bf16.mxu0 %v2498
        %3563 = vmatmul.mubr.bf16.gmra.mrb[0].mxu0 %v2497
        %v3564 = vpop.f32.mrb[0].mxu0
        %v3565 = vadd.f32 %v3404, %v3564
        %v3566 = vpop.f32.mrb[0].mxu0
        %v3567 = vpop.f32.mrb[0].mxu0
        %v3568 = vadd.f32 %v3407, %v3567
        %v3569 = vpop.f32.mrb[0].mxu0
        %3570 = vmatprep.mubr.bf16.mxu0 %v2507
        %3571 = vmatmul.mubr.bf16.gmra.mrb[0].mxu0 %v2506
        %v3572 = vpop.f32.mrb[0].mxu0
        %v3573 = vadd.f32 %v3412, %v3572
        %v3574 = vpop.f32.mrb[0].mxu0
        %v3575 = vpop.f32.mrb[0].mxu0
        %v3576 = vadd.f32 %v3415, %v3575
        %v3577 = vpop.f32.mrb[0].mxu0
        %3578 = vmatprep.mubr.bf16.mxu0 %v2516
        %3579 = vmatmul.mubr.bf16.gmra.mrb[0].mxu0 %v2515
        %v3580 = vpop.f32.mrb[0].mxu0
        %v3581 = vadd.f32 %v3420, %v3580
        %v3582 = vpop.f32.mrb[0].mxu0
        %v3583 = vpop.f32.mrb[0].mxu0
        %v3584 = vadd.f32 %v3423, %v3583
        %v3585 = vpop.f32.mrb[0].mxu0
        %3586 = vmatprep.mubr.bf16.mxu0 %v2525
        %3587 = vmatmul.mubr.bf16.gmra.mrb[0].mxu0 %v2524
        %v3588 = vpop.f32.mrb[0].mxu0
        %v3589 = vadd.f32 %v3428, %v3588
        %v3590 = vpop.f32.mrb[0].mxu0
        %v3591 = vpop.f32.mrb[0].mxu0
        %v3592 = vadd.f32 %v3431, %v3591
        %v3593 = vpop.f32.mrb[0].mxu0
        %3594 = vmatprep.mubr.bf16.mxu0 %v2534
        %3595 = vmatmul.mubr.bf16.gmra.mrb[0].mxu0 %v2533
        %v3596 = vpop.f32.mrb[0].mxu0
        %v3597 = vadd.f32 %v3436, %v3596
        %v3598 = vpop.f32.mrb[0].mxu0
        %v3599 = vpop.f32.mrb[0].mxu0
        %v3600 = vadd.f32 %v3439, %v3599
        %v3601 = vpop.f32.mrb[0].mxu0
        %3602 = vmatprep.mubr.bf16.mxu0 %v2543
        %3603 = vmatmul.mubr.bf16.gmra.mrb[0].mxu0 %v2542
        %v3604 = vpop.f32.mrb[0].mxu0
        %v3605 = vadd.f32 %v3444, %v3604
        %v3606 = vpop.f32.mrb[0].mxu0
        %v3607 = vpop.f32.mrb[0].mxu0
        %v3608 = vadd.f32 %v3447, %v3607
        %v3609 = vpop.f32.mrb[0].mxu0
        %3610 = vmatprep.mubr.bf16.mxu0 %v2552
        %3611 = vmatmul.mubr.bf16.gmra.mrb[0].mxu0 %v2551
        %v3612 = vpop.f32.mrb[0].mxu0
        %v3613 = vadd.f32 %v3452, %v3612
        %v3614 = vpop.f32.mrb[0].mxu0
        %v3615 = vpop.f32.mrb[0].mxu0
        %v3616 = vadd.f32 %v3455, %v3615
        %v3617 = vpop.f32.mrb[0].mxu0
        %3618 = vmatprep.mubr.bf16.mxu0 %v2561
        %3619 = vmatmul.mubr.bf16.gmra.mrb[0].mxu0 %v2560
        %v3620 = vpop.f32.mrb[0].mxu0
        %v3621 = vadd.f32 %v3460, %v3620
        %v3622 = vpop.f32.mrb[0].mxu0
        %v3623 = vpop.f32.mrb[0].mxu0
        %v3624 = vadd.f32 %v3463, %v3623
        %v3625 = vpop.f32.mrb[0].mxu0
        %3626 = vmatprep.mubr.bf16.mxu0 %v2570
        %3627 = vmatmul.mubr.bf16.gmra.mrb[0].mxu0 %v2569
        %v3628 = vpop.f32.mrb[0].mxu0
        %v3629 = vadd.f32 %v3468, %v3628
        %v3630 = vpop.f32.mrb[0].mxu0
        %v3631 = vpop.f32.mrb[0].mxu0
        %v3632 = vadd.f32 %v3471, %v3631
        %v3633 = vpop.f32.mrb[0].mxu0
        %3634 = vmatprep.mubr.bf16.mxu0 %v2579
        %3635 = vmatmul.mubr.bf16.gmra.mrb[0].mxu0 %v2578
        %v3636 = vpop.f32.mrb[0].mxu0
        %v3637 = vadd.f32 %v3476, %v3636
        %v3638 = vpop.f32.mrb[0].mxu0
        %v3639 = vpop.f32.mrb[0].mxu0
        %v3640 = vadd.f32 %v3479, %v3639
        %v3641 = vpop.f32.mrb[0].mxu0
        %3642 = vmatprep.mubr.bf16.mxu0 %v2588
        %3643 = vmatmul.mubr.bf16.gmra.mrb[0].mxu0 %v2587
        %v3644 = vpop.f32.mrb[0].mxu0
        %v3645 = vadd.f32 %v3484, %v3644
        %v3646 = vpop.f32.mrb[0].mxu0
        %v3647 = vpop.f32.mrb[0].mxu0
        %v3648 = vadd.f32 %v3487, %v3647
        %v3649 = vpop.f32.mrb[0].mxu0
        %3650 = vdwg.mxu0
        %3651 = vmatprep.subr.bf16.mxu0 0
        %3652 = vmatpush1.bf16.msra.mxu0 %v3072
        %3653 = vmatprep.subr.bf16.mxu0 0
        %3654 = vmatpush1.bf16.msra.mxu0 %v3073
        %3655 = vmatprep.subr.bf16.mxu0 0
        %3656 = vmatpush1.bf16.msra.mxu0 %v3074
        %3657 = vmatprep.subr.bf16.mxu0 0
        %3658 = vmatpush1.bf16.msra.mxu0 %v3075
        %3659 = vmatprep.subr.bf16.mxu0 0
        %3660 = vmatpush1.bf16.msra.mxu0 %v3076
        %3661 = vmatprep.subr.bf16.mxu0 0
        %3662 = vmatpush1.bf16.msra.mxu0 %v3077
        %3663 = vmatprep.subr.bf16.mxu0 0
        %3664 = vmatpush1.bf16.msra.mxu0 %v3078
        %3665 = vmatprep.subr.bf16.mxu0 0
        %3666 = vmatpush1.bf16.msra.mxu0 %v3079
        %3667 = vmatprep.subr.bf16.mxu0 0
        %3668 = vmatpush1.bf16.msra.mxu0 %v3080
        %3669 = vmatprep.subr.bf16.mxu0 0
        %3670 = vmatpush1.bf16.msra.mxu0 %v3081
        %3671 = vmatprep.subr.bf16.mxu0 0
        %3672 = vmatpush1.bf16.msra.mxu0 %v3082
        %3673 = vmatprep.subr.bf16.mxu0 0
        %3674 = vmatpush1.bf16.msra.mxu0 %v3083
        %3675 = vmatprep.subr.bf16.mxu0 0
        %3676 = vmatpush1.bf16.msra.mxu0 %v3084
        %3677 = vmatprep.subr.bf16.mxu0 0
        %3678 = vmatpush1.bf16.msra.mxu0 %v3085
        %3679 = vmatprep.subr.bf16.mxu0 0
        %3680 = vmatpush1.bf16.msra.mxu0 %v3086
        %3681 = vmatprep.subr.bf16.mxu0 0
        %3682 = vmatpush1.bf16.msra.mxu0 %v3087
        %3683 = vmatprep.mubr.bf16.mxu0 %v2455
        %3684 = vmatmul.mubr.bf16.gmra.mrb[0].mxu0 %v2454
        %v3685 = vpop.f32.mrb[0].mxu0
        %v3686 = vadd.f32 %v3525, %v3685
        %v3687 = vpop.f32.mrb[0].mxu0
        %v3688 = vpop.f32.mrb[0].mxu0
        %v3689 = vadd.f32 %v3528, %v3688
        %v3690 = vpop.f32.mrb[0].mxu0
        %3691 = vmatprep.mubr.bf16.mxu0 %v2464
        %3692 = vmatmul.mubr.bf16.gmra.mrb[0].mxu0 %v2463
        %v3693 = vpop.f32.mrb[0].mxu0
        %v3694 = vadd.f32 %v3533, %v3693
        %v3695 = vpop.f32.mrb[0].mxu0
        %v3696 = vpop.f32.mrb[0].mxu0
        %v3697 = vadd.f32 %v3536, %v3696
        %v3698 = vpop.f32.mrb[0].mxu0
        %3699 = vmatprep.mubr.bf16.mxu0 %v2473
        %3700 = vmatmul.mubr.bf16.gmra.mrb[0].mxu0 %v2472
        %v3701 = vpop.f32.mrb[0].mxu0
        %v3702 = vadd.f32 %v3541, %v3701
        %v3703 = vpop.f32.mrb[0].mxu0
        %v3704 = vpop.f32.mrb[0].mxu0
        %v3705 = vadd.f32 %v3544, %v3704
        %v3706 = vpop.f32.mrb[0].mxu0
        %3707 = vmatprep.mubr.bf16.mxu0 %v2482
        %3708 = vmatmul.mubr.bf16.gmra.mrb[0].mxu0 %v2481
        %v3709 = vpop.f32.mrb[0].mxu0
        %v3710 = vadd.f32 %v3549, %v3709
        %v3711 = vpop.f32.mrb[0].mxu0
        %v3712 = vpop.f32.mrb[0].mxu0
        %v3713 = vadd.f32 %v3552, %v3712
        %v3714 = vpop.f32.mrb[0].mxu0
        %3715 = vmatprep.mubr.bf16.mxu0 %v2491
        %3716 = vmatmul.mubr.bf16.gmra.mrb[0].mxu0 %v2490
        %v3717 = vpop.f32.mrb[0].mxu0
        %v3718 = vadd.f32 %v3557, %v3717
        %v3719 = vpop.f32.mrb[0].mxu0
        %v3720 = vpop.f32.mrb[0].mxu0
        %v3721 = vadd.f32 %v3560, %v3720
        %v3722 = vpop.f32.mrb[0].mxu0
        %3723 = vmatprep.mubr.bf16.mxu0 %v2500
        %3724 = vmatmul.mubr.bf16.gmra.mrb[0].mxu0 %v2499
        %v3725 = vpop.f32.mrb[0].mxu0
        %v3726 = vadd.f32 %v3565, %v3725
        %v3727 = vpop.f32.mrb[0].mxu0
        %v3728 = vpop.f32.mrb[0].mxu0
        %v3729 = vadd.f32 %v3568, %v3728
        %v3730 = vpop.f32.mrb[0].mxu0
        %3731 = vmatprep.mubr.bf16.mxu0 %v2509
        %3732 = vmatmul.mubr.bf16.gmra.mrb[0].mxu0 %v2508
        %v3733 = vpop.f32.mrb[0].mxu0
        %v3734 = vadd.f32 %v3573, %v3733
        %v3735 = vpop.f32.mrb[0].mxu0
        %v3736 = vpop.f32.mrb[0].mxu0
        %v3737 = vadd.f32 %v3576, %v3736
        %v3738 = vpop.f32.mrb[0].mxu0
        %3739 = vmatprep.mubr.bf16.mxu0 %v2518
        %3740 = vmatmul.mubr.bf16.gmra.mrb[0].mxu0 %v2517
        %v3741 = vpop.f32.mrb[0].mxu0
        %v3742 = vadd.f32 %v3581, %v3741
        %v3743 = vpop.f32.mrb[0].mxu0
        %v3744 = vpop.f32.mrb[0].mxu0
        %v3745 = vadd.f32 %v3584, %v3744
        %v3746 = vpop.f32.mrb[0].mxu0
        %3747 = vmatprep.mubr.bf16.mxu0 %v2527
        %3748 = vmatmul.mubr.bf16.gmra.mrb[0].mxu0 %v2526
        %v3749 = vpop.f32.mrb[0].mxu0
        %v3750 = vadd.f32 %v3589, %v3749
        %v3751 = vpop.f32.mrb[0].mxu0
        %v3752 = vpop.f32.mrb[0].mxu0
        %v3753 = vadd.f32 %v3592, %v3752
        %v3754 = vpop.f32.mrb[0].mxu0
        %3755 = vmatprep.mubr.bf16.mxu0 %v2536
        %3756 = vmatmul.mubr.bf16.gmra.mrb[0].mxu0 %v2535
        %v3757 = vpop.f32.mrb[0].mxu0
        %v3758 = vadd.f32 %v3597, %v3757
        %v3759 = vpop.f32.mrb[0].mxu0
        %v3760 = vpop.f32.mrb[0].mxu0
        %v3761 = vadd.f32 %v3600, %v3760
        %v3762 = vpop.f32.mrb[0].mxu0
        %3763 = vmatprep.mubr.bf16.mxu0 %v2545
        %3764 = vmatmul.mubr.bf16.gmra.mrb[0].mxu0 %v2544
        %v3765 = vpop.f32.mrb[0].mxu0
        %v3766 = vadd.f32 %v3605, %v3765
        %v3767 = vpop.f32.mrb[0].mxu0
        %v3768 = vpop.f32.mrb[0].mxu0
        %v3769 = vadd.f32 %v3608, %v3768
        %v3770 = vpop.f32.mrb[0].mxu0
        %3771 = vmatprep.mubr.bf16.mxu0 %v2554
        %3772 = vmatmul.mubr.bf16.gmra.mrb[0].mxu0 %v2553
        %v3773 = vpop.f32.mrb[0].mxu0
        %v3774 = vadd.f32 %v3613, %v3773
        %v3775 = vpop.f32.mrb[0].mxu0
        %v3776 = vpop.f32.mrb[0].mxu0
        %v3777 = vadd.f32 %v3616, %v3776
        %v3778 = vpop.f32.mrb[0].mxu0
        %3779 = vmatprep.mubr.bf16.mxu0 %v2563
        %3780 = vmatmul.mubr.bf16.gmra.mrb[0].mxu0 %v2562
        %v3781 = vpop.f32.mrb[0].mxu0
        %v3782 = vadd.f32 %v3621, %v3781
        %v3783 = vpop.f32.mrb[0].mxu0
        %v3784 = vpop.f32.mrb[0].mxu0
        %v3785 = vadd.f32 %v3624, %v3784
        %v3786 = vpop.f32.mrb[0].mxu0
        %3787 = vmatprep.mubr.bf16.mxu0 %v2572
        %3788 = vmatmul.mubr.bf16.gmra.mrb[0].mxu0 %v2571
        %v3789 = vpop.f32.mrb[0].mxu0
        %v3790 = vadd.f32 %v3629, %v3789
        %v3791 = vpop.f32.mrb[0].mxu0
        %v3792 = vpop.f32.mrb[0].mxu0
        %v3793 = vadd.f32 %v3632, %v3792
        %v3794 = vpop.f32.mrb[0].mxu0
        %3795 = vmatprep.mubr.bf16.mxu0 %v2581
        %3796 = vmatmul.mubr.bf16.gmra.mrb[0].mxu0 %v2580
        %v3797 = vpop.f32.mrb[0].mxu0
        %v3798 = vadd.f32 %v3637, %v3797
        %v3799 = vpop.f32.mrb[0].mxu0
        %v3800 = vpop.f32.mrb[0].mxu0
        %v3801 = vadd.f32 %v3640, %v3800
        %v3802 = vpop.f32.mrb[0].mxu0
        %3803 = vmatprep.mubr.bf16.mxu0 %v2590
        %3804 = vmatmul.mubr.bf16.gmra.mrb[0].mxu0 %v2589
        %v3805 = vpop.f32.mrb[0].mxu0
        %v3806 = vadd.f32 %v3645, %v3805
        %v3807 = vpop.f32.mrb[0].mxu0
        %v3808 = vpop.f32.mrb[0].mxu0
        %v3809 = vadd.f32 %v3648, %v3808
        %v3810 = vpop.f32.mrb[0].mxu0
        %3811 = vdwg.mxu0
        %3812 = vmatprep.subr.bf16.mxu0 0
        %3813 = vmatpush1.bf16.msra.mxu0 %v3088
        %3814 = vmatprep.subr.bf16.mxu0 0
        %3815 = vmatpush1.bf16.msra.mxu0 %v3089
        %3816 = vmatprep.subr.bf16.mxu0 0
        %3817 = vmatpush1.bf16.msra.mxu0 %v3090
        %3818 = vmatprep.subr.bf16.mxu0 0
        %3819 = vmatpush1.bf16.msra.mxu0 %v3091
        %3820 = vmatprep.subr.bf16.mxu0 0
        %3821 = vmatpush1.bf16.msra.mxu0 %v3092
        %3822 = vmatprep.subr.bf16.mxu0 0
        %3823 = vmatpush1.bf16.msra.mxu0 %v3093
        %3824 = vmatprep.subr.bf16.mxu0 0
        %3825 = vmatpush1.bf16.msra.mxu0 %v3094
        %3826 = vmatprep.subr.bf16.mxu0 0
        %3827 = vmatpush1.bf16.msra.mxu0 %v3095
        %3828 = vmatprep.subr.bf16.mxu0 0
        %3829 = vmatpush1.bf16.msra.mxu0 0
        %3830 = vmatprep.subr.bf16.mxu0 0
        %3831 = vmatpush1.bf16.msra.mxu0 0
        %3832 = vmatprep.subr.bf16.mxu0 0
        %3833 = vmatpush1.bf16.msra.mxu0 0
        %3834 = vmatprep.subr.bf16.mxu0 0
        %3835 = vmatpush1.bf16.msra.mxu0 0
        %3836 = vmatprep.subr.bf16.mxu0 0
        %3837 = vmatpush1.bf16.msra.mxu0 0
        %3838 = vmatprep.subr.bf16.mxu0 0
        %3839 = vmatpush1.bf16.msra.mxu0 0
        %3840 = vmatprep.subr.bf16.mxu0 0
        %3841 = vmatpush1.bf16.msra.mxu0 0
        %3842 = vmatprep.subr.bf16.mxu0 0
        %3843 = vmatpush1.bf16.msra.mxu0 0
        %3844 = vmatprep.mubr.bf16.mxu0 0
        %3845 = vmatmul.mubr.bf16.gmra.mrb[0].mxu0 %v2456
        %v3846 = vpop.f32.mrb[0].mxu0
        %v3847 = vadd.f32 %v3686, %v3846
        %v3848 = vpop.f32.mrb[0].mxu0
        %v3849 = vpop.f32.mrb[0].mxu0
        %v3850 = vadd.f32 %v3689, %v3849
        %v3851 = vpop.f32.mrb[0].mxu0
        %3852 = vmatprep.mubr.bf16.mxu0 0
        %3853 = vmatmul.mubr.bf16.gmra.mrb[0].mxu0 %v2465
        %v3854 = vpop.f32.mrb[0].mxu0
        %v3855 = vadd.f32 %v3694, %v3854
        %v3856 = vpop.f32.mrb[0].mxu0
        %v3857 = vpop.f32.mrb[0].mxu0
        %v3858 = vadd.f32 %v3697, %v3857
        %v3859 = vpop.f32.mrb[0].mxu0
        %3860 = vmatprep.mubr.bf16.mxu0 0
        %3861 = vmatmul.mubr.bf16.gmra.mrb[0].mxu0 %v2474
        %v3862 = vpop.f32.mrb[0].mxu0
        %v3863 = vadd.f32 %v3702, %v3862
        %v3864 = vpop.f32.mrb[0].mxu0
        %v3865 = vpop.f32.mrb[0].mxu0
        %v3866 = vadd.f32 %v3705, %v3865
        %v3867 = vpop.f32.mrb[0].mxu0
        %3868 = vmatprep.mubr.bf16.mxu0 0
        %3869 = vmatmul.mubr.bf16.gmra.mrb[0].mxu0 %v2483
        %v3870 = vpop.f32.mrb[0].mxu0
        %v3871 = vadd.f32 %v3710, %v3870
        %v3872 = vpop.f32.mrb[0].mxu0
        %v3873 = vpop.f32.mrb[0].mxu0
        %v3874 = vadd.f32 %v3713, %v3873
        %v3875 = vpop.f32.mrb[0].mxu0
        %3876 = vmatprep.mubr.bf16.mxu0 0
        %3877 = vmatmul.mubr.bf16.gmra.mrb[0].mxu0 %v2492
        %v3878 = vpop.f32.mrb[0].mxu0
        %v3879 = vadd.f32 %v3718, %v3878
        %v3880 = vpop.f32.mrb[0].mxu0
        %v3881 = vpop.f32.mrb[0].mxu0
        %v3882 = vadd.f32 %v3721, %v3881
        %v3883 = vpop.f32.mrb[0].mxu0
        %3884 = vmatprep.mubr.bf16.mxu0 0
        %3885 = vmatmul.mubr.bf16.gmra.mrb[0].mxu0 %v2501
        %v3886 = vpop.f32.mrb[0].mxu0
        %v3887 = vadd.f32 %v3726, %v3886
        %v3888 = vpop.f32.mrb[0].mxu0
        %v3889 = vpop.f32.mrb[0].mxu0
        %v3890 = vadd.f32 %v3729, %v3889
        %v3891 = vpop.f32.mrb[0].mxu0
        %3892 = vmatprep.mubr.bf16.mxu0 0
        %3893 = vmatmul.mubr.bf16.gmra.mrb[0].mxu0 %v2510
        %v3894 = vpop.f32.mrb[0].mxu0
        %v3895 = vadd.f32 %v3734, %v3894
        %v3896 = vpop.f32.mrb[0].mxu0
        %v3897 = vpop.f32.mrb[0].mxu0
        %v3898 = vadd.f32 %v3737, %v3897
        %v3899 = vpop.f32.mrb[0].mxu0
        %3900 = vmatprep.mubr.bf16.mxu0 0
        %3901 = vmatmul.mubr.bf16.gmra.mrb[0].mxu0 %v2519
        %v3902 = vpop.f32.mrb[0].mxu0
        %v3903 = vadd.f32 %v3742, %v3902
        %v3904 = vpop.f32.mrb[0].mxu0
        %v3905 = vpop.f32.mrb[0].mxu0
        %v3906 = vadd.f32 %v3745, %v3905
        %v3907 = vpop.f32.mrb[0].mxu0
        %3908 = vmatprep.mubr.bf16.mxu0 0
        %3909 = vmatmul.mubr.bf16.gmra.mrb[0].mxu0 %v2528
        %v3910 = vpop.f32.mrb[0].mxu0
        %v3911 = vadd.f32 %v3750, %v3910
        %v3912 = vpop.f32.mrb[0].mxu0
        %v3913 = vpop.f32.mrb[0].mxu0
        %v3914 = vadd.f32 %v3753, %v3913
        %v3915 = vpop.f32.mrb[0].mxu0
        %3916 = vmatprep.mubr.bf16.mxu0 0
        %3917 = vmatmul.mubr.bf16.gmra.mrb[0].mxu0 %v2537
        %v3918 = vpop.f32.mrb[0].mxu0
        %v3919 = vadd.f32 %v3758, %v3918
        %v3920 = vpop.f32.mrb[0].mxu0
        %v3921 = vpop.f32.mrb[0].mxu0
        %v3922 = vadd.f32 %v3761, %v3921
        %v3923 = vpop.f32.mrb[0].mxu0
        %3924 = vmatprep.mubr.bf16.mxu0 0
        %3925 = vmatmul.mubr.bf16.gmra.mrb[0].mxu0 %v2546
        %v3926 = vpop.f32.mrb[0].mxu0
        %v3927 = vadd.f32 %v3766, %v3926
        %v3928 = vpop.f32.mrb[0].mxu0
        %v3929 = vpop.f32.mrb[0].mxu0
        %v3930 = vadd.f32 %v3769, %v3929
        %v3931 = vpop.f32.mrb[0].mxu0
        %3932 = vmatprep.mubr.bf16.mxu0 0
        %3933 = vmatmul.mubr.bf16.gmra.mrb[0].mxu0 %v2555
        %v3934 = vpop.f32.mrb[0].mxu0
        %v3935 = vadd.f32 %v3774, %v3934
        %v3936 = vpop.f32.mrb[0].mxu0
        %v3937 = vpop.f32.mrb[0].mxu0
        %v3938 = vadd.f32 %v3777, %v3937
        %v3939 = vpop.f32.mrb[0].mxu0
        %3940 = vmatprep.mubr.bf16.mxu0 0
        %3941 = vmatmul.mubr.bf16.gmra.mrb[0].mxu0 %v2564
        %v3942 = vpop.f32.mrb[0].mxu0
        %v3943 = vadd.f32 %v3782, %v3942
        %v3944 = vpop.f32.mrb[0].mxu0
        %v3945 = vpop.f32.mrb[0].mxu0
        %v3946 = vadd.f32 %v3785, %v3945
        %v3947 = vpop.f32.mrb[0].mxu0
        %3948 = vmatprep.mubr.bf16.mxu0 0
        %3949 = vmatmul.mubr.bf16.gmra.mrb[0].mxu0 %v2573
        %v3950 = vpop.f32.mrb[0].mxu0
        %v3951 = vadd.f32 %v3790, %v3950
        %v3952 = vpop.f32.mrb[0].mxu0
        %v3953 = vpop.f32.mrb[0].mxu0
        %v3954 = vadd.f32 %v3793, %v3953
        %v3955 = vpop.f32.mrb[0].mxu0
        %3956 = vmatprep.mubr.bf16.mxu0 0
        %3957 = vmatmul.mubr.bf16.gmra.mrb[0].mxu0 %v2582
        %v3958 = vpop.f32.mrb[0].mxu0
        %v3959 = vadd.f32 %v3798, %v3958
        %v3960 = vpop.f32.mrb[0].mxu0
        %v3961 = vpop.f32.mrb[0].mxu0
        %v3962 = vadd.f32 %v3801, %v3961
        %v3963 = vpop.f32.mrb[0].mxu0
        %3964 = vmatprep.mubr.bf16.mxu0 0
        %3965 = vmatmul.mubr.bf16.gmra.mrb[0].mxu0 %v2591
        %v3966 = vpop.f32.mrb[0].mxu0
        %v3967 = vadd.f32 %v3806, %v3966
        %v3968 = vpop.f32.mrb[0].mxu0
        %v3969 = vpop.f32.mrb[0].mxu0
        %v3970 = vadd.f32 %v3809, %v3969
        %v3971 = vpop.f32.mrb[0].mxu0
        %3972 = vdwg.mxu0
        %v3973 = vmax.f32 %v3847, 0.0
        %v3974 = vmax.f32 %v3850, 0.0
        %v3975 = vmax.f32 %v3855, 0.0
        %v3976 = vmax.f32 %v3858, 0.0
        %v3977 = vmax.f32 %v3863, 0.0
        %v3978 = vmax.f32 %v3866, 0.0
        %v3979 = vmax.f32 %v3871, 0.0
        %v3980 = vmax.f32 %v3874, 0.0
        %v3981 = vmax.f32 %v3879, 0.0
        %v3982 = vmax.f32 %v3882, 0.0
        %v3983 = vmax.f32 %v3887, 0.0
        %v3984 = vmax.f32 %v3890, 0.0
        %v3985 = vmax.f32 %v3895, 0.0
        %v3986 = vmax.f32 %v3898, 0.0
        %v3987 = vmax.f32 %v3903, 0.0
        %v3988 = vmax.f32 %v3906, 0.0
        %v3989 = vmax.f32 %v3911, 0.0
        %v3990 = vmax.f32 %v3914, 0.0
        %v3991 = vmax.f32 %v3919, 0.0
        %v3992 = vmax.f32 %v3922, 0.0
        %v3993 = vmax.f32 %v3927, 0.0
        %v3994 = vmax.f32 %v3930, 0.0
        %v3995 = vmax.f32 %v3935, 0.0
        %v3996 = vmax.f32 %v3938, 0.0
        %v3997 = vmax.f32 %v3943, 0.0
        %v3998 = vmax.f32 %v3946, 0.0
        %v3999 = vmax.f32 %v3951, 0.0
        %v4000 = vmax.f32 %v3954, 0.0
        %v4001 = vmax.f32 %v3959, 0.0
        %v4002 = vmax.f32 %v3962, 0.0
        %v4003 = vmax.f32 %v3967, 0.0
        %v4004 = vmax.f32 %v3970, 0.0
        %v4005 = vadd.f32 %v3973, %v3974
        %v4006 = vadd.f32 %v4005, %v3975
        %v4007 = vadd.f32 %v4006, %v3976
        %v4008 = vadd.f32 %v4007, %v3977
        %v4009 = vadd.f32 %v4008, %v3978
        %v4010 = vadd.f32 %v4009, %v3979
        %v4011 = vadd.f32 %v4010, %v3980
        %v4012 = vadd.f32 %v4011, %v3981
        %v4013 = vadd.f32 %v4012, %v3982
        %v4014 = vadd.f32 %v4013, %v3983
        %v4015 = vadd.f32 %v4014, %v3984
        %v4016 = vadd.f32 %v4015, %v3985
        %v4017 = vadd.f32 %v4016, %v3986
        %v4018 = vadd.f32 %v4017, %v3987
        %v4019 = vadd.f32 %v4018, %v3988
        %v4020 = vadd.f32 %v4019, %v3989
        %v4021 = vadd.f32 %v4020, %v3990
        %v4022 = vadd.f32 %v4021, %v3991
        %v4023 = vadd.f32 %v4022, %v3992
        %v4024 = vadd.f32 %v4023, %v3993
        %v4025 = vadd.f32 %v4024, %v3994
        %v4026 = vadd.f32 %v4025, %v3995
        %v4027 = vadd.f32 %v4026, %v3996
        %v4028 = vadd.f32 %v4027, %v3997
        %v4029 = vadd.f32 %v4028, %v3998
        %v4030 = vadd.f32 %v4029, %v3999
        %v4031 = vadd.f32 %v4030, %v4000
        %v4032 = vadd.f32 %v4031, %v4001
        %v4033 = vadd.f32 %v4032, %v4002
        %v4034 = vadd.f32 %v4033, %v4003
        %v4035 = vadd.f32 %v4034, %v4004
        %v4036 = vrot.slane %v4035, 4
        %v4037 = vadd.f32 %v4035, %v4036
        %v4038 = vrot.slane %v4037, 2
        %v4039 = vadd.f32 %v4037, %v4038
        %v4040 = vrot.slane %v4039, 1
        %v4041 = vadd.f32 %v4039, %v4040
        %v4042 = vmul.f32 %v4041, 0.00390625
        %v4043 = vld [vmem:[%s2] sm:$0xff]
        %v4044 = vld [vmem:[%s2 + $0x8] sm:$0xff]
        %v4045 = vld [vmem:[%s2 + $0x10] sm:$0xff]
        %v4046 = vld [vmem:[%s2 + $0x18] sm:$0xff]
        %v4047 = vld [vmem:[%s2 + $0x20] sm:$0xff]
        %v4048 = vld [vmem:[%s2 + $0x28] sm:$0xff]
        %v4049 = vld [vmem:[%s2 + $0x30] sm:$0xff]
        %v4050 = vld [vmem:[%s2 + $0x38] sm:$0xff]
        %v4051 = vld [vmem:[%s2 + $0x40] sm:$0xff]
        %v4052 = vld [vmem:[%s2 + $0x48] sm:$0xff]
        %v4053 = vld [vmem:[%s2 + $0x50] sm:$0xff]
        %v4054 = vld [vmem:[%s2 + $0x58] sm:$0xff]
        %v4055 = vld [vmem:[%s2 + $0x60] sm:$0xff]
        %v4056 = vld [vmem:[%s2 + $0x68] sm:$0xff]
        %v4057 = vld [vmem:[%s2 + $0x70] sm:$0xff]
        %v4058 = vld [vmem:[%s2 + $0x78] sm:$0xff]
        %4059 = vmatprep.subr.mxu0 0.0
        %4060 = vmatpush1.msra.mxu0 %v4043
        %4061 = vmatprep.subr.mxu0 0.0
        %4062 = vmatpush1.msra.mxu0 %v4044
        %4063 = vmatprep.subr.mxu0 0.0
        %4064 = vmatpush1.msra.mxu0 %v4045
        %4065 = vmatprep.subr.mxu0 0.0
        %4066 = vmatpush1.msra.mxu0 %v4046
        %4067 = vmatprep.subr.mxu0 0.0
        %4068 = vmatpush1.msra.mxu0 %v4047
        %4069 = vmatprep.subr.mxu0 0.0
        %4070 = vmatpush1.msra.mxu0 %v4048
        %4071 = vmatprep.subr.mxu0 0.0
        %4072 = vmatpush1.msra.mxu0 %v4049
        %4073 = vmatprep.subr.mxu0 0.0
        %4074 = vmatpush1.msra.mxu0 %v4050
        %4075 = vmatprep.subr.mxu0 0.0
        %4076 = vmatpush1.msra.mxu0 %v4051
        %4077 = vmatprep.subr.mxu0 0.0
        %4078 = vmatpush1.msra.mxu0 %v4052
        %4079 = vmatprep.subr.mxu0 0.0
        %4080 = vmatpush1.msra.mxu0 %v4053
        %4081 = vmatprep.subr.mxu0 0.0
        %4082 = vmatpush1.msra.mxu0 %v4054
        %4083 = vmatprep.subr.mxu0 0.0
        %4084 = vmatpush1.msra.mxu0 %v4055
        %4085 = vmatprep.subr.mxu0 0.0
        %4086 = vmatpush1.msra.mxu0 %v4056
        %4087 = vmatprep.subr.mxu0 0.0
        %4088 = vmatpush1.msra.mxu0 %v4057
        %4089 = vmatprep.subr.mxu0 0.0
        %4090 = vmatpush1.msra.mxu0 %v4058
        %4091 = vmatprep.subr.mxu0 0.0
        %4092 = vmatpush1.msra.mxu0 0.0
        %4093 = vmatprep.subr.mxu0 0.0
        %4094 = vmatpush1.msra.mxu0 0.0
        %4095 = vmatprep.subr.mxu0 0.0
        %4096 = vmatpush1.msra.mxu0 0.0
        %4097 = vmatprep.subr.mxu0 0.0
        %4098 = vmatpush1.msra.mxu0 0.0
        %4099 = vmatprep.subr.mxu0 0.0
        %4100 = vmatpush1.msra.mxu0 0.0
        %4101 = vmatprep.subr.mxu0 0.0
        %4102 = vmatpush1.msra.mxu0 0.0
        %4103 = vmatprep.subr.mxu0 0.0
        %4104 = vmatpush1.msra.mxu0 0.0
        %4105 = vmatprep.subr.mxu0 0.0
        %4106 = vmatpush1.msra.mxu0 0.0
        %4107 = vmatprep.subr.mxu0 0.0
        %4108 = vmatpush1.msra.mxu0 0.0
        %4109 = vmatprep.subr.mxu0 0.0
        %4110 = vmatpush1.msra.mxu0 0.0
        %4111 = vmatprep.subr.mxu0 0.0
        %4112 = vmatpush1.msra.mxu0 0.0
        %4113 = vmatprep.subr.mxu0 0.0
        %4114 = vmatpush1.msra.mxu0 0.0
        %4115 = vmatprep.subr.mxu0 0.0
        %4116 = vmatpush1.msra.mxu0 0.0
        %4117 = vmatprep.subr.mxu0 0.0
        %4118 = vmatpush1.msra.mxu0 0.0
        %4119 = vmatprep.subr.mxu0 0.0
        %4120 = vmatpush1.msra.mxu0 0.0
        %4121 = vmatprep.subr.mxu0 0.0
        %4122 = vmatpush1.msra.mxu0 0.0
        %4123 = vmatprep.mubr.f32.mxu0 0.0
        %4124 = vmatmul.mubr.f32.gmra.mrb[0].mxu0 %v4042
        %v4125 = vpop.f32.mrb[0].mxu0
        %v4126 = vadd.f32 0.0, %v4125
        %v4127 = vpop.f32.mrb[0].mxu0
        %4128 = vdwg.mxu0
        %v4129 = vxor.u32 %v4126, 2147483648
        %v4130 = vmul.f32 %v4129, 1.442695
        %v4131 = vpow.pop %v4130
        %v4132 = vadd.f32 %v4131, 1.0
        %v4133 = vrcp.pop %v4132
        %v4134 = vmul.f32 1.0, %v4133
        %v4135 = vlaneseq
        %v4136 = vshrl.u32 %v4135, 7
        %v4137 = vsub.s32 0, %v4136
        %v4138 = vrot.slane %v4134, %v4137
        %v4139 = vmul.f32 %v3973, %v4138
        %v4140 = vmul.f32 %v3974, %v4138
        %v4141 = vmul.f32 %v3975, %v4138
        %v4142 = vmul.f32 %v3976, %v4138
        %v4143 = vmul.f32 %v3977, %v4138
        %v4144 = vmul.f32 %v3978, %v4138
        %v4145 = vmul.f32 %v3979, %v4138
        %v4146 = vmul.f32 %v3980, %v4138
        %v4147 = vmul.f32 %v3981, %v4138
        %v4148 = vmul.f32 %v3982, %v4138
        %v4149 = vmul.f32 %v3983, %v4138
        %v4150 = vmul.f32 %v3984, %v4138
        %v4151 = vmul.f32 %v3985, %v4138
        %v4152 = vmul.f32 %v3986, %v4138
        %v4153 = vmul.f32 %v3987, %v4138
        %v4154 = vmul.f32 %v3988, %v4138
        %v4155 = vmul.f32 %v3989, %v4138
        %v4156 = vmul.f32 %v3990, %v4138
        %v4157 = vmul.f32 %v3991, %v4138
        %v4158 = vmul.f32 %v3992, %v4138
        %v4159 = vmul.f32 %v3993, %v4138
        %v4160 = vmul.f32 %v3994, %v4138
        %v4161 = vmul.f32 %v3995, %v4138
        %v4162 = vmul.f32 %v3996, %v4138
        %v4163 = vmul.f32 %v3997, %v4138
        %v4164 = vmul.f32 %v3998, %v4138
        %v4165 = vmul.f32 %v3999, %v4138
        %v4166 = vmul.f32 %v4000, %v4138
        %v4167 = vmul.f32 %v4001, %v4138
        %v4168 = vmul.f32 %v4002, %v4138
        %v4169 = vmul.f32 %v4003, %v4138
        %v4170 = vmul.f32 %v4004, %v4138
        %4171 = vst [vmem:[%s190] sm:$0xff] %v4139
        %4172 = vst [vmem:[%s190 + $0x8] sm:$0xff] %v4140
        %4173 = vst [vmem:[%s190 + $0x10] sm:$0xff] %v4141
        %4174 = vst [vmem:[%s190 + $0x18] sm:$0xff] %v4142
        %4175 = vst [vmem:[%s190 + $0x20] sm:$0xff] %v4143
        %4176 = vst [vmem:[%s190 + $0x28] sm:$0xff] %v4144
        %4177 = vst [vmem:[%s190 + $0x30] sm:$0xff] %v4145
        %4178 = vst [vmem:[%s190 + $0x38] sm:$0xff] %v4146
        %4179 = vst [vmem:[%s190 + $0x40] sm:$0xff] %v4147
        %4180 = vst [vmem:[%s190 + $0x48] sm:$0xff] %v4148
        %4181 = vst [vmem:[%s190 + $0x50] sm:$0xff] %v4149
        %4182 = vst [vmem:[%s190 + $0x58] sm:$0xff] %v4150
        %4183 = vst [vmem:[%s190 + $0x60] sm:$0xff] %v4151
        %4184 = vst [vmem:[%s190 + $0x68] sm:$0xff] %v4152
        %4185 = vst [vmem:[%s190 + $0x70] sm:$0xff] %v4153
        %4186 = vst [vmem:[%s190 + $0x78] sm:$0xff] %v4154
        %4187 = vst [vmem:[%s190 + $0x80] sm:$0xff] %v4155
        %4188 = vst [vmem:[%s190 + $0x88] sm:$0xff] %v4156
        %4189 = vst [vmem:[%s190 + $0x90] sm:$0xff] %v4157
        %4190 = vst [vmem:[%s190 + $0x98] sm:$0xff] %v4158
        %4191 = vst [vmem:[%s190 + $0xa0] sm:$0xff] %v4159
        %4192 = vst [vmem:[%s190 + $0xa8] sm:$0xff] %v4160
        %4193 = vst [vmem:[%s190 + $0xb0] sm:$0xff] %v4161
        %4194 = vst [vmem:[%s190 + $0xb8] sm:$0xff] %v4162
        %4195 = vst [vmem:[%s190 + $0xc0] sm:$0xff] %v4163
        %4196 = vst [vmem:[%s190 + $0xc8] sm:$0xff] %v4164
        %4197 = vst [vmem:[%s190 + $0xd0] sm:$0xff] %v4165
        %4198 = vst [vmem:[%s190 + $0xd8] sm:$0xff] %v4166
        %4199 = vst [vmem:[%s190 + $0xe0] sm:$0xff] %v4167
        %4200 = vst [vmem:[%s190 + $0xe8] sm:$0xff] %v4168
        %4201 = vst [vmem:[%s190 + $0xf0] sm:$0xff] %v4169
        %4202 = vst [vmem:[%s190 + $0xf8] sm:$0xff] %v4170
        %s4203 = sand.u32 %s115, 1
        %s4204 = scalar_lea.sflag [#allocation4], %s4203
        %s4205 = sand.u32 %s115, 1
        %s4206 = smul.addr %s4205, 256
        %s4207 = scalar_lea.vmem [#allocation3], %s4206
        // Predicated region
        $region37: #{tpu_custom_call.1} parent=35 // pred_check
          %p4208 = pneg %p125
        $region38: #{tpu_custom_call.1} parent=35 // pred_check_branch
          %4210 = sbr.rel (%p4208) target = $region40
        $region39: #{tpu_custom_call.1} parent=35 // pred_region
          %s4212 = ssub.s32 4096, 4096
          %4213 = vsyncadd %s4204, %s4212
          %s4214 = smul.addr %s18, 32
          %s4215 = smul.addr %s4214, 128
          %s4216 = scalar_lea.hbm %s4, %s4215
          %s4217 = sshll.u32 %s4207, 4
          %s4218 = int_to_ptr.vmem [resolvable:$true] %s4217
          %4223 = dma.vmem_to_hbm [thread:$0]  %s4218, 4096, %s4216, %s4204, 128, 128, 8
        $region40: #{tpu_custom_call.1} parent=35 // pred_fallthru
          _
      $region36: #{tpu_custom_call.1} parent=5 // pred_fallthru
        _
      %p4224 = scmp.le.s32.totalorder 2, %s13
      // Predicated region
      $region41: #{tpu_custom_call.1} parent=5 // pred_check
        %p4225 = pneg %p4224
      $region42: #{tpu_custom_call.1} parent=5 // pred_check_branch
        %4227 = sbr.rel (%p4225) target = $region44
      $region43: #{tpu_custom_call.1} parent=5 // pred_region
        %s4228 = ssub.s32 %s13, 2
        // Predicated region
        $region45: #{tpu_custom_call.1} parent=43 // pred_check
          %p4229 = pneg %p131
        $region46: #{tpu_custom_call.1} parent=43 // pred_check_branch
          %4231 = sbr.rel (%p4229) target = $region48
        $region47: #{tpu_custom_call.1} parent=43 // pred_region
          %s4232 = sand.u32 %s116, 1
          %s4233 = scalar_lea.sflag [#allocation4], %s4232
          %s4234 = sand.u32 %s116, 1
          %s4235 = smul.addr %s4234, 256
          %s4236 = scalar_lea.vmem [#allocation3], %s4235
          %4237 = dma.done %s4233, 4096
        $region48: #{tpu_custom_call.1} parent=43 // pred_fallthru
          _
      $region44: #{tpu_custom_call.1} parent=5 // pred_fallthru
        _
    $region6: #{tpu_custom_call.1} parent=1 // loop_footer
      %s17 = sadd.s32 1, %s13
    $region7: #{tpu_custom_call.1} parent=1 // loop_footer_branch
      %12 = sbr.rel target = $region3
    $region8: #{tpu_custom_call.1} parent=1 // loop_exit
      _
    %4238 = vsyncpa [#allocation4], 1
    %s4239 = scalar_lea.sflag [#allocation4], 1
    %4240 = vsyncpa %s4239, 1

</llo_original>
